<compile_context>
chip_gen: v7x
topology: tpu7x:2x2x1
jax: 0.10.0
libtpu: 0.0.40
codegen_flags: <defaults>
</compile_context>

<pallas_src>
import functools

import jax
import jax.numpy as jnp
from jax.experimental import pallas as pl
from jax.experimental.pallas import tpu as pltpu


# ---------------------------------------------------------------------------
# Config (small, consistent with the PyTorch module's structure)
# ---------------------------------------------------------------------------
class Args:
    hidden_size = 128            # must be divisible by num_attention_heads
    num_attention_heads = 4
    color_palette_size = 16
    typography_features = 64
    layout_features = 128
    tone_categories = 10
    sentiment_dim = 32
    style_dim = 64
    visual_feature_dim = 256
    text_feature_dim = 128


_VMEM = pl.BlockSpec(memory_space=pltpu.MemorySpace.VMEM)
_F32 = jnp.float32
_LN_EPS = 1e-5


def _relu(x):
    return jnp.maximum(x, 0.0)


def _dot(a, b):
    return jnp.dot(a, b, preferred_element_type=_F32)


def _layernorm(x, g, b, eps):
    mu = jnp.mean(x, axis=-1, keepdims=True)
    xc = x - mu
    var = jnp.mean(xc * xc, axis=-1, keepdims=True)
    return xc * jax.lax.rsqrt(var + eps) * g + b


# Fixed ordering of prepared weight tensors passed to the fused kernel.
_W_ORDER = [
    # visual: color encoder (layer-1 rows passed separately for the VPU FMAs)
    'wc1_0', 'wc1_1', 'wc1_2', 'bc1', 'wc2', 'bc2', 'wc3', 'bc3',
    # typography encoder
    'wt1', 'bt1', 'wt2', 'bt2', 'wt3', 'bt3',
    # layout encoder
    'wl1', 'bl1', 'wl2', 'bl2', 'wl3', 'bl3',
    # visual fusion (split weights: [color | typo | layout])
    'wvf_c', 'wvf_t', 'wvf_l', 'bvf',
    # text encoder + layernorm
    'we1', 'be1', 'we2', 'be2', 'g_tn', 'b_tn',
    # fused text heads, reordered [tone_h(64) | style(64) | sent(32)]
    'w_ts', 'b_ts', 'w_tone2', 'b_tone2',
    # fusion branch (visual_proj + seq-1 attention + fuse1 folded on host)
    'w_txt_f1', 'w_vis_f1', 'b_f1', 'wf2', 'bf2', 'gf', 'bfn',
    # fused output heads [bp1(128) | cons1(64)]
    'w_hd', 'b_hd', 'w_bp2', 'b_bp2', 'w_bp3', 'b_bp3', 'w_c2', 'b_c2',
]


def _out_layout(a: Args):
    """Packed lane-aligned output slab: each segment starts at a 128-lane
    multiple so stores are straddle-free and the slab last-dim is a large
    multiple of 128 (unmasked writeback)."""
    H = a.hidden_size
    segs = [
        ('visual_features', a.visual_feature_dim),
        ('text_features', H),
        ('fused_features', H),
        ('brand_profile', H),
        ('color_palette', a.color_palette_size),
        ('typography_embedding', H // 2),
        ('layout_embedding', H // 2),
        ('tone_logits', a.tone_categories),
        ('sentiment_embedding', a.sentiment_dim),
        ('style_embedding', a.style_dim),
        ('consistency_score', 1),
    ]
    layout, off = {}, 0
    for name, w in segs:
        layout[name] = (off, w)
        off += -(-w // 128) * 128
    return layout, off


# ---------------------------------------------------------------------------
# The single fused kernel
# ---------------------------------------------------------------------------
def _brand_kernel(*refs, H, tone_h_dim, style_dim, sent_dim, slab_layout):
    assert len(refs) == 6 + len(_W_ORDER) + 1
    colors, pool_c, typo, lay, text, pool_t = refs[:6]
    p = dict(zip(_W_ORDER, refs[6:6 + len(_W_ORDER)]))
    out = refs[-1]

    # Zero-init the packed slab so padding lanes are deterministic (cheap).
    out[...] = jnp.zeros(out.shape, dtype=out.dtype)

    # ---------------- visual branch ----------------
    # color layer 1 (K=3): three VPU broadcast FMAs instead of a padded MXU pass
    c = (colors[:, 0:1] * p['wc1_0'][...]
         + colors[:, 1:2] * p['wc1_1'][...]
         + colors[:, 2:3] * p['wc1_2'][...]
         + p['bc1'][...])
    c = _relu(c)
    c = _relu(_dot(c, p['wc2'][...]) + p['bc2'][...])
    c = _dot(c, p['wc3'][...]) + p['bc3'][...]                  # (B*NC, cps)
    color_summary = _dot(pool_c[...], c)                        # (B, cps) mean over NC

    t = _relu(_dot(typo[...], p['wt1'][...]) + p['bt1'][...])
    t = _relu(_dot(t, p['wt2'][...]) + p['bt2'][...])
    typo_emb = _dot(t, p['wt3'][...]) + p['bt3'][...]           # (B, H//2)

    l = _relu(_dot(lay[...], p['wl1'][...]) + p['bl1'][...])
    l = _relu(_dot(l, p['wl2'][...]) + p['bl2'][...])
    layout_emb = _dot(l, p['wl3'][...]) + p['bl3'][...]         # (B, H//2)

    # visual fusion via split-weight dots (no concat materialization)
    vis = (_dot(color_summary, p['wvf_c'][...])
           + _dot(typo_emb, p['wvf_t'][...])
           + _dot(layout_emb, p['wvf_l'][...])
           + p['bvf'][...])                                     # (B, vis_dim)

    # ---------------- text branch ----------------
    x = _relu(_dot(text[...], p['we1'][...]) + p['be1'][...])
    x = _dot(x, p['we2'][...]) + p['be2'][...]
    x = _layernorm(x, p['g_tn'][...], p['b_tn'][...], _LN_EPS)
    pooled = _dot(pool_t[...], x)                               # (B, H) mean over S

    # fused sibling heads, packed [tone_h | style | sent] (no 128-lane straddle)
    h = _dot(pooled, p['w_ts'][...]) + p['b_ts'][...]
    tone_h = _relu(h[:, :tone_h_dim])
    style_emb = _relu(h[:, tone_h_dim:tone_h_dim + style_dim])
    sent_emb = jnp.tanh(h[:, tone_h_dim + style_dim:tone_h_dim + style_dim + sent_dim])
    tone_logits = _dot(tone_h, p['w_tone2'][...]) + p['b_tone2'][...]

    # ---------------- fusion (visual_proj + seq-1 attention + fuse1 folded) --
    # TODO(synk): fold is exact only for seq_len == 1 on both attention sides.
    fh = _relu(_dot(pooled, p['w_txt_f1'][...])
               + _dot(vis, p['w_vis_f1'][...])
               + p['b_f1'][...])
    f = _dot(fh, p['wf2'][...]) + p['bf2'][...]
    fused = _layernorm(f, p['gf'][...], p['bfn'][...], _LN_EPS)

    # fused output heads [bp1 | cons1]
    hh = _relu(_dot(fused, p['w_hd'][...]) + p['b_hd'][...])
    bp_h = hh[:, :H]
    cons_h = hh[:, H:H + H // 2]
    bp2 = _relu(_dot(bp_h, p['w_bp2'][...]) + p['b_bp2'][...])
    brand_profile = _dot(bp2, p['w_bp3'][...]) + p['b_bp3'][...]
    consistency = jax.nn.sigmoid(_dot(cons_h, p['w_c2'][...]) + p['b_c2'][...])

    # ---------------- pack outputs (direct lane-aligned slice stores) --------
    def put(name, val):
        off, w = slab_layout[name]
        out[:, off:off + w] = val

    put('visual_features', vis)
    put('text_features', pooled)
    put('fused_features', fused)
    put('brand_profile', brand_profile)
    put('color_palette', color_summary)
    put('typography_embedding', typo_emb)
    put('layout_embedding', layout_emb)
    put('tone_logits', tone_logits)
    put('sentiment_embedding', sent_emb)
    put('style_embedding', style_emb)
    put('consistency_score', consistency)


# ---------------------------------------------------------------------------
# Deterministic parameter initialization (synthetic weights, no checkpoint)
# ---------------------------------------------------------------------------
def _dense(key, fan_in, fan_out):
    kw, kb = jax.random.split(key)
    return {
        'w': jax.random.normal(kw, (fan_in, fan_out), _F32) * 0.02,
        'b': jax.random.normal(kb, (fan_out,), _F32) * 0.01,
    }


def init_params(key, a: Args):
    keys = iter(jax.random.split(key, 40))
    H = a.hidden_size
    p = {}
    # --- VisualAnalyzer ---
    p['color1'] = _dense(next(keys), 3, 64)
    p['color2'] = _dense(next(keys), 64, 128)
    p['color3'] = _dense(next(keys), 128, a.color_palette_size)
    p['typo1'] = _dense(next(keys), a.typography_features, 256)
    p['typo2'] = _dense(next(keys), 256, 512)
    p['typo3'] = _dense(next(keys), 512, H // 2)
    p['lay1'] = _dense(next(keys), a.layout_features, 256)
    p['lay2'] = _dense(next(keys), 256, 512)
    p['lay3'] = _dense(next(keys), 512, H // 2)
    p['visual_fusion'] = _dense(next(keys), a.color_palette_size + H, a.visual_feature_dim)
    # --- TextAnalyzer ---
    p['text_enc1'] = _dense(next(keys), a.text_feature_dim, H)
    p['text_enc2'] = _dense(next(keys), H, H)
    p['text_norm'] = {'g': jnp.ones((H,), _F32), 'b': jnp.zeros((H,), _F32)}
    p['tone1'] = _dense(next(keys), H, H // 2)
    p['tone2'] = _dense(next(keys), H // 2, a.tone_categories)
    p['sent'] = _dense(next(keys), H, a.sentiment_dim)
    p['style'] = _dense(next(keys), H, a.style_dim)
    # --- BrandFusionLayer (single shared cross_attention module, as in PyTorch) ---
    p['visual_proj'] = _dense(next(keys), a.visual_feature_dim, H)
    mk = jax.random.split(next(keys), 4)
    p['mha'] = {
        'wq': jax.random.normal(mk[0], (H, H), _F32) * 0.02,
        'wk': jax.random.normal(mk[1], (H, H), _F32) * 0.02,
        'wv': jax.random.normal(mk[2], (H, H), _F32) * 0.02,
        'wo': jax.random.normal(mk[3], (H, H), _F32) * 0.02,
        'bq': jnp.zeros((H,), _F32),
        'bk': jnp.zeros((H,), _F32),
        'bv': jnp.zeros((H,), _F32),
        'bo': jnp.zeros((H,), _F32),
    }
    p['fuse1'] = _dense(next(keys), 2 * H, H)
    p['fuse2'] = _dense(next(keys), H, H)
    p['fusion_norm'] = {'g': jnp.ones((H,), _F32), 'b': jnp.zeros((H,), _F32)}
    # --- Heads ---
    p['bp1'] = _dense(next(keys), H, H)
    p['bp2'] = _dense(next(keys), H, H // 2)
    p['bp3'] = _dense(next(keys), H // 2, H)
    p['cons1'] = _dense(next(keys), H, H // 2)
    p['cons2'] = _dense(next(keys), H // 2, 1)
    return p


def prepare_params(p, a: Args, batch_size, num_colors, seq_len):
    """One-time host-side folding: (1,N) biases, split/fused weight packing,
    the seq-len-1 attention + visual_proj + fuse1 pre-multiplication, and the
    static mean-pooling matrices."""
    H = a.hidden_size
    cps = a.color_palette_size

    def b2(b):
        return b.reshape(1, -1)

    q = {}
    # --- visual branch ---
    q['wc1_0'] = p['color1']['w'][0:1]
    q['wc1_1'] = p['color1']['w'][1:2]
    q['wc1_2'] = p['color1']['w'][2:3]
    q['bc1'] = b2(p['color1']['b'])
    q['wc2'], q['bc2'] = p['color2']['w'], b2(p['color2']['b'])
    q['wc3'], q['bc3'] = p['color3']['w'], b2(p['color3']['b'])
    q['wt1'], q['bt1'] = p['typo1']['w'], b2(p['typo1']['b'])
    q['wt2'], q['bt2'] = p['typo2']['w'], b2(p['typo2']['b'])
    q['wt3'], q['bt3'] = p['typo3']['w'], b2(p['typo3']['b'])
    q['wl1'], q['bl1'] = p['lay1']['w'], b2(p['lay1']['b'])
    q['wl2'], q['bl2'] = p['lay2']['w'], b2(p['lay2']['b'])
    q['wl3'], q['bl3'] = p['lay3']['w'], b2(p['lay3']['b'])
    wvf = p['visual_fusion']['w']                          # (cps + H, vis_dim)
    q['wvf_c'] = wvf[:cps]
    q['wvf_t'] = wvf[cps:cps + H // 2]
    q['wvf_l'] = wvf[cps + H // 2:]
    q['bvf'] = b2(p['visual_fusion']['b'])
    # --- text branch ---
    q['we1'], q['be1'] = p['text_enc1']['w'], b2(p['text_enc1']['b'])
    q['we2'], q['be2'] = p['text_enc2']['w'], b2(p['text_enc2']['b'])
    q['g_tn'], q['b_tn'] = b2(p['text_norm']['g']), b2(p['text_norm']['b'])
    # reorder to [tone_h(64) | style(64) | sent(32)] so no slice straddles lane 128
    q['w_ts'] = jnp.concatenate([p['tone1']['w'], p['style']['w'], p['sent']['w']], axis=1)
    q['b_ts'] = b2(jnp.concatenate([p['tone1']['b'], p['style']['b'], p['sent']['b']]))
    q['w_tone2'], q['b_tone2'] = p['tone2']['w'], b2(p['tone2']['b'])
    # --- fusion branch: fold visual_proj + seq-1 cross-attention + fuse1 ---
    w_vo = p['mha']['wv'] @ p['mha']['wo']                 # softmax(1 key) == 1 exactly
    b_vo = p['mha']['bv'] @ p['mha']['wo'] + p['mha']['bo']
    wf1 = p['fuse1']['w']                                  # (2H, H)
    wf1a, wf1b = wf1[:H], wf1[H:]                          # attended_visual | attended_text
    wvp, bvp = p['visual_proj']['w'], p['visual_proj']['b']
    q['w_txt_f1'] = w_vo @ wf1a                            # (H, H)
    q['w_vis_f1'] = wvp @ (w_vo @ wf1b)                    # (vis_dim, H)
    q['b_f1'] = b2(b_vo @ wf1a + (bvp @ w_vo + b_vo) @ wf1b + p['fuse1']['b'])
    q['wf2'], q['bf2'] = p['fuse2']['w'], b2(p['fuse2']['b'])
    q['gf'], q['bfn'] = b2(p['fusion_norm']['g']), b2(p['fusion_norm']['b'])
    # --- output heads, packed [bp1(128) | cons1(64)] ---
    q['w_hd'] = jnp.concatenate([p['bp1']['w'], p['cons1']['w']], axis=1)
    q['b_hd'] = b2(jnp.concatenate([p['bp1']['b'], p['cons1']['b']]))
    q['w_bp2'], q['b_bp2'] = p['bp2']['w'], b2(p['bp2']['b'])
    q['w_bp3'], q['b_bp3'] = p['bp3']['w'], b2(p['bp3']['b'])
    q['w_c2'], q['b_c2'] = p['cons2']['w'], b2(p['cons2']['b'])
    # --- static mean-pooling matmuls (hoisted out of the per-call path) ---
    q['pool_c'] = jnp.repeat(jnp.eye(batch_size, dtype=_F32), num_colors, axis=1) / num_colors
    q['pool_t'] = jnp.repeat(jnp.eye(batch_size, dtype=_F32), seq_len, axis=1) / seq_len
    return q


# ---------------------------------------------------------------------------
# Forward pass: ONE fused pallas_call + cheap host-side view slicing
# ---------------------------------------------------------------------------
def brand_analyzer_forward(a: Args, slab_layout, slab_width, q,
                           colors, typography_features, layout_features, text_features):
    B, NC, _ = colors.shape
    S = text_features.shape[1]
    H = a.hidden_size
    cps = a.color_palette_size

    colors_flat = colors.reshape(B * NC, 3)
    text_flat = text_features.reshape(B * S, a.text_feature_dim)

    args = [colors_flat, q['pool_c'], typography_features, layout_features,
            text_flat, q['pool_t']] + [q[k] for k in _W_ORDER]

    flops = 2 * (
        B * NC * (3 * 64 + 64 * 128 + 128 * cps) + B * (B * NC) * cps
        + B * (a.typography_features * 256 + 256 * 512 + 512 * (H // 2))
        + B * (a.layout_features * 256 + 256 * 512 + 512 * (H // 2))
        + B * (cps + H) * a.visual_feature_dim
        + B * S * (a.text_feature_dim * H + H * H) + B * (B * S) * H
        + B * (H * (H // 2 + a.style_dim + a.sentiment_dim) + (H // 2) * a.tone_categories)
        + B * (H * H + a.visual_feature_dim * H + H * H)
        + B * (H * (H + H // 2) + H * (H // 2) + (H // 2) * H + (H // 2))
    )
    bytes_accessed = 4 * (sum(int(x.size) for x in args) + B * slab_width)

    slab = pl.pallas_call(
        functools.partial(_brand_kernel, H=H, tone_h_dim=H // 2,
                          style_dim=a.style_dim, sent_dim=a.sentiment_dim,
                          slab_layout=slab_layout),
        out_shape=jax.ShapeDtypeStruct((B, slab_width), _F32),
        in_specs=[_VMEM] * len(args),
        out_specs=_VMEM,
        cost_estimate=pl.CostEstimate(flops=flops, transcendentals=256,
                                      bytes_accessed=bytes_accessed),
    )(*args)

    def take(name):
        off, w = slab_layout[name]
        return slab[:, off:off + w]

    return {
        'brand_profile': take('brand_profile'),
        'consistency_score': take('consistency_score'),
        'visual_analysis': {
            'visual_features': take('visual_features'),
            'color_palette': take('color_palette'),
            'typography_embedding': take('typography_embedding'),
            'layout_embedding': take('layout_embedding'),
        },
        'text_analysis': {
            'text_features': take('text_features'),
            'tone_logits': take('tone_logits'),
            'sentiment_embedding': take('sentiment_embedding'),
            'style_embedding': take('style_embedding'),
        },
        'fused_features': take('fused_features'),
    }


# ---------------------------------------------------------------------------
# Pure-JAX reference (mirrors the PyTorch module, no host-side folding) for a
# correctness cross-check of the packed/folded kernel.
# ---------------------------------------------------------------------------
def _reference_forward(p, a: Args, colors, typography, layout_f, text):
    relu = jax.nn.relu

    def lin(x, d):
        return x @ d['w'] + d['b']

    def ln(x, d):
        mu = x.mean(-1, keepdims=True)
        var = ((x - mu) ** 2).mean(-1, keepdims=True)
        return (x - mu) * jax.lax.rsqrt(var + _LN_EPS) * d['g'] + d['b']

    c = relu(lin(colors, p['color1'])); c = relu(lin(c, p['color2'])); c = lin(c, p['color3'])
    color_summary = c.mean(axis=1)
    t = relu(lin(typography, p['typo1'])); t = relu(lin(t, p['typo2'])); typo_emb = lin(t, p['typo3'])
    l = relu(lin(layout_f, p['lay1'])); l = relu(lin(l, p['lay2'])); layout_emb = lin(l, p['lay3'])
    vis = lin(jnp.concatenate([color_summary, typo_emb, layout_emb], axis=-1), p['visual_fusion'])

    x = relu(lin(text, p['text_enc1'])); x = lin(x, p['text_enc2']); x = ln(x, p['text_norm'])
    pooled = x.mean(axis=1)
    tone_logits = lin(relu(lin(pooled, p['tone1'])), p['tone2'])
    sent_emb = jnp.tanh(lin(pooled, p['sent']))
    style_emb = relu(lin(pooled, p['style']))

    mha = p['mha']
    visual_aligned = lin(vis, p['visual_proj'])

    def attn_out(kv):   # seq_len == 1 on both sides -> softmax over one key is 1
        return (kv @ mha['wv'] + mha['bv']) @ mha['wo'] + mha['bo']

    combined = jnp.concatenate([attn_out(pooled), attn_out(visual_aligned)], axis=-1)
    fused = ln(lin(relu(lin(combined, p['fuse1'])), p['fuse2']), p['fusion_norm'])
    bp = lin(relu(lin(relu(lin(fused, p['bp1'])), p['bp2'])), p['bp3'])
    cons = jax.nn.sigmoid(lin(relu(lin(fused, p['cons1'])), p['cons2']))
    return {'visual_features': vis, 'color_palette': color_summary,
            'typography_embedding': typo_emb, 'layout_embedding': layout_emb,
            'text_features': pooled, 'tone_logits': tone_logits,
            'sentiment_embedding': sent_emb, 'style_embedding': style_emb,
            'fused_features': fused, 'brand_profile': bp, 'consistency_score': cons}


# ---------------------------------------------------------------------------
if __name__ == "__main__":
    a = Args()
    key = jax.random.PRNGKey(0)
    pkey, dkey = jax.random.split(key)

    B, NC, S = 2, 8, 8
    params = init_params(pkey, a)
    prepared = prepare_params(params, a, B, NC, S)
    slab_layout, slab_width = _out_layout(a)

    k1, k2, k3, k4 = jax.random.split(dkey, 4)
    colors = jax.random.uniform(k1, (B, NC, 3), _F32)
    typography = jax.random.normal(k2, (B, a.typography_features), _F32)
    layout_feats = jax.random.normal(k3, (B, a.layout_features), _F32)
    text = jax.random.normal(k4, (B, S, a.text_feature_dim), _F32)

    fwd = jax.jit(functools.partial(brand_analyzer_forward, a, slab_layout, slab_width))
    out = fwd(prepared, colors, typography, layout_feats, text)
    out = jax.tree_util.tree_map(jax.block_until_ready, out)

    # shape checks
    assert out['brand_profile'].shape == (B, a.hidden_size)
    assert out['consistency_score'].shape == (B, 1)
    assert out['fused_features'].shape == (B, a.hidden_size)
    assert out['visual_analysis']['visual_features'].shape == (B, a.visual_feature_dim)
    assert out['visual_analysis']['color_palette'].shape == (B, a.color_palette_size)
    assert out['visual_analysis']['typography_embedding'].shape == (B, a.hidden_size // 2)
    assert out['visual_analysis']['layout_embedding'].shape == (B, a.hidden_size // 2)
    assert out['text_analysis']['text_features'].shape == (B, a.hidden_size)
    assert out['text_analysis']['tone_logits'].shape == (B, a.tone_categories)
    assert out['text_analysis']['sentiment_embedding'].shape == (B, a.sentiment_dim)
    assert out['text_analysis']['style_embedding'].shape == (B, a.style_dim)

    # numerical cross-check against the unfolded pure-JAX reference
    ref = _reference_forward(params, a, colors, typography, layout_feats, text)
    pairs = [
        (out['visual_analysis']['visual_features'], ref['visual_features']),
        (out['visual_analysis']['color_palette'], ref['color_palette']),
        (out['visual_analysis']['typography_embedding'], ref['typography_embedding']),
        (out['visual_analysis']['layout_embedding'], ref['layout_embedding']),
        (out['text_analysis']['text_features'], ref['text_features']),
        (out['text_analysis']['tone_logits'], ref['tone_logits']),
        (out['text_analysis']['sentiment_embedding'], ref['sentiment_embedding']),
        (out['text_analysis']['style_embedding'], ref['style_embedding']),
        (out['fused_features'], ref['fused_features']),
        (out['brand_profile'], ref['brand_profile']),
        (out['consistency_score'], ref['consistency_score']),
    ]
    for got, want in pairs:
        assert bool(jnp.allclose(got, want, rtol=1e-2, atol=2e-3)), "mismatch vs reference"

    assert bool(jnp.all(jnp.isfinite(out['brand_profile'])))
    assert bool(jnp.all((out['consistency_score'] >= 0) & (out['consistency_score'] <= 1)))
    print("KERNEL_OK")
</pallas_src>

<mosaic_0001>
module attributes {stable_mosaic.version = 11 : i64} {
  func.func @_brand_kernel(%arg0: memref<16x3xf32, #tpu.memory_space<vmem>>, %arg1: memref<2x16xf32, #tpu.memory_space<vmem>>, %arg2: memref<2x64xf32, #tpu.memory_space<vmem>>, %arg3: memref<2x128xf32, #tpu.memory_space<vmem>>, %arg4: memref<16x128xf32, #tpu.memory_space<vmem>>, %arg5: memref<2x16xf32, #tpu.memory_space<vmem>>, %arg6: memref<1x64xf32, #tpu.memory_space<vmem>>, %arg7: memref<1x64xf32, #tpu.memory_space<vmem>>, %arg8: memref<1x64xf32, #tpu.memory_space<vmem>>, %arg9: memref<1x64xf32, #tpu.memory_space<vmem>>, %arg10: memref<64x128xf32, #tpu.memory_space<vmem>>, %arg11: memref<1x128xf32, #tpu.memory_space<vmem>>, %arg12: memref<128x16xf32, #tpu.memory_space<vmem>>, %arg13: memref<1x16xf32, #tpu.memory_space<vmem>>, %arg14: memref<64x256xf32, #tpu.memory_space<vmem>>, %arg15: memref<1x256xf32, #tpu.memory_space<vmem>>, %arg16: memref<256x512xf32, #tpu.memory_space<vmem>>, %arg17: memref<1x512xf32, #tpu.memory_space<vmem>>, %arg18: memref<512x64xf32, #tpu.memory_space<vmem>>, %arg19: memref<1x64xf32, #tpu.memory_space<vmem>>, %arg20: memref<128x256xf32, #tpu.memory_space<vmem>>, %arg21: memref<1x256xf32, #tpu.memory_space<vmem>>, %arg22: memref<256x512xf32, #tpu.memory_space<vmem>>, %arg23: memref<1x512xf32, #tpu.memory_space<vmem>>, %arg24: memref<512x64xf32, #tpu.memory_space<vmem>>, %arg25: memref<1x64xf32, #tpu.memory_space<vmem>>, %arg26: memref<16x256xf32, #tpu.memory_space<vmem>>, %arg27: memref<64x256xf32, #tpu.memory_space<vmem>>, %arg28: memref<64x256xf32, #tpu.memory_space<vmem>>, %arg29: memref<1x256xf32, #tpu.memory_space<vmem>>, %arg30: memref<128x128xf32, #tpu.memory_space<vmem>>, %arg31: memref<1x128xf32, #tpu.memory_space<vmem>>, %arg32: memref<128x128xf32, #tpu.memory_space<vmem>>, %arg33: memref<1x128xf32, #tpu.memory_space<vmem>>, %arg34: memref<1x128xf32, #tpu.memory_space<vmem>>, %arg35: memref<1x128xf32, #tpu.memory_space<vmem>>, %arg36: memref<128x160xf32, #tpu.memory_space<vmem>>, %arg37: memref<1x160xf32, #tpu.memory_space<vmem>>, %arg38: memref<64x10xf32, #tpu.memory_space<vmem>>, %arg39: memref<1x10xf32, #tpu.memory_space<vmem>>, %arg40: memref<128x128xf32, #tpu.memory_space<vmem>>, %arg41: memref<256x128xf32, #tpu.memory_space<vmem>>, %arg42: memref<1x128xf32, #tpu.memory_space<vmem>>, %arg43: memref<128x128xf32, #tpu.memory_space<vmem>>, %arg44: memref<1x128xf32, #tpu.memory_space<vmem>>, %arg45: memref<1x128xf32, #tpu.memory_space<vmem>>, %arg46: memref<1x128xf32, #tpu.memory_space<vmem>>, %arg47: memref<128x192xf32, #tpu.memory_space<vmem>>, %arg48: memref<1x192xf32, #tpu.memory_space<vmem>>, %arg49: memref<128x64xf32, #tpu.memory_space<vmem>>, %arg50: memref<1x64xf32, #tpu.memory_space<vmem>>, %arg51: memref<64x128xf32, #tpu.memory_space<vmem>>, %arg52: memref<1x128xf32, #tpu.memory_space<vmem>>, %arg53: memref<64x1xf32, #tpu.memory_space<vmem>>, %arg54: memref<1x1xf32, #tpu.memory_space<vmem>>, %arg55: memref<2x1536xf32, #tpu.memory_space<vmem>>) attributes {dimension_semantics = [], scalar_prefetch = 0 : i64, scratch_operands = 0 : i64, tpu.core_type = #tpu.core_type<tc>} {
    %cst = arith.constant 0.000000e+00 : f32
    %0 = vector.broadcast %cst : f32 to vector<2x1536xf32>
    %c0 = arith.constant 0 : index
    %c0_0 = arith.constant 0 : index
    %1 = vector.load %arg55[%c0, %c0_0] : memref<2x1536xf32, #tpu.memory_space<vmem>>, vector<2x1536xf32>
    tpu.vector_store %arg55[%c0, %c0_0], %0 {strides = array<i32>} : memref<2x1536xf32, #tpu.memory_space<vmem>>, vector<2x1536xf32>,
    %c0_1 = arith.constant 0 : index
    %c0_2 = arith.constant 0 : index
    %2 = vector.load %arg0[%c0_1, %c0_2] : memref<16x3xf32, #tpu.memory_space<vmem>>, vector<16x1xf32>
    %c0_3 = arith.constant 0 : index
    %c0_4 = arith.constant 0 : index
    %3 = vector.load %arg6[%c0_3, %c0_4] : memref<1x64xf32, #tpu.memory_space<vmem>>, vector<1x64xf32>
    %4 = vector.broadcast %2 : vector<16x1xf32> to vector<16x64xf32>
    %5 = vector.broadcast %3 : vector<1x64xf32> to vector<16x64xf32>
    %6 = arith.mulf %4, %5 : vector<16x64xf32>
    %c0_5 = arith.constant 0 : index
    %c1 = arith.constant 1 : index
    %7 = vector.load %arg0[%c0_5, %c1] : memref<16x3xf32, #tpu.memory_space<vmem>>, vector<16x1xf32>
    %c0_6 = arith.constant 0 : index
    %c0_7 = arith.constant 0 : index
    %8 = vector.load %arg7[%c0_6, %c0_7] : memref<1x64xf32, #tpu.memory_space<vmem>>, vector<1x64xf32>
    %9 = vector.broadcast %7 : vector<16x1xf32> to vector<16x64xf32>
    %10 = vector.broadcast %8 : vector<1x64xf32> to vector<16x64xf32>
    %11 = arith.mulf %9, %10 : vector<16x64xf32>
    %12 = arith.addf %6, %11 : vector<16x64xf32>
    %c0_8 = arith.constant 0 : index
    %c2 = arith.constant 2 : index
    %13 = vector.load %arg0[%c0_8, %c2] : memref<16x3xf32, #tpu.memory_space<vmem>>, vector<16x1xf32>
    %c0_9 = arith.constant 0 : index
    %c0_10 = arith.constant 0 : index
    %14 = vector.load %arg8[%c0_9, %c0_10] : memref<1x64xf32, #tpu.memory_space<vmem>>, vector<1x64xf32>
    %15 = vector.broadcast %13 : vector<16x1xf32> to vector<16x64xf32>
    %16 = vector.broadcast %14 : vector<1x64xf32> to vector<16x64xf32>
    %17 = arith.mulf %15, %16 : vector<16x64xf32>
    %18 = arith.addf %12, %17 : vector<16x64xf32>
    %c0_11 = arith.constant 0 : index
    %c0_12 = arith.constant 0 : index
    %19 = vector.load %arg9[%c0_11, %c0_12] : memref<1x64xf32, #tpu.memory_space<vmem>>, vector<1x64xf32>
    %20 = vector.broadcast %19 : vector<1x64xf32> to vector<16x64xf32>
    %21 = arith.addf %18, %20 : vector<16x64xf32>
    %cst_13 = arith.constant 0.000000e+00 : f32
    %22 = vector.broadcast %cst_13 : f32 to vector<16x64xf32>
    %23 = arith.maximumf %21, %22 : vector<16x64xf32>
    %c0_14 = arith.constant 0 : index
    %c0_15 = arith.constant 0 : index
    %24 = vector.load %arg10[%c0_14, %c0_15] : memref<64x128xf32, #tpu.memory_space<vmem>>, vector<64x128xf32>
    %cst_16 = arith.constant dense<0.000000e+00> : vector<16x128xf32>
    %25 = tpu.matmul %23, %24, %cst_16 {dimension_numbers = #tpu.dot_dimension_numbers<[1], [0], [0], [1], [0, 0, 1, 1], [], []>} : vector<16x64xf32>, vector<64x128xf32>, vector<16x128xf32> -> vector<16x128xf32>
    %c0_17 = arith.constant 0 : index
    %c0_18 = arith.constant 0 : index
    %26 = vector.load %arg11[%c0_17, %c0_18] : memref<1x128xf32, #tpu.memory_space<vmem>>, vector<1x128xf32>
    %27 = vector.broadcast %26 : vector<1x128xf32> to vector<16x128xf32>
    %28 = arith.addf %25, %27 : vector<16x128xf32>
    %cst_19 = arith.constant 0.000000e+00 : f32
    %29 = vector.broadcast %cst_19 : f32 to vector<16x128xf32>
    %30 = arith.maximumf %28, %29 : vector<16x128xf32>
    %c0_20 = arith.constant 0 : index
    %c0_21 = arith.constant 0 : index
    %31 = vector.load %arg12[%c0_20, %c0_21] : memref<128x16xf32, #tpu.memory_space<vmem>>, vector<128x16xf32>
    %cst_22 = arith.constant dense<0.000000e+00> : vector<16x16xf32>
    %32 = tpu.matmul %30, %31, %cst_22 {dimension_numbers = #tpu.dot_dimension_numbers<[1], [0], [0], [1], [0, 0, 1, 1], [], []>} : vector<16x128xf32>, vector<128x16xf32>, vector<16x16xf32> -> vector<16x16xf32>
    %c0_23 = arith.constant 0 : index
    %c0_24 = arith.constant 0 : index
    %33 = vector.load %arg13[%c0_23, %c0_24] : memref<1x16xf32, #tpu.memory_space<vmem>>, vector<1x16xf32>
    %34 = vector.broadcast %33 : vector<1x16xf32> to vector<16x16xf32>
    %35 = arith.addf %32, %34 : vector<16x16xf32>
    %c0_25 = arith.constant 0 : index
    %c0_26 = arith.constant 0 : index
    %36 = vector.load %arg1[%c0_25, %c0_26] : memref<2x16xf32, #tpu.memory_space<vmem>>, vector<2x16xf32>
    %cst_27 = arith.constant dense<0.000000e+00> : vector<2x16xf32>
    %37 = tpu.matmul %36, %35, %cst_27 {dimension_numbers = #tpu.dot_dimension_numbers<[1], [0], [0], [1], [0, 0, 1, 1], [], []>} : vector<2x16xf32>, vector<16x16xf32>, vector<2x16xf32> -> vector<2x16xf32>
    %c0_28 = arith.constant 0 : index
    %c0_29 = arith.constant 0 : index
    %38 = vector.load %arg2[%c0_28, %c0_29] : memref<2x64xf32, #tpu.memory_space<vmem>>, vector<2x64xf32>
    %c0_30 = arith.constant 0 : index
    %c0_31 = arith.constant 0 : index
    %39 = vector.load %arg14[%c0_30, %c0_31] : memref<64x256xf32, #tpu.memory_space<vmem>>, vector<64x256xf32>
    %cst_32 = arith.constant dense<0.000000e+00> : vector<2x256xf32>
    %40 = tpu.matmul %38, %39, %cst_32 {dimension_numbers = #tpu.dot_dimension_numbers<[1], [0], [0], [1], [0, 0, 1, 1], [], []>} : vector<2x64xf32>, vector<64x256xf32>, vector<2x256xf32> -> vector<2x256xf32>
    %c0_33 = arith.constant 0 : index
    %c0_34 = arith.constant 0 : index
    %41 = vector.load %arg15[%c0_33, %c0_34] : memref<1x256xf32, #tpu.memory_space<vmem>>, vector<1x256xf32>
    %42 = vector.broadcast %41 : vector<1x256xf32> to vector<2x256xf32>
    %43 = arith.addf %40, %42 : vector<2x256xf32>
    %cst_35 = arith.constant 0.000000e+00 : f32
    %44 = vector.broadcast %cst_35 : f32 to vector<2x256xf32>
    %45 = arith.maximumf %43, %44 : vector<2x256xf32>
    %c0_36 = arith.constant 0 : index
    %c0_37 = arith.constant 0 : index
    %46 = vector.load %arg16[%c0_36, %c0_37] : memref<256x512xf32, #tpu.memory_space<vmem>>, vector<256x512xf32>
    %cst_38 = arith.constant dense<0.000000e+00> : vector<2x512xf32>
    %47 = tpu.matmul %45, %46, %cst_38 {dimension_numbers = #tpu.dot_dimension_numbers<[1], [0], [0], [1], [0, 0, 1, 1], [], []>} : vector<2x256xf32>, vector<256x512xf32>, vector<2x512xf32> -> vector<2x512xf32>
    %c0_39 = arith.constant 0 : index
    %c0_40 = arith.constant 0 : index
    %48 = vector.load %arg17[%c0_39, %c0_40] : memref<1x512xf32, #tpu.memory_space<vmem>>, vector<1x512xf32>
    %49 = vector.broadcast %48 : vector<1x512xf32> to vector<2x512xf32>
    %50 = arith.addf %47, %49 : vector<2x512xf32>
    %cst_41 = arith.constant 0.000000e+00 : f32
    %51 = vector.broadcast %cst_41 : f32 to vector<2x512xf32>
    %52 = arith.maximumf %50, %51 : vector<2x512xf32>
    %c0_42 = arith.constant 0 : index
    %c0_43 = arith.constant 0 : index
    %53 = vector.load %arg18[%c0_42, %c0_43] : memref<512x64xf32, #tpu.memory_space<vmem>>, vector<512x64xf32>
    %cst_44 = arith.constant dense<0.000000e+00> : vector<2x64xf32>
    %54 = tpu.matmul %52, %53, %cst_44 {dimension_numbers = #tpu.dot_dimension_numbers<[1], [0], [0], [1], [0, 0, 1, 1], [], []>} : vector<2x512xf32>, vector<512x64xf32>, vector<2x64xf32> -> vector<2x64xf32>
    %c0_45 = arith.constant 0 : index
    %c0_46 = arith.constant 0 : index
    %55 = vector.load %arg19[%c0_45, %c0_46] : memref<1x64xf32, #tpu.memory_space<vmem>>, vector<1x64xf32>
    %56 = vector.broadcast %55 : vector<1x64xf32> to vector<2x64xf32>
    %57 = arith.addf %54, %56 : vector<2x64xf32>
    %c0_47 = arith.constant 0 : index
    %c0_48 = arith.constant 0 : index
    %58 = vector.load %arg3[%c0_47, %c0_48] : memref<2x128xf32, #tpu.memory_space<vmem>>, vector<2x128xf32>
    %c0_49 = arith.constant 0 : index
    %c0_50 = arith.constant 0 : index
    %59 = vector.load %arg20[%c0_49, %c0_50] : memref<128x256xf32, #tpu.memory_space<vmem>>, vector<128x256xf32>
    %cst_51 = arith.constant dense<0.000000e+00> : vector<2x256xf32>
    %60 = tpu.matmul %58, %59, %cst_51 {dimension_numbers = #tpu.dot_dimension_numbers<[1], [0], [0], [1], [0, 0, 1, 1], [], []>} : vector<2x128xf32>, vector<128x256xf32>, vector<2x256xf32> -> vector<2x256xf32>
    %c0_52 = arith.constant 0 : index
    %c0_53 = arith.constant 0 : index
    %61 = vector.load %arg21[%c0_52, %c0_53] : memref<1x256xf32, #tpu.memory_space<vmem>>, vector<1x256xf32>
    %62 = vector.broadcast %61 : vector<1x256xf32> to vector<2x256xf32>
    %63 = arith.addf %60, %62 : vector<2x256xf32>
    %cst_54 = arith.constant 0.000000e+00 : f32
    %64 = vector.broadcast %cst_54 : f32 to vector<2x256xf32>
    %65 = arith.maximumf %63, %64 : vector<2x256xf32>
    %c0_55 = arith.constant 0 : index
    %c0_56 = arith.constant 0 : index
    %66 = vector.load %arg22[%c0_55, %c0_56] : memref<256x512xf32, #tpu.memory_space<vmem>>, vector<256x512xf32>
    %cst_57 = arith.constant dense<0.000000e+00> : vector<2x512xf32>
    %67 = tpu.matmul %65, %66, %cst_57 {dimension_numbers = #tpu.dot_dimension_numbers<[1], [0], [0], [1], [0, 0, 1, 1], [], []>} : vector<2x256xf32>, vector<256x512xf32>, vector<2x512xf32> -> vector<2x512xf32>
    %c0_58 = arith.constant 0 : index
    %c0_59 = arith.constant 0 : index
    %68 = vector.load %arg23[%c0_58, %c0_59] : memref<1x512xf32, #tpu.memory_space<vmem>>, vector<1x512xf32>
    %69 = vector.broadcast %68 : vector<1x512xf32> to vector<2x512xf32>
    %70 = arith.addf %67, %69 : vector<2x512xf32>
    %cst_60 = arith.constant 0.000000e+00 : f32
    %71 = vector.broadcast %cst_60 : f32 to vector<2x512xf32>
    %72 = arith.maximumf %70, %71 : vector<2x512xf32>
    %c0_61 = arith.constant 0 : index
    %c0_62 = arith.constant 0 : index
    %73 = vector.load %arg24[%c0_61, %c0_62] : memref<512x64xf32, #tpu.memory_space<vmem>>, vector<512x64xf32>
    %cst_63 = arith.constant dense<0.000000e+00> : vector<2x64xf32>
    %74 = tpu.matmul %72, %73, %cst_63 {dimension_numbers = #tpu.dot_dimension_numbers<[1], [0], [0], [1], [0, 0, 1, 1], [], []>} : vector<2x512xf32>, vector<512x64xf32>, vector<2x64xf32> -> vector<2x64xf32>
    %c0_64 = arith.constant 0 : index
    %c0_65 = arith.constant 0 : index
    %75 = vector.load %arg25[%c0_64, %c0_65] : memref<1x64xf32, #tpu.memory_space<vmem>>, vector<1x64xf32>
    %76 = vector.broadcast %75 : vector<1x64xf32> to vector<2x64xf32>
    %77 = arith.addf %74, %76 : vector<2x64xf32>
    %c0_66 = arith.constant 0 : index
    %c0_67 = arith.constant 0 : index
    %78 = vector.load %arg26[%c0_66, %c0_67] : memref<16x256xf32, #tpu.memory_space<vmem>>, vector<16x256xf32>
    %cst_68 = arith.constant dense<0.000000e+00> : vector<2x256xf32>
    %79 = tpu.matmul %37, %78, %cst_68 {dimension_numbers = #tpu.dot_dimension_numbers<[1], [0], [0], [1], [0, 0, 1, 1], [], []>} : vector<2x16xf32>, vector<16x256xf32>, vector<2x256xf32> -> vector<2x256xf32>
    %c0_69 = arith.constant 0 : index
    %c0_70 = arith.constant 0 : index
    %80 = vector.load %arg27[%c0_69, %c0_70] : memref<64x256xf32, #tpu.memory_space<vmem>>, vector<64x256xf32>
    %cst_71 = arith.constant dense<0.000000e+00> : vector<2x256xf32>
    %81 = tpu.matmul %57, %80, %cst_71 {dimension_numbers = #tpu.dot_dimension_numbers<[1], [0], [0], [1], [0, 0, 1, 1], [], []>} : vector<2x64xf32>, vector<64x256xf32>, vector<2x256xf32> -> vector<2x256xf32>
    %82 = arith.addf %79, %81 : vector<2x256xf32>
    %c0_72 = arith.constant 0 : index
    %c0_73 = arith.constant 0 : index
    %83 = vector.load %arg28[%c0_72, %c0_73] : memref<64x256xf32, #tpu.memory_space<vmem>>, vector<64x256xf32>
    %cst_74 = arith.constant dense<0.000000e+00> : vector<2x256xf32>
    %84 = tpu.matmul %77, %83, %cst_74 {dimension_numbers = #tpu.dot_dimension_numbers<[1], [0], [0], [1], [0, 0, 1, 1], [], []>} : vector<2x64xf32>, vector<64x256xf32>, vector<2x256xf32> -> vector<2x256xf32>
    %85 = arith.addf %82, %84 : vector<2x256xf32>
    %c0_75 = arith.constant 0 : index
    %c0_76 = arith.constant 0 : index
    %86 = vector.load %arg29[%c0_75, %c0_76] : memref<1x256xf32, #tpu.memory_space<vmem>>, vector<1x256xf32>
    %87 = vector.broadcast %86 : vector<1x256xf32> to vector<2x256xf32>
    %88 = arith.addf %85, %87 : vector<2x256xf32>
    %c0_77 = arith.constant 0 : index
    %c0_78 = arith.constant 0 : index
    %89 = vector.load %arg4[%c0_77, %c0_78] : memref<16x128xf32, #tpu.memory_space<vmem>>, vector<16x128xf32>
    %c0_79 = arith.constant 0 : index
    %c0_80 = arith.constant 0 : index
    %90 = vector.load %arg30[%c0_79, %c0_80] : memref<128x128xf32, #tpu.memory_space<vmem>>, vector<128x128xf32>
    %cst_81 = arith.constant dense<0.000000e+00> : vector<16x128xf32>
    %91 = tpu.matmul %89, %90, %cst_81 {dimension_numbers = #tpu.dot_dimension_numbers<[1], [0], [0], [1], [0, 0, 1, 1], [], []>} : vector<16x128xf32>, vector<128x128xf32>, vector<16x128xf32> -> vector<16x128xf32>
    %c0_82 = arith.constant 0 : index
    %c0_83 = arith.constant 0 : index
    %92 = vector.load %arg31[%c0_82, %c0_83] : memref<1x128xf32, #tpu.memory_space<vmem>>, vector<1x128xf32>
    %93 = vector.broadcast %92 : vector<1x128xf32> to vector<16x128xf32>
    %94 = arith.addf %91, %93 : vector<16x128xf32>
    %cst_84 = arith.constant 0.000000e+00 : f32
    %95 = vector.broadcast %cst_84 : f32 to vector<16x128xf32>
    %96 = arith.maximumf %94, %95 : vector<16x128xf32>
    %c0_85 = arith.constant 0 : index
    %c0_86 = arith.constant 0 : index
    %97 = vector.load %arg32[%c0_85, %c0_86] : memref<128x128xf32, #tpu.memory_space<vmem>>, vector<128x128xf32>
    %cst_87 = arith.constant dense<0.000000e+00> : vector<16x128xf32>
    %98 = tpu.matmul %96, %97, %cst_87 {dimension_numbers = #tpu.dot_dimension_numbers<[1], [0], [0], [1], [0, 0, 1, 1], [], []>} : vector<16x128xf32>, vector<128x128xf32>, vector<16x128xf32> -> vector<16x128xf32>
    %c0_88 = arith.constant 0 : index
    %c0_89 = arith.constant 0 : index
    %99 = vector.load %arg33[%c0_88, %c0_89] : memref<1x128xf32, #tpu.memory_space<vmem>>, vector<1x128xf32>
    %100 = vector.broadcast %99 : vector<1x128xf32> to vector<16x128xf32>
    %101 = arith.addf %98, %100 : vector<16x128xf32>
    %c0_90 = arith.constant 0 : index
    %c0_91 = arith.constant 0 : index
    %102 = vector.load %arg34[%c0_90, %c0_91] : memref<1x128xf32, #tpu.memory_space<vmem>>, vector<1x128xf32>
    %c0_92 = arith.constant 0 : index
    %c0_93 = arith.constant 0 : index
    %103 = vector.load %arg35[%c0_92, %c0_93] : memref<1x128xf32, #tpu.memory_space<vmem>>, vector<1x128xf32>
    %cst_94 = arith.constant dense<0.000000e+00> : vector<16xf32>
    %104 = vector.multi_reduction <add>, %101, %cst_94 [1] : vector<16x128xf32> to vector<16xf32>
    %105 = vector.shape_cast %104 : vector<16xf32> to vector<16x1xf32>
    %cst_95 = arith.constant 1.280000e+02 : f32
    %106 = vector.broadcast %cst_95 : f32 to vector<16x1xf32>
    %107 = arith.divf %105, %106 : vector<16x1xf32>
    %108 = vector.broadcast %107 : vector<16x1xf32> to vector<16x128xf32>
    %109 = arith.subf %101, %108 : vector<16x128xf32>
    %110 = arith.mulf %109, %109 : vector<16x128xf32>
    %cst_96 = arith.constant dense<0.000000e+00> : vector<16xf32>
    %111 = vector.multi_reduction <add>, %110, %cst_96 [1] : vector<16x128xf32> to vector<16xf32>
    %112 = vector.shape_cast %111 : vector<16xf32> to vector<16x1xf32>
    %cst_97 = arith.constant 1.280000e+02 : f32
    %113 = vector.broadcast %cst_97 : f32 to vector<16x1xf32>
    %114 = arith.divf %112, %113 : vector<16x1xf32>
    %cst_98 = arith.constant 9.99999974E-6 : f32
    %115 = vector.broadcast %cst_98 : f32 to vector<16x1xf32>
    %116 = arith.addf %114, %115 : vector<16x1xf32>
    %117 = math.rsqrt %116 : vector<16x1xf32>
    %118 = vector.broadcast %117 : vector<16x1xf32> to vector<16x128xf32>
    %119 = arith.mulf %109, %118 : vector<16x128xf32>
    %120 = vector.broadcast %102 : vector<1x128xf32> to vector<16x128xf32>
    %121 = arith.mulf %119, %120 : vector<16x128xf32>
    %122 = vector.broadcast %103 : vector<1x128xf32> to vector<16x128xf32>
    %123 = arith.addf %121, %122 : vector<16x128xf32>
    %c0_99 = arith.constant 0 : index
    %c0_100 = arith.constant 0 : index
    %124 = vector.load %arg5[%c0_99, %c0_100] : memref<2x16xf32, #tpu.memory_space<vmem>>, vector<2x16xf32>
    %cst_101 = arith.constant dense<0.000000e+00> : vector<2x128xf32>
    %125 = tpu.matmul %124, %123, %cst_101 {dimension_numbers = #tpu.dot_dimension_numbers<[1], [0], [0], [1], [0, 0, 1, 1], [], []>} : vector<2x16xf32>, vector<16x128xf32>, vector<2x128xf32> -> vector<2x128xf32>
    %c0_102 = arith.constant 0 : index
    %c0_103 = arith.constant 0 : index
    %126 = vector.load %arg36[%c0_102, %c0_103] : memref<128x160xf32, #tpu.memory_space<vmem>>, vector<128x160xf32>
    %cst_104 = arith.constant dense<0.000000e+00> : vector<2x160xf32>
    %127 = tpu.matmul %125, %126, %cst_104 {dimension_numbers = #tpu.dot_dimension_numbers<[1], [0], [0], [1], [0, 0, 1, 1], [], []>} : vector<2x128xf32>, vector<128x160xf32>, vector<2x160xf32> -> vector<2x160xf32>
    %c0_105 = arith.constant 0 : index
    %c0_106 = arith.constant 0 : index
    %128 = vector.load %arg37[%c0_105, %c0_106] : memref<1x160xf32, #tpu.memory_space<vmem>>, vector<1x160xf32>
    %129 = vector.broadcast %128 : vector<1x160xf32> to vector<2x160xf32>
    %130 = arith.addf %127, %129 : vector<2x160xf32>
    %131 = vector.extract_strided_slice %130 {offsets = [0, 0], sizes = [2, 64], strides = [1, 1]} : vector<2x160xf32> to vector<2x64xf32>
    %cst_107 = arith.constant 0.000000e+00 : f32
    %132 = vector.broadcast %cst_107 : f32 to vector<2x64xf32>
    %133 = arith.maximumf %131, %132 : vector<2x64xf32>
    %134 = vector.extract_strided_slice %130 {offsets = [0, 64], sizes = [2, 64], strides = [1, 1]} : vector<2x160xf32> to vector<2x64xf32>
    %cst_108 = arith.constant 0.000000e+00 : f32
    %135 = vector.broadcast %cst_108 : f32 to vector<2x64xf32>
    %136 = arith.maximumf %134, %135 : vector<2x64xf32>
    %137 = vector.extract_strided_slice %130 {offsets = [0, 128], sizes = [2, 32], strides = [1, 1]} : vector<2x160xf32> to vector<2x32xf32>
    %138 = math.tanh %137 : vector<2x32xf32>
    %c0_109 = arith.constant 0 : index
    %c0_110 = arith.constant 0 : index
    %139 = vector.load %arg38[%c0_109, %c0_110] : memref<64x10xf32, #tpu.memory_space<vmem>>, vector<64x10xf32>
    %cst_111 = arith.constant dense<0.000000e+00> : vector<2x10xf32>
    %140 = tpu.matmul %133, %139, %cst_111 {dimension_numbers = #tpu.dot_dimension_numbers<[1], [0], [0], [1], [0, 0, 1, 1], [], []>} : vector<2x64xf32>, vector<64x10xf32>, vector<2x10xf32> -> vector<2x10xf32>
    %c0_112 = arith.constant 0 : index
    %c0_113 = arith.constant 0 : index
    %141 = vector.load %arg39[%c0_112, %c0_113] : memref<1x10xf32, #tpu.memory_space<vmem>>, vector<1x10xf32>
    %142 = vector.broadcast %141 : vector<1x10xf32> to vector<2x10xf32>
    %143 = arith.addf %140, %142 : vector<2x10xf32>
    %c0_114 = arith.constant 0 : index
    %c0_115 = arith.constant 0 : index
    %144 = vector.load %arg40[%c0_114, %c0_115] : memref<128x128xf32, #tpu.memory_space<vmem>>, vector<128x128xf32>
    %cst_116 = arith.constant dense<0.000000e+00> : vector<2x128xf32>
    %145 = tpu.matmul %125, %144, %cst_116 {dimension_numbers = #tpu.dot_dimension_numbers<[1], [0], [0], [1], [0, 0, 1, 1], [], []>} : vector<2x128xf32>, vector<128x128xf32>, vector<2x128xf32> -> vector<2x128xf32>
    %c0_117 = arith.constant 0 : index
    %c0_118 = arith.constant 0 : index
    %146 = vector.load %arg41[%c0_117, %c0_118] : memref<256x128xf32, #tpu.memory_space<vmem>>, vector<256x128xf32>
    %cst_119 = arith.constant dense<0.000000e+00> : vector<2x128xf32>
    %147 = tpu.matmul %88, %146, %cst_119 {dimension_numbers = #tpu.dot_dimension_numbers<[1], [0], [0], [1], [0, 0, 1, 1], [], []>} : vector<2x256xf32>, vector<256x128xf32>, vector<2x128xf32> -> vector<2x128xf32>
    %148 = arith.addf %145, %147 : vector<2x128xf32>
    %c0_120 = arith.constant 0 : index
    %c0_121 = arith.constant 0 : index
    %149 = vector.load %arg42[%c0_120, %c0_121] : memref<1x128xf32, #tpu.memory_space<vmem>>, vector<1x128xf32>
    %150 = vector.broadcast %149 : vector<1x128xf32> to vector<2x128xf32>
    %151 = arith.addf %148, %150 : vector<2x128xf32>
    %cst_122 = arith.constant 0.000000e+00 : f32
    %152 = vector.broadcast %cst_122 : f32 to vector<2x128xf32>
    %153 = arith.maximumf %151, %152 : vector<2x128xf32>
    %c0_123 = arith.constant 0 : index
    %c0_124 = arith.constant 0 : index
    %154 = vector.load %arg43[%c0_123, %c0_124] : memref<128x128xf32, #tpu.memory_space<vmem>>, vector<128x128xf32>
    %cst_125 = arith.constant dense<0.000000e+00> : vector<2x128xf32>
    %155 = tpu.matmul %153, %154, %cst_125 {dimension_numbers = #tpu.dot_dimension_numbers<[1], [0], [0], [1], [0, 0, 1, 1], [], []>} : vector<2x128xf32>, vector<128x128xf32>, vector<2x128xf32> -> vector<2x128xf32>
    %c0_126 = arith.constant 0 : index
    %c0_127 = arith.constant 0 : index
    %156 = vector.load %arg44[%c0_126, %c0_127] : memref<1x128xf32, #tpu.memory_space<vmem>>, vector<1x128xf32>
    %157 = vector.broadcast %156 : vector<1x128xf32> to vector<2x128xf32>
    %158 = arith.addf %155, %157 : vector<2x128xf32>
    %c0_128 = arith.constant 0 : index
    %c0_129 = arith.constant 0 : index
    %159 = vector.load %arg45[%c0_128, %c0_129] : memref<1x128xf32, #tpu.memory_space<vmem>>, vector<1x128xf32>
    %c0_130 = arith.constant 0 : index
    %c0_131 = arith.constant 0 : index
    %160 = vector.load %arg46[%c0_130, %c0_131] : memref<1x128xf32, #tpu.memory_space<vmem>>, vector<1x128xf32>
    %cst_132 = arith.constant dense<0.000000e+00> : vector<2xf32>
    %161 = vector.multi_reduction <add>, %158, %cst_132 [1] : vector<2x128xf32> to vector<2xf32>
    %162 = vector.shape_cast %161 : vector<2xf32> to vector<2x1xf32>
    %cst_133 = arith.constant 1.280000e+02 : f32
    %163 = vector.broadcast %cst_133 : f32 to vector<2x1xf32>
    %164 = arith.divf %162, %163 : vector<2x1xf32>
    %165 = vector.broadcast %164 : vector<2x1xf32> to vector<2x128xf32>
    %166 = arith.subf %158, %165 : vector<2x128xf32>
    %167 = arith.mulf %166, %166 : vector<2x128xf32>
    %cst_134 = arith.constant dense<0.000000e+00> : vector<2xf32>
    %168 = vector.multi_reduction <add>, %167, %cst_134 [1] : vector<2x128xf32> to vector<2xf32>
    %169 = vector.shape_cast %168 : vector<2xf32> to vector<2x1xf32>
    %cst_135 = arith.constant 1.280000e+02 : f32
    %170 = vector.broadcast %cst_135 : f32 to vector<2x1xf32>
    %171 = arith.divf %169, %170 : vector<2x1xf32>
    %cst_136 = arith.constant 9.99999974E-6 : f32
    %172 = vector.broadcast %cst_136 : f32 to vector<2x1xf32>
    %173 = arith.addf %171, %172 : vector<2x1xf32>
    %174 = math.rsqrt %173 : vector<2x1xf32>
    %175 = vector.broadcast %174 : vector<2x1xf32> to vector<2x128xf32>
    %176 = arith.mulf %166, %175 : vector<2x128xf32>
    %177 = vector.broadcast %159 : vector<1x128xf32> to vector<2x128xf32>
    %178 = arith.mulf %176, %177 : vector<2x128xf32>
    %179 = vector.broadcast %160 : vector<1x128xf32> to vector<2x128xf32>
    %180 = arith.addf %178, %179 : vector<2x128xf32>
    %c0_137 = arith.constant 0 : index
    %c0_138 = arith.constant 0 : index
    %181 = vector.load %arg47[%c0_137, %c0_138] : memref<128x192xf32, #tpu.memory_space<vmem>>, vector<128x192xf32>
    %cst_139 = arith.constant dense<0.000000e+00> : vector<2x192xf32>
    %182 = tpu.matmul %180, %181, %cst_139 {dimension_numbers = #tpu.dot_dimension_numbers<[1], [0], [0], [1], [0, 0, 1, 1], [], []>} : vector<2x128xf32>, vector<128x192xf32>, vector<2x192xf32> -> vector<2x192xf32>
    %c0_140 = arith.constant 0 : index
    %c0_141 = arith.constant 0 : index
    %183 = vector.load %arg48[%c0_140, %c0_141] : memref<1x192xf32, #tpu.memory_space<vmem>>, vector<1x192xf32>
    %184 = vector.broadcast %183 : vector<1x192xf32> to vector<2x192xf32>
    %185 = arith.addf %182, %184 : vector<2x192xf32>
    %cst_142 = arith.constant 0.000000e+00 : f32
    %186 = vector.broadcast %cst_142 : f32 to vector<2x192xf32>
    %187 = arith.maximumf %185, %186 : vector<2x192xf32>
    %188 = vector.extract_strided_slice %187 {offsets = [0, 0], sizes = [2, 128], strides = [1, 1]} : vector<2x192xf32> to vector<2x128xf32>
    %189 = vector.extract_strided_slice %187 {offsets = [0, 128], sizes = [2, 64], strides = [1, 1]} : vector<2x192xf32> to vector<2x64xf32>
    %c0_143 = arith.constant 0 : index
    %c0_144 = arith.constant 0 : index
    %190 = vector.load %arg49[%c0_143, %c0_144] : memref<128x64xf32, #tpu.memory_space<vmem>>, vector<128x64xf32>
    %cst_145 = arith.constant dense<0.000000e+00> : vector<2x64xf32>
    %191 = tpu.matmul %188, %190, %cst_145 {dimension_numbers = #tpu.dot_dimension_numbers<[1], [0], [0], [1], [0, 0, 1, 1], [], []>} : vector<2x128xf32>, vector<128x64xf32>, vector<2x64xf32> -> vector<2x64xf32>
    %c0_146 = arith.constant 0 : index
    %c0_147 = arith.constant 0 : index
    %192 = vector.load %arg50[%c0_146, %c0_147] : memref<1x64xf32, #tpu.memory_space<vmem>>, vector<1x64xf32>
    %193 = vector.broadcast %192 : vector<1x64xf32> to vector<2x64xf32>
    %194 = arith.addf %191, %193 : vector<2x64xf32>
    %cst_148 = arith.constant 0.000000e+00 : f32
    %195 = vector.broadcast %cst_148 : f32 to vector<2x64xf32>
    %196 = arith.maximumf %194, %195 : vector<2x64xf32>
    %c0_149 = arith.constant 0 : index
    %c0_150 = arith.constant 0 : index
    %197 = vector.load %arg51[%c0_149, %c0_150] : memref<64x128xf32, #tpu.memory_space<vmem>>, vector<64x128xf32>
    %cst_151 = arith.constant dense<0.000000e+00> : vector<2x128xf32>
    %198 = tpu.matmul %196, %197, %cst_151 {dimension_numbers = #tpu.dot_dimension_numbers<[1], [0], [0], [1], [0, 0, 1, 1], [], []>} : vector<2x64xf32>, vector<64x128xf32>, vector<2x128xf32> -> vector<2x128xf32>
    %c0_152 = arith.constant 0 : index
    %c0_153 = arith.constant 0 : index
    %199 = vector.load %arg52[%c0_152, %c0_153] : memref<1x128xf32, #tpu.memory_space<vmem>>, vector<1x128xf32>
    %200 = vector.broadcast %199 : vector<1x128xf32> to vector<2x128xf32>
    %201 = arith.addf %198, %200 : vector<2x128xf32>
    %c0_154 = arith.constant 0 : index
    %c0_155 = arith.constant 0 : index
    %202 = vector.load %arg53[%c0_154, %c0_155] : memref<64x1xf32, #tpu.memory_space<vmem>>, vector<64x1xf32>
    %cst_156 = arith.constant dense<0.000000e+00> : vector<2x1xf32>
    %203 = tpu.matmul %189, %202, %cst_156 {dimension_numbers = #tpu.dot_dimension_numbers<[1], [0], [0], [1], [0, 0, 1, 1], [], []>} : vector<2x64xf32>, vector<64x1xf32>, vector<2x1xf32> -> vector<2x1xf32>
    %c0_157 = arith.constant 0 : index
    %c0_158 = arith.constant 0 : index
    %204 = vector.load %arg54[%c0_157, %c0_158] : memref<1x1xf32, #tpu.memory_space<vmem>>, vector<1x1xf32>
    %205 = vector.broadcast %204 : vector<1x1xf32> to vector<2x1xf32>
    %206 = arith.addf %203, %205 : vector<2x1xf32>
    %207 = arith.negf %206 : vector<2x1xf32>
    %208 = math.exp %207 : vector<2x1xf32>
    %cst_159 = arith.constant 1.000000e+00 : f32
    %209 = vector.broadcast %cst_159 : f32 to vector<2x1xf32>
    %210 = arith.addf %209, %208 : vector<2x1xf32>
    %211 = arith.divf %209, %210 : vector<2x1xf32>
    %c0_160 = arith.constant 0 : index
    %c0_161 = arith.constant 0 : index
    %212 = vector.load %arg55[%c0_160, %c0_161] : memref<2x1536xf32, #tpu.memory_space<vmem>>, vector<2x256xf32>
    tpu.vector_store %arg55[%c0_160, %c0_161], %88 {strides = array<i32>} : memref<2x1536xf32, #tpu.memory_space<vmem>>, vector<2x256xf32>,
    %c0_162 = arith.constant 0 : index
    %c256 = arith.constant 256 : index
    %213 = vector.load %arg55[%c0_162, %c256] : memref<2x1536xf32, #tpu.memory_space<vmem>>, vector<2x128xf32>
    tpu.vector_store %arg55[%c0_162, %c256], %125 {strides = array<i32>} : memref<2x1536xf32, #tpu.memory_space<vmem>>, vector<2x128xf32>,
    %c0_163 = arith.constant 0 : index
    %c384 = arith.constant 384 : index
    %214 = vector.load %arg55[%c0_163, %c384] : memref<2x1536xf32, #tpu.memory_space<vmem>>, vector<2x128xf32>
    tpu.vector_store %arg55[%c0_163, %c384], %180 {strides = array<i32>} : memref<2x1536xf32, #tpu.memory_space<vmem>>, vector<2x128xf32>,
    %c0_164 = arith.constant 0 : index
    %c512 = arith.constant 512 : index
    %215 = vector.load %arg55[%c0_164, %c512] : memref<2x1536xf32, #tpu.memory_space<vmem>>, vector<2x128xf32>
    tpu.vector_store %arg55[%c0_164, %c512], %201 {strides = array<i32>} : memref<2x1536xf32, #tpu.memory_space<vmem>>, vector<2x128xf32>,
    %c0_165 = arith.constant 0 : index
    %c640 = arith.constant 640 : index
    %216 = vector.load %arg55[%c0_165, %c640] : memref<2x1536xf32, #tpu.memory_space<vmem>>, vector<2x16xf32>
    tpu.vector_store %arg55[%c0_165, %c640], %37 {strides = array<i32>} : memref<2x1536xf32, #tpu.memory_space<vmem>>, vector<2x16xf32>,
    %c0_166 = arith.constant 0 : index
    %c768 = arith.constant 768 : index
    %217 = vector.load %arg55[%c0_166, %c768] : memref<2x1536xf32, #tpu.memory_space<vmem>>, vector<2x64xf32>
    tpu.vector_store %arg55[%c0_166, %c768], %57 {strides = array<i32>} : memref<2x1536xf32, #tpu.memory_space<vmem>>, vector<2x64xf32>,
    %c0_167 = arith.constant 0 : index
    %c896 = arith.constant 896 : index
    %218 = vector.load %arg55[%c0_167, %c896] : memref<2x1536xf32, #tpu.memory_space<vmem>>, vector<2x64xf32>
    tpu.vector_store %arg55[%c0_167, %c896], %77 {strides = array<i32>} : memref<2x1536xf32, #tpu.memory_space<vmem>>, vector<2x64xf32>,
    %c0_168 = arith.constant 0 : index
    %c1024 = arith.constant 1024 : index
    %219 = vector.load %arg55[%c0_168, %c1024] : memref<2x1536xf32, #tpu.memory_space<vmem>>, vector<2x10xf32>
    tpu.vector_store %arg55[%c0_168, %c1024], %143 {strides = array<i32>} : memref<2x1536xf32, #tpu.memory_space<vmem>>, vector<2x10xf32>,
    %c0_169 = arith.constant 0 : index
    %c1152 = arith.constant 1152 : index
    %220 = vector.load %arg55[%c0_169, %c1152] : memref<2x1536xf32, #tpu.memory_space<vmem>>, vector<2x32xf32>
    tpu.vector_store %arg55[%c0_169, %c1152], %138 {strides = array<i32>} : memref<2x1536xf32, #tpu.memory_space<vmem>>, vector<2x32xf32>,
    %c0_170 = arith.constant 0 : index
    %c1280 = arith.constant 1280 : index
    %221 = vector.load %arg55[%c0_170, %c1280] : memref<2x1536xf32, #tpu.memory_space<vmem>>, vector<2x64xf32>
    tpu.vector_store %arg55[%c0_170, %c1280], %136 {strides = array<i32>} : memref<2x1536xf32, #tpu.memory_space<vmem>>, vector<2x64xf32>,
    %c0_171 = arith.constant 0 : index
    %c1408 = arith.constant 1408 : index
    %222 = vector.load %arg55[%c0_171, %c1408] : memref<2x1536xf32, #tpu.memory_space<vmem>>, vector<2x1xf32>
    tpu.vector_store %arg55[%c0_171, %c1408], %211 {strides = array<i32>} : memref<2x1536xf32, #tpu.memory_space<vmem>>, vector<2x1xf32>,
    return
  }
}

</mosaic_0001>

<llo_original>
// kernel: brand_analyzer_forward.1
$region0: #{brand_analyzer_forward.1}
  #allocation0 [shape = 'u32[]', space=smem, size = 0x4, offset = 0x4, fixed_abs, tag = 'smem constant byte address 0x4 - core index']
  #allocation1 [shape = 'u32[144,128]{1,0:T(1,128)}', space=vmem, size = 0x12000, scoped, tag = 'internal scratch']
  #allocation2 [shape = 'f32[1,1]{1,0:T(1,128)S(1)}', space=vmem, size = 0x200, scoped, tag = 'scoped memory for brand_analyzer_forward.1']
  %s0 = inlined_call_operand.smem [shape: u32[56], index: -1, kind: input, shape index: {}]
  %s1 = sld [smem:[%s0]]
  %s2 = scalar_lea.smem %s0, 1
  %s3 = sld [smem:[%s2]]
  %s4 = scalar_lea.smem %s0, 2
  %s5 = sld [smem:[%s4]]
  %s6 = scalar_lea.smem %s0, 3
  %s7 = sld [smem:[%s6]]
  %s8 = scalar_lea.smem %s0, 4
  %s9 = sld [smem:[%s8]]
  %s10 = scalar_lea.smem %s0, 5
  %s11 = sld [smem:[%s10]]
  %s12 = scalar_lea.smem %s0, 6
  %s13 = sld [smem:[%s12]]
  %s14 = scalar_lea.smem %s0, 7
  %s15 = sld [smem:[%s14]]
  %s16 = scalar_lea.smem %s0, 8
  %s17 = sld [smem:[%s16]]
  %s18 = scalar_lea.smem %s0, 9
  %s19 = sld [smem:[%s18]]
  %s20 = scalar_lea.smem %s0, 10
  %s21 = sld [smem:[%s20]]
  %s22 = scalar_lea.smem %s0, 11
  %s23 = sld [smem:[%s22]]
  %s24 = scalar_lea.smem %s0, 12
  %s25 = sld [smem:[%s24]]
  %s26 = scalar_lea.smem %s0, 13
  %s27 = sld [smem:[%s26]]
  %s28 = scalar_lea.smem %s0, 14
  %s29 = sld [smem:[%s28]]
  %s30 = scalar_lea.smem %s0, 15
  %s31 = sld [smem:[%s30]]
  %s32 = scalar_lea.smem %s0, 16
  %s33 = sld [smem:[%s32]]
  %s34 = scalar_lea.smem %s0, 17
  %s35 = sld [smem:[%s34]]
  %s36 = scalar_lea.smem %s0, 18
  %s37 = sld [smem:[%s36]]
  %s38 = scalar_lea.smem %s0, 19
  %s39 = sld [smem:[%s38]]
  %s40 = scalar_lea.smem %s0, 20
  %s41 = sld [smem:[%s40]]
  %s42 = scalar_lea.smem %s0, 21
  %s43 = sld [smem:[%s42]]
  %s44 = scalar_lea.smem %s0, 22
  %s45 = sld [smem:[%s44]]
  %s46 = scalar_lea.smem %s0, 23
  %s47 = sld [smem:[%s46]]
  %s48 = scalar_lea.smem %s0, 24
  %s49 = sld [smem:[%s48]]
  %s50 = scalar_lea.smem %s0, 25
  %s51 = sld [smem:[%s50]]
  %s52 = scalar_lea.smem %s0, 26
  %s53 = sld [smem:[%s52]]
  %s54 = scalar_lea.smem %s0, 27
  %s55 = sld [smem:[%s54]]
  %s56 = scalar_lea.smem %s0, 28
  %s57 = sld [smem:[%s56]]
  %s58 = scalar_lea.smem %s0, 29
  %s59 = sld [smem:[%s58]]
  %s60 = scalar_lea.smem %s0, 30
  %s61 = sld [smem:[%s60]]
  %s62 = scalar_lea.smem %s0, 31
  %s63 = sld [smem:[%s62]]
  %s64 = scalar_lea.smem %s0, 32
  %s65 = sld [smem:[%s64]]
  %s66 = scalar_lea.smem %s0, 33
  %s67 = sld [smem:[%s66]]
  %s68 = scalar_lea.smem %s0, 34
  %s69 = sld [smem:[%s68]]
  %s70 = scalar_lea.smem %s0, 35
  %s71 = sld [smem:[%s70]]
  %s72 = scalar_lea.smem %s0, 36
  %s73 = sld [smem:[%s72]]
  %s74 = scalar_lea.smem %s0, 37
  %s75 = sld [smem:[%s74]]
  %s76 = scalar_lea.smem %s0, 38
  %s77 = sld [smem:[%s76]]
  %s78 = scalar_lea.smem %s0, 39
  %s79 = sld [smem:[%s78]]
  %s80 = scalar_lea.smem %s0, 40
  %s81 = sld [smem:[%s80]]
  %s82 = scalar_lea.smem %s0, 41
  %s83 = sld [smem:[%s82]]
  %s84 = scalar_lea.smem %s0, 42
  %s85 = sld [smem:[%s84]]
  %s86 = scalar_lea.smem %s0, 43
  %s87 = sld [smem:[%s86]]
  %s88 = scalar_lea.smem %s0, 44
  %s89 = sld [smem:[%s88]]
  %s90 = scalar_lea.smem %s0, 45
  %s91 = sld [smem:[%s90]]
  %s92 = scalar_lea.smem %s0, 46
  %s93 = sld [smem:[%s92]]
  %s94 = scalar_lea.smem %s0, 47
  %s95 = sld [smem:[%s94]]
  %s96 = scalar_lea.smem %s0, 48
  %s97 = sld [smem:[%s96]]
  %s98 = scalar_lea.smem %s0, 49
  %s99 = sld [smem:[%s98]]
  %s100 = scalar_lea.smem %s0, 50
  %s101 = sld [smem:[%s100]]
  %s102 = scalar_lea.smem %s0, 51
  %s103 = sld [smem:[%s102]]
  %s104 = scalar_lea.smem %s0, 52
  %s105 = sld [smem:[%s104]]
  %s106 = scalar_lea.smem %s0, 53
  %s107 = sld [smem:[%s106]]
  %s108 = scalar_lea.smem %s0, 54
  %s109 = sld [smem:[%s108]]
  %s110 = scalar_lea.smem %s0, 55
  %s111 = sld [smem:[%s110]]
  %s112 = sld [smem:[#allocation0]]
  $region378: #{brand_analyzer_forward.1} parent=0
    _
  %s114 = ssub.s32 1, %s112
  %s115 = scalar_select 0, %s114, %s112
  %v116 = vstv %s109
  %117 = vst [vmem:[#allocation2] sm:$0x1] %v116
  $region1: #{brand_analyzer_forward.1} parent=0
    #allocation3 [shape = 'u8[1024]{0}', space=vmem, size = 0x400, scoped, tag = 'input window, operand 5, single buffered']
    #allocation4 [shape = 's32[1]{0}', space=sflag, size = 0x4, scoped, tag = 'scoped memory for brand_analyzer_forward.1']
    #allocation5 [shape = 'u8[512]{0}', space=vmem, size = 0x400, scoped, tag = 'input window, operand 6, single buffered']
    #allocation6 [shape = 's32[1]{0}', space=sflag, size = 0x4, scoped, tag = 'scoped memory for brand_analyzer_forward.1']
    #allocation7 [shape = 'u8[512]{0}', space=vmem, size = 0x400, scoped, tag = 'input window, operand 7, single buffered']
    #allocation8 [shape = 'u8[512]{0}', space=vmem, size = 0x400, scoped, tag = 'input window, operand 8, single buffered']
    #allocation9 [shape = 's32[1]{0}', space=sflag, size = 0x4, scoped, tag = 'scoped memory for brand_analyzer_forward.1']
    #allocation10 [shape = 'u8[512]{0}', space=vmem, size = 0x400, scoped, tag = 'input window, operand 9, single buffered']
    #allocation11 [shape = 'u8[32768]{0}', space=vmem, size = 0x8000, scoped, tag = 'input window, operand 10, single buffered']
    #allocation12 [shape = 's32[1]{0}', space=sflag, size = 0x4, scoped, tag = 'scoped memory for brand_analyzer_forward.1']
    #allocation13 [shape = 'u8[512]{0}', space=vmem, size = 0x400, scoped, tag = 'input window, operand 11, single buffered']
    #allocation14 [shape = 'u8[512]{0}', space=vmem, size = 0x400, scoped, tag = 'input window, operand 13, single buffered']
    #allocation15 [shape = 's32[1]{0}', space=sflag, size = 0x4, scoped, tag = 'scoped memory for brand_analyzer_forward.1']
    #allocation16 [shape = 'u8[65536]{0}', space=vmem, size = 0x10000, scoped, tag = 'input window, operand 14, single buffered']
    #allocation17 [shape = 'u8[1024]{0}', space=vmem, size = 0x400, scoped, tag = 'input window, operand 15, single buffered']
    #allocation18 [shape = 's32[1]{0}', space=sflag, size = 0x4, scoped, tag = 'scoped memory for brand_analyzer_forward.1']
    #allocation19 [shape = 'u8[2048]{0}', space=vmem, size = 0x800, scoped, tag = 'input window, operand 17, single buffered']
    #allocation20 [shape = 'u8[512]{0}', space=vmem, size = 0x400, scoped, tag = 'input window, operand 19, single buffered']
    #allocation21 [shape = 's32[1]{0}', space=sflag, size = 0x4, scoped, tag = 'scoped memory for brand_analyzer_forward.1']
    #allocation22 [shape = 'u8[1024]{0}', space=vmem, size = 0x400, scoped, tag = 'input window, operand 21, single buffered']
    #allocation23 [shape = 'u8[2048]{0}', space=vmem, size = 0x800, scoped, tag = 'input window, operand 23, single buffered']
    #allocation24 [shape = 's32[1]{0}', space=sflag, size = 0x4, scoped, tag = 'scoped memory for brand_analyzer_forward.1']
    #allocation25 [shape = 'u8[512]{0}', space=vmem, size = 0x400, scoped, tag = 'input window, operand 25, single buffered']
    #allocation26 [shape = 'u8[65536]{0}', space=vmem, size = 0x10000, scoped, tag = 'input window, operand 27, single buffered']
    #allocation27 [shape = 's32[1]{0}', space=sflag, size = 0x4, scoped, tag = 'scoped memory for brand_analyzer_forward.1']
    #allocation28 [shape = 'u8[65536]{0}', space=vmem, size = 0x10000, scoped, tag = 'input window, operand 28, single buffered']
    #allocation29 [shape = 'u8[1024]{0}', space=vmem, size = 0x400, scoped, tag = 'input window, operand 29, single buffered']
    #allocation30 [shape = 's32[1]{0}', space=sflag, size = 0x4, scoped, tag = 'scoped memory for brand_analyzer_forward.1']
    #allocation31 [shape = 'u8[65536]{0}', space=vmem, size = 0x10000, scoped, tag = 'input window, operand 30, single buffered']
    #allocation32 [shape = 'u8[512]{0}', space=vmem, size = 0x400, scoped, tag = 'input window, operand 31, single buffered']
    #allocation33 [shape = 's32[1]{0}', space=sflag, size = 0x4, scoped, tag = 'scoped memory for brand_analyzer_forward.1']
    #allocation34 [shape = 'u8[65536]{0}', space=vmem, size = 0x10000, scoped, tag = 'input window, operand 32, single buffered']
    #allocation35 [shape = 'u8[512]{0}', space=vmem, size = 0x400, scoped, tag = 'input window, operand 33, single buffered']
    #allocation36 [shape = 's32[1]{0}', space=sflag, size = 0x4, scoped, tag = 'scoped memory for brand_analyzer_forward.1']
    #allocation37 [shape = 'u8[512]{0}', space=vmem, size = 0x400, scoped, tag = 'input window, operand 34, single buffered']
    #allocation38 [shape = 'u8[512]{0}', space=vmem, size = 0x400, scoped, tag = 'input window, operand 35, single buffered']
    #allocation39 [shape = 's32[1]{0}', space=sflag, size = 0x4, scoped, tag = 'scoped memory for brand_analyzer_forward.1']
    #allocation40 [shape = 'u8[1024]{0}', space=vmem, size = 0x400, scoped, tag = 'input window, operand 37, single buffered']
    #allocation41 [shape = 'u8[512]{0}', space=vmem, size = 0x400, scoped, tag = 'input window, operand 39, single buffered']
    #allocation42 [shape = 's32[1]{0}', space=sflag, size = 0x4, scoped, tag = 'scoped memory for brand_analyzer_forward.1']
    #allocation43 [shape = 'u8[65536]{0}', space=vmem, size = 0x10000, scoped, tag = 'input window, operand 40, single buffered']
    #allocation44 [shape = 'u8[131072]{0}', space=vmem, size = 0x20000, scoped, tag = 'input window, operand 41, single buffered']
    #allocation45 [shape = 's32[1]{0}', space=sflag, size = 0x4, scoped, tag = 'scoped memory for brand_analyzer_forward.1']
    #allocation46 [shape = 'u8[512]{0}', space=vmem, size = 0x400, scoped, tag = 'input window, operand 42, single buffered']
    #allocation47 [shape = 'u8[65536]{0}', space=vmem, size = 0x10000, scoped, tag = 'input window, operand 43, single buffered']
    #allocation48 [shape = 's32[1]{0}', space=sflag, size = 0x4, scoped, tag = 'scoped memory for brand_analyzer_forward.1']
    #allocation49 [shape = 'u8[512]{0}', space=vmem, size = 0x400, scoped, tag = 'input window, operand 44, single buffered']
    #allocation50 [shape = 'u8[512]{0}', space=vmem, size = 0x400, scoped, tag = 'input window, operand 45, single buffered']
    #allocation51 [shape = 's32[1]{0}', space=sflag, size = 0x4, scoped, tag = 'scoped memory for brand_analyzer_forward.1']
    #allocation52 [shape = 'u8[512]{0}', space=vmem, size = 0x400, scoped, tag = 'input window, operand 46, single buffered']
    #allocation53 [shape = 'u8[1024]{0}', space=vmem, size = 0x400, scoped, tag = 'input window, operand 48, single buffered']
    #allocation54 [shape = 's32[1]{0}', space=sflag, size = 0x4, scoped, tag = 'scoped memory for brand_analyzer_forward.1']
    #allocation55 [shape = 'u8[512]{0}', space=vmem, size = 0x400, scoped, tag = 'input window, operand 50, single buffered']
    #allocation56 [shape = 'u8[32768]{0}', space=vmem, size = 0x8000, scoped, tag = 'input window, operand 51, single buffered']
    #allocation57 [shape = 's32[1]{0}', space=sflag, size = 0x4, scoped, tag = 'scoped memory for brand_analyzer_forward.1']
    #allocation58 [shape = 'u8[512]{0}', space=vmem, size = 0x400, scoped, tag = 'input window, operand 52, single buffered']
    %118 = vsyncpa [#allocation4], 0
    %119 = vsyncpa [#allocation6], 0
    %120 = vsyncpa [#allocation9], 0
    %121 = vsyncpa [#allocation12], 0
    %122 = vsyncpa [#allocation15], 0
    %123 = vsyncpa [#allocation18], 0
    %124 = vsyncpa [#allocation21], 0
    %125 = vsyncpa [#allocation24], 0
    %126 = vsyncpa [#allocation27], 0
    %127 = vsyncpa [#allocation30], 0
    %128 = vsyncpa [#allocation33], 0
    %129 = vsyncpa [#allocation36], 0
    %130 = vsyncpa [#allocation39], 0
    %131 = vsyncpa [#allocation42], 0
    %132 = vsyncpa [#allocation45], 0
    %133 = vsyncpa [#allocation48], 0
    %134 = vsyncpa [#allocation51], 0
    %135 = vsyncpa [#allocation54], 0
    %136 = vsyncpa [#allocation57], 0
    // Predicated region
    $region2: #{brand_analyzer_forward.1} parent=1 // pred_check
      _
    $region3: #{brand_analyzer_forward.1} parent=1 // pred_check_branch
      %138 = sbr.rel (0) target = $region5
    $region4: #{brand_analyzer_forward.1} parent=1 // pred_region
      _
    $region5: #{brand_analyzer_forward.1} parent=1 // pred_fallthru
      _
    // Predicated region
    $region6: #{brand_analyzer_forward.1} parent=1 // pred_check
      _
    $region7: #{brand_analyzer_forward.1} parent=1 // pred_check_branch
      %140 = sbr.rel (0) target = $region9
    $region8: #{brand_analyzer_forward.1} parent=1 // pred_region
      _
    $region9: #{brand_analyzer_forward.1} parent=1 // pred_fallthru
      _
    // Predicated region
    $region10: #{brand_analyzer_forward.1} parent=1 // pred_check
      _
    $region11: #{brand_analyzer_forward.1} parent=1 // pred_check_branch
      %142 = sbr.rel (0) target = $region13
    $region12: #{brand_analyzer_forward.1} parent=1 // pred_region
      _
    $region13: #{brand_analyzer_forward.1} parent=1 // pred_fallthru
      _
    // Predicated region
    $region14: #{brand_analyzer_forward.1} parent=1 // pred_check
      _
    $region15: #{brand_analyzer_forward.1} parent=1 // pred_check_branch
      %144 = sbr.rel (0) target = $region17
    $region16: #{brand_analyzer_forward.1} parent=1 // pred_region
      _
    $region17: #{brand_analyzer_forward.1} parent=1 // pred_fallthru
      _
    // Predicated region
    $region18: #{brand_analyzer_forward.1} parent=1 // pred_check
      _
    $region19: #{brand_analyzer_forward.1} parent=1 // pred_check_branch
      %146 = sbr.rel (0) target = $region21
    $region20: #{brand_analyzer_forward.1} parent=1 // pred_region
      _
    $region21: #{brand_analyzer_forward.1} parent=1 // pred_fallthru
      _
    // Predicated region
    $region22: #{brand_analyzer_forward.1} parent=1 // pred_check
      _
    $region23: #{brand_analyzer_forward.1} parent=1 // pred_check_branch
      %148 = sbr.rel (0) target = $region25
    $region24: #{brand_analyzer_forward.1} parent=1 // pred_region
      %s150 = ssub.s32 32, 32
      %151 = vsyncadd [#allocation4], %s150
      %s153 = sshll.u32 [#allocation3], 4
      %s154 = int_to_ptr.vmem [resolvable:$true] %s153
      %156 = dma.hbm_to_vmem [thread:$0]  %s11, 32, %s154, [#allocation4]
    $region25: #{brand_analyzer_forward.1} parent=1 // pred_fallthru
      _
    // Predicated region
    $region26: #{brand_analyzer_forward.1} parent=1 // pred_check
      _
    $region27: #{brand_analyzer_forward.1} parent=1 // pred_check_branch
      %158 = sbr.rel (0) target = $region29
    $region28: #{brand_analyzer_forward.1} parent=1 // pred_region
      %s160 = ssub.s32 16, 16
      %161 = vsyncadd [#allocation6], %s160
      %s163 = sshll.u32 [#allocation5], 4
      %s164 = int_to_ptr.vmem [resolvable:$true] %s163
      %166 = dma.hbm_to_vmem [thread:$0]  %s13, 16, %s164, [#allocation6]
    $region29: #{brand_analyzer_forward.1} parent=1 // pred_fallthru
      _
    // Predicated region
    $region30: #{brand_analyzer_forward.1} parent=1 // pred_check
      _
    $region31: #{brand_analyzer_forward.1} parent=1 // pred_check_branch
      %168 = sbr.rel (0) target = $region33
    $region32: #{brand_analyzer_forward.1} parent=1 // pred_region
      %s170 = ssub.s32 16, 16
      %171 = vsyncadd [#allocation6], %s170
      %s173 = sshll.u32 [#allocation7], 4
      %s174 = int_to_ptr.vmem [resolvable:$true] %s173
      %176 = dma.hbm_to_vmem [thread:$0]  %s15, 16, %s174, [#allocation6]
    $region33: #{brand_analyzer_forward.1} parent=1 // pred_fallthru
      _
    // Predicated region
    $region34: #{brand_analyzer_forward.1} parent=1 // pred_check
      _
    $region35: #{brand_analyzer_forward.1} parent=1 // pred_check_branch
      %178 = sbr.rel (0) target = $region37
    $region36: #{brand_analyzer_forward.1} parent=1 // pred_region
      %s180 = ssub.s32 16, 16
      %181 = vsyncadd [#allocation9], %s180
      %s183 = sshll.u32 [#allocation8], 4
      %s184 = int_to_ptr.vmem [resolvable:$true] %s183
      %186 = dma.hbm_to_vmem [thread:$0]  %s17, 16, %s184, [#allocation9]
    $region37: #{brand_analyzer_forward.1} parent=1 // pred_fallthru
      _
    // Predicated region
    $region38: #{brand_analyzer_forward.1} parent=1 // pred_check
      _
    $region39: #{brand_analyzer_forward.1} parent=1 // pred_check_branch
      %188 = sbr.rel (0) target = $region41
    $region40: #{brand_analyzer_forward.1} parent=1 // pred_region
      %s190 = ssub.s32 16, 16
      %191 = vsyncadd [#allocation9], %s190
      %s193 = sshll.u32 [#allocation10], 4
      %s194 = int_to_ptr.vmem [resolvable:$true] %s193
      %196 = dma.hbm_to_vmem [thread:$0]  %s19, 16, %s194, [#allocation9]
    $region41: #{brand_analyzer_forward.1} parent=1 // pred_fallthru
      _
    // Predicated region
    $region42: #{brand_analyzer_forward.1} parent=1 // pred_check
      _
    $region43: #{brand_analyzer_forward.1} parent=1 // pred_check_branch
      %198 = sbr.rel (0) target = $region45
    $region44: #{brand_analyzer_forward.1} parent=1 // pred_region
      %s200 = ssub.s32 1024, 1024
      %201 = vsyncadd [#allocation12], %s200
      %s202 = sshll.u32 [#allocation11], 4
      %s203 = int_to_ptr.vmem [resolvable:$true] %s202
      %208 = dma.hbm_to_vmem [thread:$0]  %s21, 1024, %s203, [#allocation12], 128, 128, 8
    $region45: #{brand_analyzer_forward.1} parent=1 // pred_fallthru
      _
    // Predicated region
    $region46: #{brand_analyzer_forward.1} parent=1 // pred_check
      _
    $region47: #{brand_analyzer_forward.1} parent=1 // pred_check_branch
      %210 = sbr.rel (0) target = $region49
    $region48: #{brand_analyzer_forward.1} parent=1 // pred_region
      %s212 = ssub.s32 16, 16
      %213 = vsyncadd [#allocation12], %s212
      %s215 = sshll.u32 [#allocation13], 4
      %s216 = int_to_ptr.vmem [resolvable:$true] %s215
      %218 = dma.hbm_to_vmem [thread:$0]  %s23, 16, %s216, [#allocation12]
    $region49: #{brand_analyzer_forward.1} parent=1 // pred_fallthru
      _
    // Predicated region
    $region50: #{brand_analyzer_forward.1} parent=1 // pred_check
      _
    $region51: #{brand_analyzer_forward.1} parent=1 // pred_check_branch
      %220 = sbr.rel (0) target = $region53
    $region52: #{brand_analyzer_forward.1} parent=1 // pred_region
      _
    $region53: #{brand_analyzer_forward.1} parent=1 // pred_fallthru
      _
    // Predicated region
    $region54: #{brand_analyzer_forward.1} parent=1 // pred_check
      _
    $region55: #{brand_analyzer_forward.1} parent=1 // pred_check_branch
      %222 = sbr.rel (0) target = $region57
    $region56: #{brand_analyzer_forward.1} parent=1 // pred_region
      %s224 = ssub.s32 16, 16
      %225 = vsyncadd [#allocation15], %s224
      %s227 = sshll.u32 [#allocation14], 4
      %s228 = int_to_ptr.vmem [resolvable:$true] %s227
      %230 = dma.hbm_to_vmem [thread:$0]  %s27, 16, %s228, [#allocation15]
    $region57: #{brand_analyzer_forward.1} parent=1 // pred_fallthru
      _
    // Predicated region
    $region58: #{brand_analyzer_forward.1} parent=1 // pred_check
      _
    $region59: #{brand_analyzer_forward.1} parent=1 // pred_check_branch
      %232 = sbr.rel (0) target = $region61
    $region60: #{brand_analyzer_forward.1} parent=1 // pred_region
      %s234 = ssub.s32 2048, 2048
      %235 = vsyncadd [#allocation15], %s234
      %s236 = sshll.u32 [#allocation16], 4
      %s237 = int_to_ptr.vmem [resolvable:$true] %s236
      %242 = dma.hbm_to_vmem [thread:$0]  %s29, 2048, %s237, [#allocation15], 256, 256, 16
    $region61: #{brand_analyzer_forward.1} parent=1 // pred_fallthru
      _
    // Predicated region
    $region62: #{brand_analyzer_forward.1} parent=1 // pred_check
      _
    $region63: #{brand_analyzer_forward.1} parent=1 // pred_check_branch
      %244 = sbr.rel (0) target = $region65
    $region64: #{brand_analyzer_forward.1} parent=1 // pred_region
      %s246 = ssub.s32 32, 32
      %247 = vsyncadd [#allocation18], %s246
      %s249 = sshll.u32 [#allocation17], 4
      %s250 = int_to_ptr.vmem [resolvable:$true] %s249
      %252 = dma.hbm_to_vmem [thread:$0]  %s31, 32, %s250, [#allocation18]
    $region65: #{brand_analyzer_forward.1} parent=1 // pred_fallthru
      _
    // Predicated region
    $region66: #{brand_analyzer_forward.1} parent=1 // pred_check
      _
    $region67: #{brand_analyzer_forward.1} parent=1 // pred_check_branch
      %254 = sbr.rel (0) target = $region69
    $region68: #{brand_analyzer_forward.1} parent=1 // pred_region
      _
    $region69: #{brand_analyzer_forward.1} parent=1 // pred_fallthru
      _
    // Predicated region
    $region70: #{brand_analyzer_forward.1} parent=1 // pred_check
      _
    $region71: #{brand_analyzer_forward.1} parent=1 // pred_check_branch
      %256 = sbr.rel (0) target = $region73
    $region72: #{brand_analyzer_forward.1} parent=1 // pred_region
      %s258 = ssub.s32 64, 64
      %259 = vsyncadd [#allocation18], %s258
      %s261 = sshll.u32 [#allocation19], 4
      %s262 = int_to_ptr.vmem [resolvable:$true] %s261
      %264 = dma.hbm_to_vmem [thread:$0]  %s35, 64, %s262, [#allocation18]
    $region73: #{brand_analyzer_forward.1} parent=1 // pred_fallthru
      _
    // Predicated region
    $region74: #{brand_analyzer_forward.1} parent=1 // pred_check
      _
    $region75: #{brand_analyzer_forward.1} parent=1 // pred_check_branch
      %266 = sbr.rel (0) target = $region77
    $region76: #{brand_analyzer_forward.1} parent=1 // pred_region
      _
    $region77: #{brand_analyzer_forward.1} parent=1 // pred_fallthru
      _
    // Predicated region
    $region78: #{brand_analyzer_forward.1} parent=1 // pred_check
      _
    $region79: #{brand_analyzer_forward.1} parent=1 // pred_check_branch
      %268 = sbr.rel (0) target = $region81
    $region80: #{brand_analyzer_forward.1} parent=1 // pred_region
      %s270 = ssub.s32 16, 16
      %271 = vsyncadd [#allocation21], %s270
      %s273 = sshll.u32 [#allocation20], 4
      %s274 = int_to_ptr.vmem [resolvable:$true] %s273
      %276 = dma.hbm_to_vmem [thread:$0]  %s39, 16, %s274, [#allocation21]
    $region81: #{brand_analyzer_forward.1} parent=1 // pred_fallthru
      _
    // Predicated region
    $region82: #{brand_analyzer_forward.1} parent=1 // pred_check
      _
    $region83: #{brand_analyzer_forward.1} parent=1 // pred_check_branch
      %278 = sbr.rel (0) target = $region85
    $region84: #{brand_analyzer_forward.1} parent=1 // pred_region
      _
    $region85: #{brand_analyzer_forward.1} parent=1 // pred_fallthru
      _
    // Predicated region
    $region86: #{brand_analyzer_forward.1} parent=1 // pred_check
      _
    $region87: #{brand_analyzer_forward.1} parent=1 // pred_check_branch
      %280 = sbr.rel (0) target = $region89
    $region88: #{brand_analyzer_forward.1} parent=1 // pred_region
      %s282 = ssub.s32 32, 32
      %283 = vsyncadd [#allocation21], %s282
      %s285 = sshll.u32 [#allocation22], 4
      %s286 = int_to_ptr.vmem [resolvable:$true] %s285
      %288 = dma.hbm_to_vmem [thread:$0]  %s43, 32, %s286, [#allocation21]
    $region89: #{brand_analyzer_forward.1} parent=1 // pred_fallthru
      _
    // Predicated region
    $region90: #{brand_analyzer_forward.1} parent=1 // pred_check
      _
    $region91: #{brand_analyzer_forward.1} parent=1 // pred_check_branch
      %290 = sbr.rel (0) target = $region93
    $region92: #{brand_analyzer_forward.1} parent=1 // pred_region
      _
    $region93: #{brand_analyzer_forward.1} parent=1 // pred_fallthru
      _
    // Predicated region
    $region94: #{brand_analyzer_forward.1} parent=1 // pred_check
      _
    $region95: #{brand_analyzer_forward.1} parent=1 // pred_check_branch
      %292 = sbr.rel (0) target = $region97
    $region96: #{brand_analyzer_forward.1} parent=1 // pred_region
      %s294 = ssub.s32 64, 64
      %295 = vsyncadd [#allocation24], %s294
      %s297 = sshll.u32 [#allocation23], 4
      %s298 = int_to_ptr.vmem [resolvable:$true] %s297
      %300 = dma.hbm_to_vmem [thread:$0]  %s47, 64, %s298, [#allocation24]
    $region97: #{brand_analyzer_forward.1} parent=1 // pred_fallthru
      _
    // Predicated region
    $region98: #{brand_analyzer_forward.1} parent=1 // pred_check
      _
    $region99: #{brand_analyzer_forward.1} parent=1 // pred_check_branch
      %302 = sbr.rel (0) target = $region101
    $region100: #{brand_analyzer_forward.1} parent=1 // pred_region
      _
    $region101: #{brand_analyzer_forward.1} parent=1 // pred_fallthru
      _
    // Predicated region
    $region102: #{brand_analyzer_forward.1} parent=1 // pred_check
      _
    $region103: #{brand_analyzer_forward.1} parent=1 // pred_check_branch
      %304 = sbr.rel (0) target = $region105
    $region104: #{brand_analyzer_forward.1} parent=1 // pred_region
      %s306 = ssub.s32 16, 16
      %307 = vsyncadd [#allocation24], %s306
      %s309 = sshll.u32 [#allocation25], 4
      %s310 = int_to_ptr.vmem [resolvable:$true] %s309
      %312 = dma.hbm_to_vmem [thread:$0]  %s51, 16, %s310, [#allocation24]
    $region105: #{brand_analyzer_forward.1} parent=1 // pred_fallthru
      _
    // Predicated region
    $region106: #{brand_analyzer_forward.1} parent=1 // pred_check
      _
    $region107: #{brand_analyzer_forward.1} parent=1 // pred_check_branch
      %314 = sbr.rel (0) target = $region109
    $region108: #{brand_analyzer_forward.1} parent=1 // pred_region
      _
    $region109: #{brand_analyzer_forward.1} parent=1 // pred_fallthru
      _
    // Predicated region
    $region110: #{brand_analyzer_forward.1} parent=1 // pred_check
      _
    $region111: #{brand_analyzer_forward.1} parent=1 // pred_check_branch
      %316 = sbr.rel (0) target = $region113
    $region112: #{brand_analyzer_forward.1} parent=1 // pred_region
      %s318 = ssub.s32 2048, 2048
      %319 = vsyncadd [#allocation27], %s318
      %s320 = sshll.u32 [#allocation26], 4
      %s321 = int_to_ptr.vmem [resolvable:$true] %s320
      %326 = dma.hbm_to_vmem [thread:$0]  %s55, 2048, %s321, [#allocation27], 256, 256, 16
    $region113: #{brand_analyzer_forward.1} parent=1 // pred_fallthru
      _
    // Predicated region
    $region114: #{brand_analyzer_forward.1} parent=1 // pred_check
      _
    $region115: #{brand_analyzer_forward.1} parent=1 // pred_check_branch
      %328 = sbr.rel (0) target = $region117
    $region116: #{brand_analyzer_forward.1} parent=1 // pred_region
      %s330 = ssub.s32 2048, 2048
      %331 = vsyncadd [#allocation27], %s330
      %s332 = sshll.u32 [#allocation28], 4
      %s333 = int_to_ptr.vmem [resolvable:$true] %s332
      %338 = dma.hbm_to_vmem [thread:$0]  %s57, 2048, %s333, [#allocation27], 256, 256, 16
    $region117: #{brand_analyzer_forward.1} parent=1 // pred_fallthru
      _
    // Predicated region
    $region118: #{brand_analyzer_forward.1} parent=1 // pred_check
      _
    $region119: #{brand_analyzer_forward.1} parent=1 // pred_check_branch
      %340 = sbr.rel (0) target = $region121
    $region120: #{brand_analyzer_forward.1} parent=1 // pred_region
      %s342 = ssub.s32 32, 32
      %343 = vsyncadd [#allocation30], %s342
      %s345 = sshll.u32 [#allocation29], 4
      %s346 = int_to_ptr.vmem [resolvable:$true] %s345
      %348 = dma.hbm_to_vmem [thread:$0]  %s59, 32, %s346, [#allocation30]
    $region121: #{brand_analyzer_forward.1} parent=1 // pred_fallthru
      _
    // Predicated region
    $region122: #{brand_analyzer_forward.1} parent=1 // pred_check
      _
    $region123: #{brand_analyzer_forward.1} parent=1 // pred_check_branch
      %350 = sbr.rel (0) target = $region125
    $region124: #{brand_analyzer_forward.1} parent=1 // pred_region
      %s352 = ssub.s32 2048, 2048
      %353 = vsyncadd [#allocation30], %s352
      %s354 = sshll.u32 [#allocation31], 4
      %s355 = int_to_ptr.vmem [resolvable:$true] %s354
      %360 = dma.hbm_to_vmem [thread:$0]  %s61, 2048, %s355, [#allocation30], 128, 128, 8
    $region125: #{brand_analyzer_forward.1} parent=1 // pred_fallthru
      _
    // Predicated region
    $region126: #{brand_analyzer_forward.1} parent=1 // pred_check
      _
    $region127: #{brand_analyzer_forward.1} parent=1 // pred_check_branch
      %362 = sbr.rel (0) target = $region129
    $region128: #{brand_analyzer_forward.1} parent=1 // pred_region
      %s364 = ssub.s32 16, 16
      %365 = vsyncadd [#allocation33], %s364
      %s367 = sshll.u32 [#allocation32], 4
      %s368 = int_to_ptr.vmem [resolvable:$true] %s367
      %370 = dma.hbm_to_vmem [thread:$0]  %s63, 16, %s368, [#allocation33]
    $region129: #{brand_analyzer_forward.1} parent=1 // pred_fallthru
      _
    // Predicated region
    $region130: #{brand_analyzer_forward.1} parent=1 // pred_check
      _
    $region131: #{brand_analyzer_forward.1} parent=1 // pred_check_branch
      %372 = sbr.rel (0) target = $region133
    $region132: #{brand_analyzer_forward.1} parent=1 // pred_region
      %s374 = ssub.s32 2048, 2048
      %375 = vsyncadd [#allocation33], %s374
      %s376 = sshll.u32 [#allocation34], 4
      %s377 = int_to_ptr.vmem [resolvable:$true] %s376
      %382 = dma.hbm_to_vmem [thread:$0]  %s65, 2048, %s377, [#allocation33], 128, 128, 8
    $region133: #{brand_analyzer_forward.1} parent=1 // pred_fallthru
      _
    // Predicated region
    $region134: #{brand_analyzer_forward.1} parent=1 // pred_check
      _
    $region135: #{brand_analyzer_forward.1} parent=1 // pred_check_branch
      %384 = sbr.rel (0) target = $region137
    $region136: #{brand_analyzer_forward.1} parent=1 // pred_region
      %s386 = ssub.s32 16, 16
      %387 = vsyncadd [#allocation36], %s386
      %s389 = sshll.u32 [#allocation35], 4
      %s390 = int_to_ptr.vmem [resolvable:$true] %s389
      %392 = dma.hbm_to_vmem [thread:$0]  %s67, 16, %s390, [#allocation36]
    $region137: #{brand_analyzer_forward.1} parent=1 // pred_fallthru
      _
    // Predicated region
    $region138: #{brand_analyzer_forward.1} parent=1 // pred_check
      _
    $region139: #{brand_analyzer_forward.1} parent=1 // pred_check_branch
      %394 = sbr.rel (0) target = $region141
    $region140: #{brand_analyzer_forward.1} parent=1 // pred_region
      %s396 = ssub.s32 16, 16
      %397 = vsyncadd [#allocation36], %s396
      %s399 = sshll.u32 [#allocation37], 4
      %s400 = int_to_ptr.vmem [resolvable:$true] %s399
      %402 = dma.hbm_to_vmem [thread:$0]  %s69, 16, %s400, [#allocation36]
    $region141: #{brand_analyzer_forward.1} parent=1 // pred_fallthru
      _
    // Predicated region
    $region142: #{brand_analyzer_forward.1} parent=1 // pred_check
      _
    $region143: #{brand_analyzer_forward.1} parent=1 // pred_check_branch
      %404 = sbr.rel (0) target = $region145
    $region144: #{brand_analyzer_forward.1} parent=1 // pred_region
      %s406 = ssub.s32 16, 16
      %407 = vsyncadd [#allocation39], %s406
      %s409 = sshll.u32 [#allocation38], 4
      %s410 = int_to_ptr.vmem [resolvable:$true] %s409
      %412 = dma.hbm_to_vmem [thread:$0]  %s71, 16, %s410, [#allocation39]
    $region145: #{brand_analyzer_forward.1} parent=1 // pred_fallthru
      _
    // Predicated region
    $region146: #{brand_analyzer_forward.1} parent=1 // pred_check
      _
    $region147: #{brand_analyzer_forward.1} parent=1 // pred_check_branch
      %414 = sbr.rel (0) target = $region149
    $region148: #{brand_analyzer_forward.1} parent=1 // pred_region
      _
    $region149: #{brand_analyzer_forward.1} parent=1 // pred_fallthru
      _
    // Predicated region
    $region150: #{brand_analyzer_forward.1} parent=1 // pred_check
      _
    $region151: #{brand_analyzer_forward.1} parent=1 // pred_check_branch
      %416 = sbr.rel (0) target = $region153
    $region152: #{brand_analyzer_forward.1} parent=1 // pred_region
      %s418 = ssub.s32 32, 32
      %419 = vsyncadd [#allocation39], %s418
      %s421 = sshll.u32 [#allocation40], 4
      %s422 = int_to_ptr.vmem [resolvable:$true] %s421
      %424 = dma.hbm_to_vmem [thread:$0]  %s75, 32, %s422, [#allocation39]
    $region153: #{brand_analyzer_forward.1} parent=1 // pred_fallthru
      _
    // Predicated region
    $region154: #{brand_analyzer_forward.1} parent=1 // pred_check
      _
    $region155: #{brand_analyzer_forward.1} parent=1 // pred_check_branch
      %426 = sbr.rel (0) target = $region157
    $region156: #{brand_analyzer_forward.1} parent=1 // pred_region
      _
    $region157: #{brand_analyzer_forward.1} parent=1 // pred_fallthru
      _
    // Predicated region
    $region158: #{brand_analyzer_forward.1} parent=1 // pred_check
      _
    $region159: #{brand_analyzer_forward.1} parent=1 // pred_check_branch
      %428 = sbr.rel (0) target = $region161
    $region160: #{brand_analyzer_forward.1} parent=1 // pred_region
      %s430 = ssub.s32 16, 16
      %431 = vsyncadd [#allocation42], %s430
      %s433 = sshll.u32 [#allocation41], 4
      %s434 = int_to_ptr.vmem [resolvable:$true] %s433
      %436 = dma.hbm_to_vmem [thread:$0]  %s79, 16, %s434, [#allocation42]
    $region161: #{brand_analyzer_forward.1} parent=1 // pred_fallthru
      _
    // Predicated region
    $region162: #{brand_analyzer_forward.1} parent=1 // pred_check
      _
    $region163: #{brand_analyzer_forward.1} parent=1 // pred_check_branch
      %438 = sbr.rel (0) target = $region165
    $region164: #{brand_analyzer_forward.1} parent=1 // pred_region
      %s440 = ssub.s32 2048, 2048
      %441 = vsyncadd [#allocation42], %s440
      %s442 = sshll.u32 [#allocation43], 4
      %s443 = int_to_ptr.vmem [resolvable:$true] %s442
      %448 = dma.hbm_to_vmem [thread:$0]  %s81, 2048, %s443, [#allocation42], 128, 128, 8
    $region165: #{brand_analyzer_forward.1} parent=1 // pred_fallthru
      _
    // Predicated region
    $region166: #{brand_analyzer_forward.1} parent=1 // pred_check
      _
    $region167: #{brand_analyzer_forward.1} parent=1 // pred_check_branch
      %450 = sbr.rel (0) target = $region169
    $region168: #{brand_analyzer_forward.1} parent=1 // pred_region
      %s452 = ssub.s32 4096, 4096
      %453 = vsyncadd [#allocation45], %s452
      %s454 = sshll.u32 [#allocation44], 4
      %s455 = int_to_ptr.vmem [resolvable:$true] %s454
      %460 = dma.hbm_to_vmem [thread:$0]  %s83, 4096, %s455, [#allocation45], 128, 128, 8
    $region169: #{brand_analyzer_forward.1} parent=1 // pred_fallthru
      _
    // Predicated region
    $region170: #{brand_analyzer_forward.1} parent=1 // pred_check
      _
    $region171: #{brand_analyzer_forward.1} parent=1 // pred_check_branch
      %462 = sbr.rel (0) target = $region173
    $region172: #{brand_analyzer_forward.1} parent=1 // pred_region
      %s464 = ssub.s32 16, 16
      %465 = vsyncadd [#allocation45], %s464
      %s467 = sshll.u32 [#allocation46], 4
      %s468 = int_to_ptr.vmem [resolvable:$true] %s467
      %470 = dma.hbm_to_vmem [thread:$0]  %s85, 16, %s468, [#allocation45]
    $region173: #{brand_analyzer_forward.1} parent=1 // pred_fallthru
      _
    // Predicated region
    $region174: #{brand_analyzer_forward.1} parent=1 // pred_check
      _
    $region175: #{brand_analyzer_forward.1} parent=1 // pred_check_branch
      %472 = sbr.rel (0) target = $region177
    $region176: #{brand_analyzer_forward.1} parent=1 // pred_region
      %s474 = ssub.s32 2048, 2048
      %475 = vsyncadd [#allocation48], %s474
      %s476 = sshll.u32 [#allocation47], 4
      %s477 = int_to_ptr.vmem [resolvable:$true] %s476
      %482 = dma.hbm_to_vmem [thread:$0]  %s87, 2048, %s477, [#allocation48], 128, 128, 8
    $region177: #{brand_analyzer_forward.1} parent=1 // pred_fallthru
      _
    // Predicated region
    $region178: #{brand_analyzer_forward.1} parent=1 // pred_check
      _
    $region179: #{brand_analyzer_forward.1} parent=1 // pred_check_branch
      %484 = sbr.rel (0) target = $region181
    $region180: #{brand_analyzer_forward.1} parent=1 // pred_region
      %s486 = ssub.s32 16, 16
      %487 = vsyncadd [#allocation48], %s486
      %s489 = sshll.u32 [#allocation49], 4
      %s490 = int_to_ptr.vmem [resolvable:$true] %s489
      %492 = dma.hbm_to_vmem [thread:$0]  %s89, 16, %s490, [#allocation48]
    $region181: #{brand_analyzer_forward.1} parent=1 // pred_fallthru
      _
    // Predicated region
    $region182: #{brand_analyzer_forward.1} parent=1 // pred_check
      _
    $region183: #{brand_analyzer_forward.1} parent=1 // pred_check_branch
      %494 = sbr.rel (0) target = $region185
    $region184: #{brand_analyzer_forward.1} parent=1 // pred_region
      %s496 = ssub.s32 16, 16
      %497 = vsyncadd [#allocation51], %s496
      %s499 = sshll.u32 [#allocation50], 4
      %s500 = int_to_ptr.vmem [resolvable:$true] %s499
      %502 = dma.hbm_to_vmem [thread:$0]  %s91, 16, %s500, [#allocation51]
    $region185: #{brand_analyzer_forward.1} parent=1 // pred_fallthru
      _
    // Predicated region
    $region186: #{brand_analyzer_forward.1} parent=1 // pred_check
      _
    $region187: #{brand_analyzer_forward.1} parent=1 // pred_check_branch
      %504 = sbr.rel (0) target = $region189
    $region188: #{brand_analyzer_forward.1} parent=1 // pred_region
      %s506 = ssub.s32 16, 16
      %507 = vsyncadd [#allocation51], %s506
      %s509 = sshll.u32 [#allocation52], 4
      %s510 = int_to_ptr.vmem [resolvable:$true] %s509
      %512 = dma.hbm_to_vmem [thread:$0]  %s93, 16, %s510, [#allocation51]
    $region189: #{brand_analyzer_forward.1} parent=1 // pred_fallthru
      _
    // Predicated region
    $region190: #{brand_analyzer_forward.1} parent=1 // pred_check
      _
    $region191: #{brand_analyzer_forward.1} parent=1 // pred_check_branch
      %514 = sbr.rel (0) target = $region193
    $region192: #{brand_analyzer_forward.1} parent=1 // pred_region
      _
    $region193: #{brand_analyzer_forward.1} parent=1 // pred_fallthru
      _
    // Predicated region
    $region194: #{brand_analyzer_forward.1} parent=1 // pred_check
      _
    $region195: #{brand_analyzer_forward.1} parent=1 // pred_check_branch
      %516 = sbr.rel (0) target = $region197
    $region196: #{brand_analyzer_forward.1} parent=1 // pred_region
      %s518 = ssub.s32 32, 32
      %519 = vsyncadd [#allocation54], %s518
      %s521 = sshll.u32 [#allocation53], 4
      %s522 = int_to_ptr.vmem [resolvable:$true] %s521
      %524 = dma.hbm_to_vmem [thread:$0]  %s97, 32, %s522, [#allocation54]
    $region197: #{brand_analyzer_forward.1} parent=1 // pred_fallthru
      _
    // Predicated region
    $region198: #{brand_analyzer_forward.1} parent=1 // pred_check
      _
    $region199: #{brand_analyzer_forward.1} parent=1 // pred_check_branch
      %526 = sbr.rel (0) target = $region201
    $region200: #{brand_analyzer_forward.1} parent=1 // pred_region
      _
    $region201: #{brand_analyzer_forward.1} parent=1 // pred_fallthru
      _
    // Predicated region
    $region202: #{brand_analyzer_forward.1} parent=1 // pred_check
      _
    $region203: #{brand_analyzer_forward.1} parent=1 // pred_check_branch
      %528 = sbr.rel (0) target = $region205
    $region204: #{brand_analyzer_forward.1} parent=1 // pred_region
      %s530 = ssub.s32 16, 16
      %531 = vsyncadd [#allocation54], %s530
      %s533 = sshll.u32 [#allocation55], 4
      %s534 = int_to_ptr.vmem [resolvable:$true] %s533
      %536 = dma.hbm_to_vmem [thread:$0]  %s101, 16, %s534, [#allocation54]
    $region205: #{brand_analyzer_forward.1} parent=1 // pred_fallthru
      _
    // Predicated region
    $region206: #{brand_analyzer_forward.1} parent=1 // pred_check
      _
    $region207: #{brand_analyzer_forward.1} parent=1 // pred_check_branch
      %538 = sbr.rel (0) target = $region209
    $region208: #{brand_analyzer_forward.1} parent=1 // pred_region
      %s540 = ssub.s32 1024, 1024
      %541 = vsyncadd [#allocation57], %s540
      %s542 = sshll.u32 [#allocation56], 4
      %s543 = int_to_ptr.vmem [resolvable:$true] %s542
      %548 = dma.hbm_to_vmem [thread:$0]  %s103, 1024, %s543, [#allocation57], 128, 128, 8
    $region209: #{brand_analyzer_forward.1} parent=1 // pred_fallthru
      _
    // Predicated region
    $region210: #{brand_analyzer_forward.1} parent=1 // pred_check
      _
    $region211: #{brand_analyzer_forward.1} parent=1 // pred_check_branch
      %550 = sbr.rel (0) target = $region213
    $region212: #{brand_analyzer_forward.1} parent=1 // pred_region
      %s552 = ssub.s32 16, 16
      %553 = vsyncadd [#allocation57], %s552
      %s555 = sshll.u32 [#allocation58], 4
      %s556 = int_to_ptr.vmem [resolvable:$true] %s555
      %558 = dma.hbm_to_vmem [thread:$0]  %s105, 16, %s556, [#allocation57]
    $region213: #{brand_analyzer_forward.1} parent=1 // pred_fallthru
      _
    // Predicated region
    $region214: #{brand_analyzer_forward.1} parent=1 // pred_check
      _
    $region215: #{brand_analyzer_forward.1} parent=1 // pred_check_branch
      %560 = sbr.rel (0) target = $region217
    $region216: #{brand_analyzer_forward.1} parent=1 // pred_region
      _
    $region217: #{brand_analyzer_forward.1} parent=1 // pred_fallthru
      _
    // Predicated region
    $region218: #{brand_analyzer_forward.1} parent=1 // pred_check
      _
    $region219: #{brand_analyzer_forward.1} parent=1 // pred_check_branch
      %562 = sbr.rel (0) target = $region221
    $region220: #{brand_analyzer_forward.1} parent=1 // pred_region
      _
    $region221: #{brand_analyzer_forward.1} parent=1 // pred_fallthru
      _
    // Predicated region
    $region222: #{brand_analyzer_forward.1} parent=1 // pred_check
      _
    $region223: #{brand_analyzer_forward.1} parent=1 // pred_check_branch
      %564 = sbr.rel (0) target = $region225
    $region224: #{brand_analyzer_forward.1} parent=1 // pred_region
      %565 = dma.done [#allocation4], 32
    $region225: #{brand_analyzer_forward.1} parent=1 // pred_fallthru
      _
    // Predicated region
    $region226: #{brand_analyzer_forward.1} parent=1 // pred_check
      _
    $region227: #{brand_analyzer_forward.1} parent=1 // pred_check_branch
      %567 = sbr.rel (0) target = $region229
    $region228: #{brand_analyzer_forward.1} parent=1 // pred_region
      %568 = dma.done [#allocation6], 16
    $region229: #{brand_analyzer_forward.1} parent=1 // pred_fallthru
      _
    // Predicated region
    $region230: #{brand_analyzer_forward.1} parent=1 // pred_check
      _
    $region231: #{brand_analyzer_forward.1} parent=1 // pred_check_branch
      %570 = sbr.rel (0) target = $region233
    $region232: #{brand_analyzer_forward.1} parent=1 // pred_region
      %571 = dma.done [#allocation6], 16
    $region233: #{brand_analyzer_forward.1} parent=1 // pred_fallthru
      _
    // Predicated region
    $region234: #{brand_analyzer_forward.1} parent=1 // pred_check
      _
    $region235: #{brand_analyzer_forward.1} parent=1 // pred_check_branch
      %573 = sbr.rel (0) target = $region237
    $region236: #{brand_analyzer_forward.1} parent=1 // pred_region
      %574 = dma.done [#allocation9], 16
    $region237: #{brand_analyzer_forward.1} parent=1 // pred_fallthru
      _
    // Predicated region
    $region238: #{brand_analyzer_forward.1} parent=1 // pred_check
      _
    $region239: #{brand_analyzer_forward.1} parent=1 // pred_check_branch
      %576 = sbr.rel (0) target = $region241
    $region240: #{brand_analyzer_forward.1} parent=1 // pred_region
      %577 = dma.done [#allocation9], 16
    $region241: #{brand_analyzer_forward.1} parent=1 // pred_fallthru
      _
    // Predicated region
    $region242: #{brand_analyzer_forward.1} parent=1 // pred_check
      _
    $region243: #{brand_analyzer_forward.1} parent=1 // pred_check_branch
      %579 = sbr.rel (0) target = $region245
    $region244: #{brand_analyzer_forward.1} parent=1 // pred_region
      %580 = dma.done [#allocation12], 1024
    $region245: #{brand_analyzer_forward.1} parent=1 // pred_fallthru
      _
    // Predicated region
    $region246: #{brand_analyzer_forward.1} parent=1 // pred_check
      _
    $region247: #{brand_analyzer_forward.1} parent=1 // pred_check_branch
      %582 = sbr.rel (0) target = $region249
    $region248: #{brand_analyzer_forward.1} parent=1 // pred_region
      %583 = dma.done [#allocation12], 16
    $region249: #{brand_analyzer_forward.1} parent=1 // pred_fallthru
      _
    // Predicated region
    $region250: #{brand_analyzer_forward.1} parent=1 // pred_check
      _
    $region251: #{brand_analyzer_forward.1} parent=1 // pred_check_branch
      %585 = sbr.rel (0) target = $region253
    $region252: #{brand_analyzer_forward.1} parent=1 // pred_region
      %586 = dma.done [#allocation15], 16
    $region253: #{brand_analyzer_forward.1} parent=1 // pred_fallthru
      _
    // Predicated region
    $region254: #{brand_analyzer_forward.1} parent=1 // pred_check
      _
    $region255: #{brand_analyzer_forward.1} parent=1 // pred_check_branch
      %588 = sbr.rel (0) target = $region257
    $region256: #{brand_analyzer_forward.1} parent=1 // pred_region
      %589 = dma.done [#allocation15], 2048
    $region257: #{brand_analyzer_forward.1} parent=1 // pred_fallthru
      _
    // Predicated region
    $region258: #{brand_analyzer_forward.1} parent=1 // pred_check
      _
    $region259: #{brand_analyzer_forward.1} parent=1 // pred_check_branch
      %591 = sbr.rel (0) target = $region261
    $region260: #{brand_analyzer_forward.1} parent=1 // pred_region
      %592 = dma.done [#allocation18], 32
    $region261: #{brand_analyzer_forward.1} parent=1 // pred_fallthru
      _
    // Predicated region
    $region262: #{brand_analyzer_forward.1} parent=1 // pred_check
      _
    $region263: #{brand_analyzer_forward.1} parent=1 // pred_check_branch
      %594 = sbr.rel (0) target = $region265
    $region264: #{brand_analyzer_forward.1} parent=1 // pred_region
      %595 = dma.done [#allocation18], 64
    $region265: #{brand_analyzer_forward.1} parent=1 // pred_fallthru
      _
    // Predicated region
    $region266: #{brand_analyzer_forward.1} parent=1 // pred_check
      _
    $region267: #{brand_analyzer_forward.1} parent=1 // pred_check_branch
      %597 = sbr.rel (0) target = $region269
    $region268: #{brand_analyzer_forward.1} parent=1 // pred_region
      %598 = dma.done [#allocation21], 16
    $region269: #{brand_analyzer_forward.1} parent=1 // pred_fallthru
      _
    // Predicated region
    $region270: #{brand_analyzer_forward.1} parent=1 // pred_check
      _
    $region271: #{brand_analyzer_forward.1} parent=1 // pred_check_branch
      %600 = sbr.rel (0) target = $region273
    $region272: #{brand_analyzer_forward.1} parent=1 // pred_region
      %601 = dma.done [#allocation21], 32
    $region273: #{brand_analyzer_forward.1} parent=1 // pred_fallthru
      _
    // Predicated region
    $region274: #{brand_analyzer_forward.1} parent=1 // pred_check
      _
    $region275: #{brand_analyzer_forward.1} parent=1 // pred_check_branch
      %603 = sbr.rel (0) target = $region277
    $region276: #{brand_analyzer_forward.1} parent=1 // pred_region
      %604 = dma.done [#allocation24], 64
    $region277: #{brand_analyzer_forward.1} parent=1 // pred_fallthru
      _
    // Predicated region
    $region278: #{brand_analyzer_forward.1} parent=1 // pred_check
      _
    $region279: #{brand_analyzer_forward.1} parent=1 // pred_check_branch
      %606 = sbr.rel (0) target = $region281
    $region280: #{brand_analyzer_forward.1} parent=1 // pred_region
      %607 = dma.done [#allocation24], 16
    $region281: #{brand_analyzer_forward.1} parent=1 // pred_fallthru
      _
    // Predicated region
    $region282: #{brand_analyzer_forward.1} parent=1 // pred_check
      _
    $region283: #{brand_analyzer_forward.1} parent=1 // pred_check_branch
      %609 = sbr.rel (0) target = $region285
    $region284: #{brand_analyzer_forward.1} parent=1 // pred_region
      %610 = dma.done [#allocation27], 2048
    $region285: #{brand_analyzer_forward.1} parent=1 // pred_fallthru
      _
    // Predicated region
    $region286: #{brand_analyzer_forward.1} parent=1 // pred_check
      _
    $region287: #{brand_analyzer_forward.1} parent=1 // pred_check_branch
      %612 = sbr.rel (0) target = $region289
    $region288: #{brand_analyzer_forward.1} parent=1 // pred_region
      %613 = dma.done [#allocation27], 2048
    $region289: #{brand_analyzer_forward.1} parent=1 // pred_fallthru
      _
    // Predicated region
    $region290: #{brand_analyzer_forward.1} parent=1 // pred_check
      _
    $region291: #{brand_analyzer_forward.1} parent=1 // pred_check_branch
      %615 = sbr.rel (0) target = $region293
    $region292: #{brand_analyzer_forward.1} parent=1 // pred_region
      %616 = dma.done [#allocation30], 32
    $region293: #{brand_analyzer_forward.1} parent=1 // pred_fallthru
      _
    // Predicated region
    $region294: #{brand_analyzer_forward.1} parent=1 // pred_check
      _
    $region295: #{brand_analyzer_forward.1} parent=1 // pred_check_branch
      %618 = sbr.rel (0) target = $region297
    $region296: #{brand_analyzer_forward.1} parent=1 // pred_region
      %619 = dma.done [#allocation30], 2048
    $region297: #{brand_analyzer_forward.1} parent=1 // pred_fallthru
      _
    // Predicated region
    $region298: #{brand_analyzer_forward.1} parent=1 // pred_check
      _
    $region299: #{brand_analyzer_forward.1} parent=1 // pred_check_branch
      %621 = sbr.rel (0) target = $region301
    $region300: #{brand_analyzer_forward.1} parent=1 // pred_region
      %622 = dma.done [#allocation33], 16
    $region301: #{brand_analyzer_forward.1} parent=1 // pred_fallthru
      _
    // Predicated region
    $region302: #{brand_analyzer_forward.1} parent=1 // pred_check
      _
    $region303: #{brand_analyzer_forward.1} parent=1 // pred_check_branch
      %624 = sbr.rel (0) target = $region305
    $region304: #{brand_analyzer_forward.1} parent=1 // pred_region
      %625 = dma.done [#allocation33], 2048
    $region305: #{brand_analyzer_forward.1} parent=1 // pred_fallthru
      _
    // Predicated region
    $region306: #{brand_analyzer_forward.1} parent=1 // pred_check
      _
    $region307: #{brand_analyzer_forward.1} parent=1 // pred_check_branch
      %627 = sbr.rel (0) target = $region309
    $region308: #{brand_analyzer_forward.1} parent=1 // pred_region
      %628 = dma.done [#allocation36], 16
    $region309: #{brand_analyzer_forward.1} parent=1 // pred_fallthru
      _
    // Predicated region
    $region310: #{brand_analyzer_forward.1} parent=1 // pred_check
      _
    $region311: #{brand_analyzer_forward.1} parent=1 // pred_check_branch
      %630 = sbr.rel (0) target = $region313
    $region312: #{brand_analyzer_forward.1} parent=1 // pred_region
      %631 = dma.done [#allocation36], 16
    $region313: #{brand_analyzer_forward.1} parent=1 // pred_fallthru
      _
    // Predicated region
    $region314: #{brand_analyzer_forward.1} parent=1 // pred_check
      _
    $region315: #{brand_analyzer_forward.1} parent=1 // pred_check_branch
      %633 = sbr.rel (0) target = $region317
    $region316: #{brand_analyzer_forward.1} parent=1 // pred_region
      %634 = dma.done [#allocation39], 16
    $region317: #{brand_analyzer_forward.1} parent=1 // pred_fallthru
      _
    // Predicated region
    $region318: #{brand_analyzer_forward.1} parent=1 // pred_check
      _
    $region319: #{brand_analyzer_forward.1} parent=1 // pred_check_branch
      %636 = sbr.rel (0) target = $region321
    $region320: #{brand_analyzer_forward.1} parent=1 // pred_region
      %637 = dma.done [#allocation39], 32
    $region321: #{brand_analyzer_forward.1} parent=1 // pred_fallthru
      _
    // Predicated region
    $region322: #{brand_analyzer_forward.1} parent=1 // pred_check
      _
    $region323: #{brand_analyzer_forward.1} parent=1 // pred_check_branch
      %639 = sbr.rel (0) target = $region325
    $region324: #{brand_analyzer_forward.1} parent=1 // pred_region
      %640 = dma.done [#allocation42], 16
    $region325: #{brand_analyzer_forward.1} parent=1 // pred_fallthru
      _
    // Predicated region
    $region326: #{brand_analyzer_forward.1} parent=1 // pred_check
      _
    $region327: #{brand_analyzer_forward.1} parent=1 // pred_check_branch
      %642 = sbr.rel (0) target = $region329
    $region328: #{brand_analyzer_forward.1} parent=1 // pred_region
      %643 = dma.done [#allocation42], 2048
    $region329: #{brand_analyzer_forward.1} parent=1 // pred_fallthru
      _
    // Predicated region
    $region330: #{brand_analyzer_forward.1} parent=1 // pred_check
      _
    $region331: #{brand_analyzer_forward.1} parent=1 // pred_check_branch
      %645 = sbr.rel (0) target = $region333
    $region332: #{brand_analyzer_forward.1} parent=1 // pred_region
      %646 = dma.done [#allocation45], 4096
    $region333: #{brand_analyzer_forward.1} parent=1 // pred_fallthru
      _
    // Predicated region
    $region334: #{brand_analyzer_forward.1} parent=1 // pred_check
      _
    $region335: #{brand_analyzer_forward.1} parent=1 // pred_check_branch
      %648 = sbr.rel (0) target = $region337
    $region336: #{brand_analyzer_forward.1} parent=1 // pred_region
      %649 = dma.done [#allocation45], 16
    $region337: #{brand_analyzer_forward.1} parent=1 // pred_fallthru
      _
    // Predicated region
    $region338: #{brand_analyzer_forward.1} parent=1 // pred_check
      _
    $region339: #{brand_analyzer_forward.1} parent=1 // pred_check_branch
      %651 = sbr.rel (0) target = $region341
    $region340: #{brand_analyzer_forward.1} parent=1 // pred_region
      %652 = dma.done [#allocation48], 2048
    $region341: #{brand_analyzer_forward.1} parent=1 // pred_fallthru
      _
    // Predicated region
    $region342: #{brand_analyzer_forward.1} parent=1 // pred_check
      _
    $region343: #{brand_analyzer_forward.1} parent=1 // pred_check_branch
      %654 = sbr.rel (0) target = $region345
    $region344: #{brand_analyzer_forward.1} parent=1 // pred_region
      %655 = dma.done [#allocation48], 16
    $region345: #{brand_analyzer_forward.1} parent=1 // pred_fallthru
      _
    // Predicated region
    $region346: #{brand_analyzer_forward.1} parent=1 // pred_check
      _
    $region347: #{brand_analyzer_forward.1} parent=1 // pred_check_branch
      %657 = sbr.rel (0) target = $region349
    $region348: #{brand_analyzer_forward.1} parent=1 // pred_region
      %658 = dma.done [#allocation51], 16
    $region349: #{brand_analyzer_forward.1} parent=1 // pred_fallthru
      _
    // Predicated region
    $region350: #{brand_analyzer_forward.1} parent=1 // pred_check
      _
    $region351: #{brand_analyzer_forward.1} parent=1 // pred_check_branch
      %660 = sbr.rel (0) target = $region353
    $region352: #{brand_analyzer_forward.1} parent=1 // pred_region
      %661 = dma.done [#allocation51], 16
    $region353: #{brand_analyzer_forward.1} parent=1 // pred_fallthru
      _
    // Predicated region
    $region354: #{brand_analyzer_forward.1} parent=1 // pred_check
      _
    $region355: #{brand_analyzer_forward.1} parent=1 // pred_check_branch
      %663 = sbr.rel (0) target = $region357
    $region356: #{brand_analyzer_forward.1} parent=1 // pred_region
      %664 = dma.done [#allocation54], 32
    $region357: #{brand_analyzer_forward.1} parent=1 // pred_fallthru
      _
    // Predicated region
    $region358: #{brand_analyzer_forward.1} parent=1 // pred_check
      _
    $region359: #{brand_analyzer_forward.1} parent=1 // pred_check_branch
      %666 = sbr.rel (0) target = $region361
    $region360: #{brand_analyzer_forward.1} parent=1 // pred_region
      %667 = dma.done [#allocation54], 16
    $region361: #{brand_analyzer_forward.1} parent=1 // pred_fallthru
      _
    // Predicated region
    $region362: #{brand_analyzer_forward.1} parent=1 // pred_check
      _
    $region363: #{brand_analyzer_forward.1} parent=1 // pred_check_branch
      %669 = sbr.rel (0) target = $region365
    $region364: #{brand_analyzer_forward.1} parent=1 // pred_region
      %670 = dma.done [#allocation57], 1024
    $region365: #{brand_analyzer_forward.1} parent=1 // pred_fallthru
      _
    // Predicated region
    $region366: #{brand_analyzer_forward.1} parent=1 // pred_check
      _
    $region367: #{brand_analyzer_forward.1} parent=1 // pred_check_branch
      %672 = sbr.rel (0) target = $region369
    $region368: #{brand_analyzer_forward.1} parent=1 // pred_region
      %673 = dma.done [#allocation57], 16
    $region369: #{brand_analyzer_forward.1} parent=1 // pred_fallthru
      _
    %674 = vst [vmem:[%s111] sm:$0xff] 0.0
    %675 = vst [vmem:[%s111 + $0x8] sm:$0xff] 0.0
    %676 = vst [vmem:[%s111 + $0x10] sm:$0xff] 0.0
    %v677 = vld [vmem:[%s1] sm:$0xff]
    %v678 = vld [vmem:[%s1 + $0x8] sm:$0xff]
    %v679 = vld [vmem:[#allocation5] sm:$0x1]
    %681 = vset.pattern.permute.xlu0 0
    %682 = vperm.xlu0 %681, %v677
    %v683 = vpop.permute.xlu0 %682
    %686 = vset.pattern.permute.xlu0 0
    %687 = vperm.xlu0 %686, %v678
    %v688 = vpop.permute.xlu0 %687
    %v691 = vlaneseq
    %v692 = vshrl.u32 %v691, 7
    %v693 = vsub.s32 0, %v692
    %v694 = vrot.slane %v679, %v693
    %v696 = vmul.f32 %v683, %v694
    %v697 = vmul.f32 %v688, %v694
    %v698 = vld [vmem:[#allocation7] sm:$0x1]
    %699 = vset.pattern.permute.xlu0 1
    %700 = vperm.xlu0 %699, %v677
    %v701 = vpop.permute.xlu0 %700
    %703 = vset.pattern.permute.xlu0 1
    %704 = vperm.xlu0 %703, %v678
    %v705 = vpop.permute.xlu0 %704
    %v708 = vlaneseq
    %v709 = vshrl.u32 %v708, 7
    %v710 = vsub.s32 0, %v709
    %v711 = vrot.slane %v698, %v710
    %v713 = vmul.f32 %v701, %v711
    %v714 = vmul.f32 %v705, %v711
    %v715 = vadd.f32 %v696, %v713
    %v716 = vadd.f32 %v697, %v714
    %v717 = vld [vmem:[#allocation8] sm:$0x1]
    %718 = vset.pattern.permute.xlu0 2
    %719 = vperm.xlu0 %718, %v677
    %v720 = vpop.permute.xlu0 %719
    %722 = vset.pattern.permute.xlu0 2
    %723 = vperm.xlu0 %722, %v678
    %v724 = vpop.permute.xlu0 %723
    %v727 = vlaneseq
    %v728 = vshrl.u32 %v727, 7
    %v729 = vsub.s32 0, %v728
    %v730 = vrot.slane %v717, %v729
    %v732 = vmul.f32 %v720, %v730
    %v733 = vmul.f32 %v724, %v730
    %v734 = vadd.f32 %v715, %v732
    %v735 = vadd.f32 %v716, %v733
    %v736 = vld [vmem:[#allocation10] sm:$0x1]
    %v738 = vlaneseq
    %v739 = vshrl.u32 %v738, 7
    %v740 = vsub.s32 0, %v739
    %v741 = vrot.slane %v736, %v740
    %v743 = vadd.f32 %v734, %v741
    %v744 = vadd.f32 %v735, %v741
    %v745 = vmax.f32 %v743, 0.0
    %v746 = vmax.f32 %v744, 0.0
    %v747 = vld [vmem:[#allocation11] sm:$0xff]
    %v748 = vld [vmem:[#allocation11 + $0x8] sm:$0xff]
    %v749 = vld [vmem:[#allocation11 + $0x10] sm:$0xff]
    %v750 = vld [vmem:[#allocation11 + $0x18] sm:$0xff]
    %v751 = vld [vmem:[#allocation11 + $0x20] sm:$0xff]
    %v752 = vld [vmem:[#allocation11 + $0x28] sm:$0xff]
    %v753 = vld [vmem:[#allocation11 + $0x30] sm:$0xff]
    %v754 = vld [vmem:[#allocation11 + $0x38] sm:$0xff]
    %v755 = vld [vmem:[#allocation13] sm:$0x1]
    %v757 = vlaneseq
    %v758 = vshrl.u32 %v757, 7
    %v759 = vsub.s32 0, %v758
    %v760 = vrot.slane %v755, %v759
    %vm762 = vcmask 523264
    %v764 = vsel %vm762, %v745, 0
    %v767 = vsel %vm762, %v746, 0
    %769 = vmatprep.subr.mxu0 0.0
    %770 = vmatpush1.msra.mxu0 %v747
    %771 = vmatprep.subr.mxu0 0.0
    %772 = vmatpush1.msra.mxu0 %v748
    %773 = vmatprep.subr.mxu0 0.0
    %774 = vmatpush1.msra.mxu0 %v749
    %775 = vmatprep.subr.mxu0 0.0
    %776 = vmatpush1.msra.mxu0 %v750
    %777 = vmatprep.subr.mxu0 0.0
    %778 = vmatpush1.msra.mxu0 %v751
    %779 = vmatprep.subr.mxu0 0.0
    %780 = vmatpush1.msra.mxu0 %v752
    %781 = vmatprep.subr.mxu0 0.0
    %782 = vmatpush1.msra.mxu0 %v753
    %783 = vmatprep.subr.mxu0 0.0
    %784 = vmatpush1.msra.mxu0 %v754
    %785 = vmatprep.subr.mxu0 0.0
    %786 = vmatpush1.msra.mxu0 0.0
    %787 = vmatprep.subr.mxu0 0.0
    %788 = vmatpush1.msra.mxu0 0.0
    %789 = vmatprep.subr.mxu0 0.0
    %790 = vmatpush1.msra.mxu0 0.0
    %791 = vmatprep.subr.mxu0 0.0
    %792 = vmatpush1.msra.mxu0 0.0
    %793 = vmatprep.subr.mxu0 0.0
    %794 = vmatpush1.msra.mxu0 0.0
    %795 = vmatprep.subr.mxu0 0.0
    %796 = vmatpush1.msra.mxu0 0.0
    %797 = vmatprep.subr.mxu0 0.0
    %798 = vmatpush1.msra.mxu0 0.0
    %799 = vmatprep.subr.mxu0 0.0
    %800 = vmatpush1.msra.mxu0 0.0
    %801 = vmatprep.subr.mxu0 0.0
    %802 = vmatpush1.msra.mxu0 0.0
    %803 = vmatprep.subr.mxu0 0.0
    %804 = vmatpush1.msra.mxu0 0.0
    %805 = vmatprep.subr.mxu0 0.0
    %806 = vmatpush1.msra.mxu0 0.0
    %807 = vmatprep.subr.mxu0 0.0
    %808 = vmatpush1.msra.mxu0 0.0
    %809 = vmatprep.subr.mxu0 0.0
    %810 = vmatpush1.msra.mxu0 0.0
    %811 = vmatprep.subr.mxu0 0.0
    %812 = vmatpush1.msra.mxu0 0.0
    %813 = vmatprep.subr.mxu0 0.0
    %814 = vmatpush1.msra.mxu0 0.0
    %815 = vmatprep.subr.mxu0 0.0
    %816 = vmatpush1.msra.mxu0 0.0
    %817 = vmatprep.subr.mxu0 0.0
    %818 = vmatpush1.msra.mxu0 0.0
    %819 = vmatprep.subr.mxu0 0.0
    %820 = vmatpush1.msra.mxu0 0.0
    %821 = vmatprep.subr.mxu0 0.0
    %822 = vmatpush1.msra.mxu0 0.0
    %823 = vmatprep.subr.mxu0 0.0
    %824 = vmatpush1.msra.mxu0 0.0
    %825 = vmatprep.subr.mxu0 0.0
    %826 = vmatpush1.msra.mxu0 0.0
    %827 = vmatprep.subr.mxu0 0.0
    %828 = vmatpush1.msra.mxu0 0.0
    %829 = vmatprep.subr.mxu0 0.0
    %830 = vmatpush1.msra.mxu0 0.0
    %831 = vmatprep.subr.mxu0 0.0
    %832 = vmatpush1.msra.mxu0 0.0
    %833 = vmatprep.mubr.f32.mxu0 0.0
    %834 = vmatmul.mubr.f32.gmra.mrb[0].mxu0 %v764
    %v835 = vpop.f32.mrb[0].mxu0
    %v836 = vadd.f32 %v760, %v835
    %v837 = vpop.f32.mrb[0].mxu0
    %838 = vmatprep.mubr.f32.mxu0 0.0
    %839 = vmatmul.mubr.f32.gmra.mrb[0].mxu0 %v767
    %v840 = vpop.f32.mrb[0].mxu0
    %v841 = vadd.f32 %v760, %v840
    %v842 = vpop.f32.mrb[0].mxu0
    %843 = vdwg.mxu0
    %v844 = vmax.f32 %v836, 0.0
    %v845 = vmax.f32 %v841, 0.0
    %v846 = vld [vmem:[%s25] sm:$0xff]
    %v847 = vld [vmem:[%s25 + $0x8] sm:$0xff]
    %v848 = vld [vmem:[%s25 + $0x10] sm:$0xff]
    %v849 = vld [vmem:[%s25 + $0x18] sm:$0xff]
    %v850 = vld [vmem:[%s25 + $0x20] sm:$0xff]
    %v851 = vld [vmem:[%s25 + $0x28] sm:$0xff]
    %v852 = vld [vmem:[%s25 + $0x30] sm:$0xff]
    %v853 = vld [vmem:[%s25 + $0x38] sm:$0xff]
    %v854 = vld [vmem:[%s25 + $0x40] sm:$0xff]
    %v855 = vld [vmem:[%s25 + $0x48] sm:$0xff]
    %v856 = vld [vmem:[%s25 + $0x50] sm:$0xff]
    %v857 = vld [vmem:[%s25 + $0x58] sm:$0xff]
    %v858 = vld [vmem:[%s25 + $0x60] sm:$0xff]
    %v859 = vld [vmem:[%s25 + $0x68] sm:$0xff]
    %v860 = vld [vmem:[%s25 + $0x70] sm:$0xff]
    %v861 = vld [vmem:[%s25 + $0x78] sm:$0xff]
    %v862 = vld [vmem:[#allocation14] sm:$0x1]
    %v864 = vlaneseq
    %v865 = vshrl.u32 %v864, 7
    %v866 = vsub.s32 0, %v865
    %v867 = vrot.slane %v862, %v866
    %869 = vmatprep.subr.mxu0 0.0
    %870 = vmatpush1.msra.mxu0 %v846
    %871 = vmatprep.subr.mxu0 0.0
    %872 = vmatpush1.msra.mxu0 %v847
    %873 = vmatprep.subr.mxu0 0.0
    %874 = vmatpush1.msra.mxu0 %v848
    %875 = vmatprep.subr.mxu0 0.0
    %876 = vmatpush1.msra.mxu0 %v849
    %877 = vmatprep.subr.mxu0 0.0
    %878 = vmatpush1.msra.mxu0 %v850
    %879 = vmatprep.subr.mxu0 0.0
    %880 = vmatpush1.msra.mxu0 %v851
    %881 = vmatprep.subr.mxu0 0.0
    %882 = vmatpush1.msra.mxu0 %v852
    %883 = vmatprep.subr.mxu0 0.0
    %884 = vmatpush1.msra.mxu0 %v853
    %885 = vmatprep.subr.mxu0 0.0
    %886 = vmatpush1.msra.mxu0 %v854
    %887 = vmatprep.subr.mxu0 0.0
    %888 = vmatpush1.msra.mxu0 %v855
    %889 = vmatprep.subr.mxu0 0.0
    %890 = vmatpush1.msra.mxu0 %v856
    %891 = vmatprep.subr.mxu0 0.0
    %892 = vmatpush1.msra.mxu0 %v857
    %893 = vmatprep.subr.mxu0 0.0
    %894 = vmatpush1.msra.mxu0 %v858
    %895 = vmatprep.subr.mxu0 0.0
    %896 = vmatpush1.msra.mxu0 %v859
    %897 = vmatprep.subr.mxu0 0.0
    %898 = vmatpush1.msra.mxu0 %v860
    %899 = vmatprep.subr.mxu0 0.0
    %900 = vmatpush1.msra.mxu0 %v861
    %901 = vmatprep.subr.mxu0 0.0
    %902 = vmatpush1.msra.mxu0 0.0
    %903 = vmatprep.subr.mxu0 0.0
    %904 = vmatpush1.msra.mxu0 0.0
    %905 = vmatprep.subr.mxu0 0.0
    %906 = vmatpush1.msra.mxu0 0.0
    %907 = vmatprep.subr.mxu0 0.0
    %908 = vmatpush1.msra.mxu0 0.0
    %909 = vmatprep.subr.mxu0 0.0
    %910 = vmatpush1.msra.mxu0 0.0
    %911 = vmatprep.subr.mxu0 0.0
    %912 = vmatpush1.msra.mxu0 0.0
    %913 = vmatprep.subr.mxu0 0.0
    %914 = vmatpush1.msra.mxu0 0.0
    %915 = vmatprep.subr.mxu0 0.0
    %916 = vmatpush1.msra.mxu0 0.0
    %917 = vmatprep.subr.mxu0 0.0
    %918 = vmatpush1.msra.mxu0 0.0
    %919 = vmatprep.subr.mxu0 0.0
    %920 = vmatpush1.msra.mxu0 0.0
    %921 = vmatprep.subr.mxu0 0.0
    %922 = vmatpush1.msra.mxu0 0.0
    %923 = vmatprep.subr.mxu0 0.0
    %924 = vmatpush1.msra.mxu0 0.0
    %925 = vmatprep.subr.mxu0 0.0
    %926 = vmatpush1.msra.mxu0 0.0
    %927 = vmatprep.subr.mxu0 0.0
    %928 = vmatpush1.msra.mxu0 0.0
    %929 = vmatprep.subr.mxu0 0.0
    %930 = vmatpush1.msra.mxu0 0.0
    %931 = vmatprep.subr.mxu0 0.0
    %932 = vmatpush1.msra.mxu0 0.0
    %933 = vmatprep.mubr.f32.mxu0 0.0
    %934 = vmatmul.mubr.f32.gmra.mrb[0].mxu0 %v844
    %v935 = vpop.f32.mrb[0].mxu0
    %v936 = vadd.f32 %v867, %v935
    %v937 = vpop.f32.mrb[0].mxu0
    %938 = vmatprep.mubr.f32.mxu0 0.0
    %939 = vmatmul.mubr.f32.gmra.mrb[0].mxu0 %v845
    %v940 = vpop.f32.mrb[0].mxu0
    %v941 = vadd.f32 %v867, %v940
    %v942 = vpop.f32.mrb[0].mxu0
    %943 = vdwg.mxu0
    %v944 = vld [vmem:[%s3] sm:$0x3]
    %vm945 = vcmask 130048
    %v947 = vsel %vm945, %v944, 0
    %949 = vmatprep.subr.mxu0 0.0
    %950 = vmatpush1.msra.mxu0 %v936
    %951 = vmatprep.subr.mxu0 0.0
    %952 = vmatpush1.msra.mxu0 %v941
    %953 = vmatprep.subr.mxu0 0.0
    %954 = vmatpush1.msra.mxu0 0.0
    %955 = vmatprep.subr.mxu0 0.0
    %956 = vmatpush1.msra.mxu0 0.0
    %957 = vmatprep.subr.mxu0 0.0
    %958 = vmatpush1.msra.mxu0 0.0
    %959 = vmatprep.subr.mxu0 0.0
    %960 = vmatpush1.msra.mxu0 0.0
    %961 = vmatprep.subr.mxu0 0.0
    %962 = vmatpush1.msra.mxu0 0.0
    %963 = vmatprep.subr.mxu0 0.0
    %964 = vmatpush1.msra.mxu0 0.0
    %965 = vmatprep.subr.mxu0 0.0
    %966 = vmatpush1.msra.mxu0 0.0
    %967 = vmatprep.subr.mxu0 0.0
    %968 = vmatpush1.msra.mxu0 0.0
    %969 = vmatprep.subr.mxu0 0.0
    %970 = vmatpush1.msra.mxu0 0.0
    %971 = vmatprep.subr.mxu0 0.0
    %972 = vmatpush1.msra.mxu0 0.0
    %973 = vmatprep.subr.mxu0 0.0
    %974 = vmatpush1.msra.mxu0 0.0
    %975 = vmatprep.subr.mxu0 0.0
    %976 = vmatpush1.msra.mxu0 0.0
    %977 = vmatprep.subr.mxu0 0.0
    %978 = vmatpush1.msra.mxu0 0.0
    %979 = vmatprep.subr.mxu0 0.0
    %980 = vmatpush1.msra.mxu0 0.0
    %981 = vmatprep.subr.mxu0 0.0
    %982 = vmatpush1.msra.mxu0 0.0
    %983 = vmatprep.subr.mxu0 0.0
    %984 = vmatpush1.msra.mxu0 0.0
    %985 = vmatprep.subr.mxu0 0.0
    %986 = vmatpush1.msra.mxu0 0.0
    %987 = vmatprep.subr.mxu0 0.0
    %988 = vmatpush1.msra.mxu0 0.0
    %989 = vmatprep.subr.mxu0 0.0
    %990 = vmatpush1.msra.mxu0 0.0
    %991 = vmatprep.subr.mxu0 0.0
    %992 = vmatpush1.msra.mxu0 0.0
    %993 = vmatprep.subr.mxu0 0.0
    %994 = vmatpush1.msra.mxu0 0.0
    %995 = vmatprep.subr.mxu0 0.0
    %996 = vmatpush1.msra.mxu0 0.0
    %997 = vmatprep.subr.mxu0 0.0
    %998 = vmatpush1.msra.mxu0 0.0
    %999 = vmatprep.subr.mxu0 0.0
    %1000 = vmatpush1.msra.mxu0 0.0
    %1001 = vmatprep.subr.mxu0 0.0
    %1002 = vmatpush1.msra.mxu0 0.0
    %1003 = vmatprep.subr.mxu0 0.0
    %1004 = vmatpush1.msra.mxu0 0.0
    %1005 = vmatprep.subr.mxu0 0.0
    %1006 = vmatpush1.msra.mxu0 0.0
    %1007 = vmatprep.subr.mxu0 0.0
    %1008 = vmatpush1.msra.mxu0 0.0
    %1009 = vmatprep.subr.mxu0 0.0
    %1010 = vmatpush1.msra.mxu0 0.0
    %1011 = vmatprep.subr.mxu0 0.0
    %1012 = vmatpush1.msra.mxu0 0.0
    %1013 = vmatprep.mubr.f32.mxu0 0.0
    %1014 = vmatmul.mubr.f32.gmra.mrb[0].mxu0 %v947
    %v1015 = vpop.f32.mrb[0].mxu0
    %v1016 = vadd.f32 0.0, %v1015
    %v1017 = vpop.f32.mrb[0].mxu0
    %1018 = vdwg.mxu0
    %v1019 = vld [vmem:[%s5] sm:$0x3]
    %v1020 = vld [vmem:[#allocation16] sm:$0xff]
    %v1021 = vld [vmem:[#allocation16 + $0x8] sm:$0xff]
    %v1022 = vld [vmem:[#allocation16 + $0x10] sm:$0xff]
    %v1023 = vld [vmem:[#allocation16 + $0x18] sm:$0xff]
    %v1024 = vld [vmem:[#allocation16 + $0x20] sm:$0xff]
    %v1025 = vld [vmem:[#allocation16 + $0x28] sm:$0xff]
    %v1026 = vld [vmem:[#allocation16 + $0x30] sm:$0xff]
    %v1027 = vld [vmem:[#allocation16 + $0x38] sm:$0xff]
    %v1028 = vld [vmem:[#allocation16 + $0x40] sm:$0xff]
    %v1029 = vld [vmem:[#allocation16 + $0x48] sm:$0xff]
    %v1030 = vld [vmem:[#allocation16 + $0x50] sm:$0xff]
    %v1031 = vld [vmem:[#allocation16 + $0x58] sm:$0xff]
    %v1032 = vld [vmem:[#allocation16 + $0x60] sm:$0xff]
    %v1033 = vld [vmem:[#allocation16 + $0x68] sm:$0xff]
    %v1034 = vld [vmem:[#allocation16 + $0x70] sm:$0xff]
    %v1035 = vld [vmem:[#allocation16 + $0x78] sm:$0xff]
    %v1036 = vld [vmem:[#allocation17] sm:$0x3]
    %v1038 = vlaneseq
    %v1039 = vshrl.u32 %v1038, 7
    %v1040 = vsub.s32 0, %v1039
    %v1041 = vrot.slane %v1036, %v1040
    %v1042 = vlaneseq
    %v1043 = vshrl.u32 %v1042, 7
    %v1044 = vsub.s32 1, %v1043
    %v1045 = vrot.slane %v1036, %v1044
    %v1049 = vsel %vm762, %v1019, 0
    %1051 = vmatprep.subr.mxu0 %v1021
    %1052 = vmatpush1.msra.mxu0 %v1020
    %1053 = vmatprep.subr.mxu0 %v1023
    %1054 = vmatpush1.msra.mxu0 %v1022
    %1055 = vmatprep.subr.mxu0 %v1025
    %1056 = vmatpush1.msra.mxu0 %v1024
    %1057 = vmatprep.subr.mxu0 %v1027
    %1058 = vmatpush1.msra.mxu0 %v1026
    %1059 = vmatprep.subr.mxu0 %v1029
    %1060 = vmatpush1.msra.mxu0 %v1028
    %1061 = vmatprep.subr.mxu0 %v1031
    %1062 = vmatpush1.msra.mxu0 %v1030
    %1063 = vmatprep.subr.mxu0 %v1033
    %1064 = vmatpush1.msra.mxu0 %v1032
    %1065 = vmatprep.subr.mxu0 %v1035
    %1066 = vmatpush1.msra.mxu0 %v1034
    %1067 = vmatprep.subr.mxu0 0.0
    %1068 = vmatpush1.msra.mxu0 0.0
    %1069 = vmatprep.subr.mxu0 0.0
    %1070 = vmatpush1.msra.mxu0 0.0
    %1071 = vmatprep.subr.mxu0 0.0
    %1072 = vmatpush1.msra.mxu0 0.0
    %1073 = vmatprep.subr.mxu0 0.0
    %1074 = vmatpush1.msra.mxu0 0.0
    %1075 = vmatprep.subr.mxu0 0.0
    %1076 = vmatpush1.msra.mxu0 0.0
    %1077 = vmatprep.subr.mxu0 0.0
    %1078 = vmatpush1.msra.mxu0 0.0
    %1079 = vmatprep.subr.mxu0 0.0
    %1080 = vmatpush1.msra.mxu0 0.0
    %1081 = vmatprep.subr.mxu0 0.0
    %1082 = vmatpush1.msra.mxu0 0.0
    %1083 = vmatprep.subr.mxu0 0.0
    %1084 = vmatpush1.msra.mxu0 0.0
    %1085 = vmatprep.subr.mxu0 0.0
    %1086 = vmatpush1.msra.mxu0 0.0
    %1087 = vmatprep.subr.mxu0 0.0
    %1088 = vmatpush1.msra.mxu0 0.0
    %1089 = vmatprep.subr.mxu0 0.0
    %1090 = vmatpush1.msra.mxu0 0.0
    %1091 = vmatprep.subr.mxu0 0.0
    %1092 = vmatpush1.msra.mxu0 0.0
    %1093 = vmatprep.subr.mxu0 0.0
    %1094 = vmatpush1.msra.mxu0 0.0
    %1095 = vmatprep.subr.mxu0 0.0
    %1096 = vmatpush1.msra.mxu0 0.0
    %1097 = vmatprep.subr.mxu0 0.0
    %1098 = vmatpush1.msra.mxu0 0.0
    %1099 = vmatprep.subr.mxu0 0.0
    %1100 = vmatpush1.msra.mxu0 0.0
    %1101 = vmatprep.subr.mxu0 0.0
    %1102 = vmatpush1.msra.mxu0 0.0
    %1103 = vmatprep.subr.mxu0 0.0
    %1104 = vmatpush1.msra.mxu0 0.0
    %1105 = vmatprep.subr.mxu0 0.0
    %1106 = vmatpush1.msra.mxu0 0.0
    %1107 = vmatprep.subr.mxu0 0.0
    %1108 = vmatpush1.msra.mxu0 0.0
    %1109 = vmatprep.subr.mxu0 0.0
    %1110 = vmatpush1.msra.mxu0 0.0
    %1111 = vmatprep.subr.mxu0 0.0
    %1112 = vmatpush1.msra.mxu0 0.0
    %1113 = vmatprep.subr.mxu0 0.0
    %1114 = vmatpush1.msra.mxu0 0.0
    %1115 = vmatprep.mubr.f32.mxu0 0.0
    %1116 = vmatmul.mubr.f32.gmra.mrb[0].mxu0 %v1049
    %v1117 = vpop.f32.mrb[0].mxu0
    %v1118 = vadd.f32 %v1041, %v1117
    %v1119 = vpop.f32.mrb[0].mxu0
    %v1120 = vadd.f32 %v1045, %v1119
    %1121 = vdwg.mxu0
    %v1122 = vmax.f32 %v1118, 0.0
    %v1123 = vmax.f32 %v1120, 0.0
    %v1124 = vld [vmem:[%s33] sm:$0xff]
    %v1125 = vld [vmem:[%s33 + $0x8] sm:$0xff]
    %v1126 = vld [vmem:[%s33 + $0x10] sm:$0xff]
    %v1127 = vld [vmem:[%s33 + $0x18] sm:$0xff]
    %v1128 = vld [vmem:[%s33 + $0x20] sm:$0xff]
    %v1129 = vld [vmem:[%s33 + $0x28] sm:$0xff]
    %v1130 = vld [vmem:[%s33 + $0x30] sm:$0xff]
    %v1131 = vld [vmem:[%s33 + $0x38] sm:$0xff]
    %v1132 = vld [vmem:[%s33 + $0x40] sm:$0xff]
    %v1133 = vld [vmem:[%s33 + $0x48] sm:$0xff]
    %v1134 = vld [vmem:[%s33 + $0x50] sm:$0xff]
    %v1135 = vld [vmem:[%s33 + $0x58] sm:$0xff]
    %v1136 = vld [vmem:[%s33 + $0x60] sm:$0xff]
    %v1137 = vld [vmem:[%s33 + $0x68] sm:$0xff]
    %v1138 = vld [vmem:[%s33 + $0x70] sm:$0xff]
    %v1139 = vld [vmem:[%s33 + $0x78] sm:$0xff]
    %v1140 = vld [vmem:[%s33 + $0x80] sm:$0xff]
    %v1141 = vld [vmem:[%s33 + $0x88] sm:$0xff]
    %v1142 = vld [vmem:[%s33 + $0x90] sm:$0xff]
    %v1143 = vld [vmem:[%s33 + $0x98] sm:$0xff]
    %v1144 = vld [vmem:[%s33 + $0xa0] sm:$0xff]
    %v1145 = vld [vmem:[%s33 + $0xa8] sm:$0xff]
    %v1146 = vld [vmem:[%s33 + $0xb0] sm:$0xff]
    %v1147 = vld [vmem:[%s33 + $0xb8] sm:$0xff]
    %v1148 = vld [vmem:[%s33 + $0xc0] sm:$0xff]
    %v1149 = vld [vmem:[%s33 + $0xc8] sm:$0xff]
    %v1150 = vld [vmem:[%s33 + $0xd0] sm:$0xff]
    %v1151 = vld [vmem:[%s33 + $0xd8] sm:$0xff]
    %v1152 = vld [vmem:[%s33 + $0xe0] sm:$0xff]
    %v1153 = vld [vmem:[%s33 + $0xe8] sm:$0xff]
    %v1154 = vld [vmem:[%s33 + $0xf0] sm:$0xff]
    %v1155 = vld [vmem:[%s33 + $0xf8] sm:$0xff]
    %v1156 = vld [vmem:[%s33 + $0x100] sm:$0xff]
    %v1157 = vld [vmem:[%s33 + $0x108] sm:$0xff]
    %v1158 = vld [vmem:[%s33 + $0x110] sm:$0xff]
    %v1159 = vld [vmem:[%s33 + $0x118] sm:$0xff]
    %v1160 = vld [vmem:[%s33 + $0x120] sm:$0xff]
    %v1161 = vld [vmem:[%s33 + $0x128] sm:$0xff]
    %v1162 = vld [vmem:[%s33 + $0x130] sm:$0xff]
    %v1163 = vld [vmem:[%s33 + $0x138] sm:$0xff]
    %v1164 = vld [vmem:[%s33 + $0x140] sm:$0xff]
    %v1165 = vld [vmem:[%s33 + $0x148] sm:$0xff]
    %v1166 = vld [vmem:[%s33 + $0x150] sm:$0xff]
    %v1167 = vld [vmem:[%s33 + $0x158] sm:$0xff]
    %v1168 = vld [vmem:[%s33 + $0x160] sm:$0xff]
    %v1169 = vld [vmem:[%s33 + $0x168] sm:$0xff]
    %v1170 = vld [vmem:[%s33 + $0x170] sm:$0xff]
    %v1171 = vld [vmem:[%s33 + $0x178] sm:$0xff]
    %v1172 = vld [vmem:[%s33 + $0x180] sm:$0xff]
    %v1173 = vld [vmem:[%s33 + $0x188] sm:$0xff]
    %v1174 = vld [vmem:[%s33 + $0x190] sm:$0xff]
    %v1175 = vld [vmem:[%s33 + $0x198] sm:$0xff]
    %v1176 = vld [vmem:[%s33 + $0x1a0] sm:$0xff]
    %v1177 = vld [vmem:[%s33 + $0x1a8] sm:$0xff]
    %v1178 = vld [vmem:[%s33 + $0x1b0] sm:$0xff]
    %v1179 = vld [vmem:[%s33 + $0x1b8] sm:$0xff]
    %v1180 = vld [vmem:[%s33 + $0x1c0] sm:$0xff]
    %v1181 = vld [vmem:[%s33 + $0x1c8] sm:$0xff]
    %v1182 = vld [vmem:[%s33 + $0x1d0] sm:$0xff]
    %v1183 = vld [vmem:[%s33 + $0x1d8] sm:$0xff]
    %v1184 = vld [vmem:[%s33 + $0x1e0] sm:$0xff]
    %v1185 = vld [vmem:[%s33 + $0x1e8] sm:$0xff]
    %v1186 = vld [vmem:[%s33 + $0x1f0] sm:$0xff]
    %v1187 = vld [vmem:[%s33 + $0x1f8] sm:$0xff]
    %v1188 = vld [vmem:[%s33 + $0x200] sm:$0xff]
    %v1189 = vld [vmem:[%s33 + $0x208] sm:$0xff]
    %v1190 = vld [vmem:[%s33 + $0x210] sm:$0xff]
    %v1191 = vld [vmem:[%s33 + $0x218] sm:$0xff]
    %v1192 = vld [vmem:[%s33 + $0x220] sm:$0xff]
    %v1193 = vld [vmem:[%s33 + $0x228] sm:$0xff]
    %v1194 = vld [vmem:[%s33 + $0x230] sm:$0xff]
    %v1195 = vld [vmem:[%s33 + $0x238] sm:$0xff]
    %v1196 = vld [vmem:[%s33 + $0x240] sm:$0xff]
    %v1197 = vld [vmem:[%s33 + $0x248] sm:$0xff]
    %v1198 = vld [vmem:[%s33 + $0x250] sm:$0xff]
    %v1199 = vld [vmem:[%s33 + $0x258] sm:$0xff]
    %v1200 = vld [vmem:[%s33 + $0x260] sm:$0xff]
    %v1201 = vld [vmem:[%s33 + $0x268] sm:$0xff]
    %v1202 = vld [vmem:[%s33 + $0x270] sm:$0xff]
    %v1203 = vld [vmem:[%s33 + $0x278] sm:$0xff]
    %v1204 = vld [vmem:[%s33 + $0x280] sm:$0xff]
    %v1205 = vld [vmem:[%s33 + $0x288] sm:$0xff]
    %v1206 = vld [vmem:[%s33 + $0x290] sm:$0xff]
    %v1207 = vld [vmem:[%s33 + $0x298] sm:$0xff]
    %v1208 = vld [vmem:[%s33 + $0x2a0] sm:$0xff]
    %v1209 = vld [vmem:[%s33 + $0x2a8] sm:$0xff]
    %v1210 = vld [vmem:[%s33 + $0x2b0] sm:$0xff]
    %v1211 = vld [vmem:[%s33 + $0x2b8] sm:$0xff]
    %v1212 = vld [vmem:[%s33 + $0x2c0] sm:$0xff]
    %v1213 = vld [vmem:[%s33 + $0x2c8] sm:$0xff]
    %v1214 = vld [vmem:[%s33 + $0x2d0] sm:$0xff]
    %v1215 = vld [vmem:[%s33 + $0x2d8] sm:$0xff]
    %v1216 = vld [vmem:[%s33 + $0x2e0] sm:$0xff]
    %v1217 = vld [vmem:[%s33 + $0x2e8] sm:$0xff]
    %v1218 = vld [vmem:[%s33 + $0x2f0] sm:$0xff]
    %v1219 = vld [vmem:[%s33 + $0x2f8] sm:$0xff]
    %v1220 = vld [vmem:[%s33 + $0x300] sm:$0xff]
    %v1221 = vld [vmem:[%s33 + $0x308] sm:$0xff]
    %v1222 = vld [vmem:[%s33 + $0x310] sm:$0xff]
    %v1223 = vld [vmem:[%s33 + $0x318] sm:$0xff]
    %v1224 = vld [vmem:[%s33 + $0x320] sm:$0xff]
    %v1225 = vld [vmem:[%s33 + $0x328] sm:$0xff]
    %v1226 = vld [vmem:[%s33 + $0x330] sm:$0xff]
    %v1227 = vld [vmem:[%s33 + $0x338] sm:$0xff]
    %v1228 = vld [vmem:[%s33 + $0x340] sm:$0xff]
    %v1229 = vld [vmem:[%s33 + $0x348] sm:$0xff]
    %v1230 = vld [vmem:[%s33 + $0x350] sm:$0xff]
    %v1231 = vld [vmem:[%s33 + $0x358] sm:$0xff]
    %v1232 = vld [vmem:[%s33 + $0x360] sm:$0xff]
    %v1233 = vld [vmem:[%s33 + $0x368] sm:$0xff]
    %v1234 = vld [vmem:[%s33 + $0x370] sm:$0xff]
    %v1235 = vld [vmem:[%s33 + $0x378] sm:$0xff]
    %v1236 = vld [vmem:[%s33 + $0x380] sm:$0xff]
    %v1237 = vld [vmem:[%s33 + $0x388] sm:$0xff]
    %v1238 = vld [vmem:[%s33 + $0x390] sm:$0xff]
    %v1239 = vld [vmem:[%s33 + $0x398] sm:$0xff]
    %v1240 = vld [vmem:[%s33 + $0x3a0] sm:$0xff]
    %v1241 = vld [vmem:[%s33 + $0x3a8] sm:$0xff]
    %v1242 = vld [vmem:[%s33 + $0x3b0] sm:$0xff]
    %v1243 = vld [vmem:[%s33 + $0x3b8] sm:$0xff]
    %v1244 = vld [vmem:[%s33 + $0x3c0] sm:$0xff]
    %v1245 = vld [vmem:[%s33 + $0x3c8] sm:$0xff]
    %v1246 = vld [vmem:[%s33 + $0x3d0] sm:$0xff]
    %v1247 = vld [vmem:[%s33 + $0x3d8] sm:$0xff]
    %v1248 = vld [vmem:[%s33 + $0x3e0] sm:$0xff]
    %v1249 = vld [vmem:[%s33 + $0x3e8] sm:$0xff]
    %v1250 = vld [vmem:[%s33 + $0x3f0] sm:$0xff]
    %v1251 = vld [vmem:[%s33 + $0x3f8] sm:$0xff]
    %v1252 = vld [vmem:[#allocation19] sm:$0xf]
    %v1254 = vlaneseq
    %v1255 = vshrl.u32 %v1254, 7
    %v1256 = vsub.s32 0, %v1255
    %v1257 = vrot.slane %v1252, %v1256
    %v1258 = vlaneseq
    %v1259 = vshrl.u32 %v1258, 7
    %v1260 = vsub.s32 1, %v1259
    %v1261 = vrot.slane %v1252, %v1260
    %v1262 = vlaneseq
    %v1263 = vshrl.u32 %v1262, 7
    %v1264 = vsub.s32 2, %v1263
    %v1265 = vrot.slane %v1252, %v1264
    %v1266 = vlaneseq
    %v1267 = vshrl.u32 %v1266, 7
    %v1268 = vsub.s32 3, %v1267
    %v1269 = vrot.slane %v1252, %v1268
    %1274 = vmatprep.subr.mxu0 %v1125
    %1275 = vmatpush1.msra.mxu0 %v1124
    %1276 = vmatprep.subr.mxu0 %v1129
    %1277 = vmatpush1.msra.mxu0 %v1128
    %1278 = vmatprep.subr.mxu0 %v1133
    %1279 = vmatpush1.msra.mxu0 %v1132
    %1280 = vmatprep.subr.mxu0 %v1137
    %1281 = vmatpush1.msra.mxu0 %v1136
    %1282 = vmatprep.subr.mxu0 %v1141
    %1283 = vmatpush1.msra.mxu0 %v1140
    %1284 = vmatprep.subr.mxu0 %v1145
    %1285 = vmatpush1.msra.mxu0 %v1144
    %1286 = vmatprep.subr.mxu0 %v1149
    %1287 = vmatpush1.msra.mxu0 %v1148
    %1288 = vmatprep.subr.mxu0 %v1153
    %1289 = vmatpush1.msra.mxu0 %v1152
    %1290 = vmatprep.subr.mxu0 %v1157
    %1291 = vmatpush1.msra.mxu0 %v1156
    %1292 = vmatprep.subr.mxu0 %v1161
    %1293 = vmatpush1.msra.mxu0 %v1160
    %1294 = vmatprep.subr.mxu0 %v1165
    %1295 = vmatpush1.msra.mxu0 %v1164
    %1296 = vmatprep.subr.mxu0 %v1169
    %1297 = vmatpush1.msra.mxu0 %v1168
    %1298 = vmatprep.subr.mxu0 %v1173
    %1299 = vmatpush1.msra.mxu0 %v1172
    %1300 = vmatprep.subr.mxu0 %v1177
    %1301 = vmatpush1.msra.mxu0 %v1176
    %1302 = vmatprep.subr.mxu0 %v1181
    %1303 = vmatpush1.msra.mxu0 %v1180
    %1304 = vmatprep.subr.mxu0 %v1185
    %1305 = vmatpush1.msra.mxu0 %v1184
    %1306 = vmatprep.subr.mxu0 %v1189
    %1307 = vmatpush1.msra.mxu0 %v1188
    %1308 = vmatprep.subr.mxu0 %v1193
    %1309 = vmatpush1.msra.mxu0 %v1192
    %1310 = vmatprep.subr.mxu0 %v1197
    %1311 = vmatpush1.msra.mxu0 %v1196
    %1312 = vmatprep.subr.mxu0 %v1201
    %1313 = vmatpush1.msra.mxu0 %v1200
    %1314 = vmatprep.subr.mxu0 %v1205
    %1315 = vmatpush1.msra.mxu0 %v1204
    %1316 = vmatprep.subr.mxu0 %v1209
    %1317 = vmatpush1.msra.mxu0 %v1208
    %1318 = vmatprep.subr.mxu0 %v1213
    %1319 = vmatpush1.msra.mxu0 %v1212
    %1320 = vmatprep.subr.mxu0 %v1217
    %1321 = vmatpush1.msra.mxu0 %v1216
    %1322 = vmatprep.subr.mxu0 %v1221
    %1323 = vmatpush1.msra.mxu0 %v1220
    %1324 = vmatprep.subr.mxu0 %v1225
    %1325 = vmatpush1.msra.mxu0 %v1224
    %1326 = vmatprep.subr.mxu0 %v1229
    %1327 = vmatpush1.msra.mxu0 %v1228
    %1328 = vmatprep.subr.mxu0 %v1233
    %1329 = vmatpush1.msra.mxu0 %v1232
    %1330 = vmatprep.subr.mxu0 %v1237
    %1331 = vmatpush1.msra.mxu0 %v1236
    %1332 = vmatprep.subr.mxu0 %v1241
    %1333 = vmatpush1.msra.mxu0 %v1240
    %1334 = vmatprep.subr.mxu0 %v1245
    %1335 = vmatpush1.msra.mxu0 %v1244
    %1336 = vmatprep.subr.mxu0 %v1249
    %1337 = vmatpush1.msra.mxu0 %v1248
    %1338 = vmatprep.mubr.f32.mxu0 %v1123
    %1339 = vmatmul.mubr.f32.gmra.mrb[0].mxu0 %v1122
    %v1340 = vpop.f32.mrb[0].mxu0
    %v1341 = vadd.f32 %v1257, %v1340
    %v1342 = vpop.f32.mrb[0].mxu0
    %v1343 = vadd.f32 %v1261, %v1342
    %1344 = vdwg.mxu0
    %1345 = vmatprep.subr.mxu0 %v1127
    %1346 = vmatpush1.msra.mxu0 %v1126
    %1347 = vmatprep.subr.mxu0 %v1131
    %1348 = vmatpush1.msra.mxu0 %v1130
    %1349 = vmatprep.subr.mxu0 %v1135
    %1350 = vmatpush1.msra.mxu0 %v1134
    %1351 = vmatprep.subr.mxu0 %v1139
    %1352 = vmatpush1.msra.mxu0 %v1138
    %1353 = vmatprep.subr.mxu0 %v1143
    %1354 = vmatpush1.msra.mxu0 %v1142
    %1355 = vmatprep.subr.mxu0 %v1147
    %1356 = vmatpush1.msra.mxu0 %v1146
    %1357 = vmatprep.subr.mxu0 %v1151
    %1358 = vmatpush1.msra.mxu0 %v1150
    %1359 = vmatprep.subr.mxu0 %v1155
    %1360 = vmatpush1.msra.mxu0 %v1154
    %1361 = vmatprep.subr.mxu0 %v1159
    %1362 = vmatpush1.msra.mxu0 %v1158
    %1363 = vmatprep.subr.mxu0 %v1163
    %1364 = vmatpush1.msra.mxu0 %v1162
    %1365 = vmatprep.subr.mxu0 %v1167
    %1366 = vmatpush1.msra.mxu0 %v1166
    %1367 = vmatprep.subr.mxu0 %v1171
    %1368 = vmatpush1.msra.mxu0 %v1170
    %1369 = vmatprep.subr.mxu0 %v1175
    %1370 = vmatpush1.msra.mxu0 %v1174
    %1371 = vmatprep.subr.mxu0 %v1179
    %1372 = vmatpush1.msra.mxu0 %v1178
    %1373 = vmatprep.subr.mxu0 %v1183
    %1374 = vmatpush1.msra.mxu0 %v1182
    %1375 = vmatprep.subr.mxu0 %v1187
    %1376 = vmatpush1.msra.mxu0 %v1186
    %1377 = vmatprep.subr.mxu0 %v1191
    %1378 = vmatpush1.msra.mxu0 %v1190
    %1379 = vmatprep.subr.mxu0 %v1195
    %1380 = vmatpush1.msra.mxu0 %v1194
    %1381 = vmatprep.subr.mxu0 %v1199
    %1382 = vmatpush1.msra.mxu0 %v1198
    %1383 = vmatprep.subr.mxu0 %v1203
    %1384 = vmatpush1.msra.mxu0 %v1202
    %1385 = vmatprep.subr.mxu0 %v1207
    %1386 = vmatpush1.msra.mxu0 %v1206
    %1387 = vmatprep.subr.mxu0 %v1211
    %1388 = vmatpush1.msra.mxu0 %v1210
    %1389 = vmatprep.subr.mxu0 %v1215
    %1390 = vmatpush1.msra.mxu0 %v1214
    %1391 = vmatprep.subr.mxu0 %v1219
    %1392 = vmatpush1.msra.mxu0 %v1218
    %1393 = vmatprep.subr.mxu0 %v1223
    %1394 = vmatpush1.msra.mxu0 %v1222
    %1395 = vmatprep.subr.mxu0 %v1227
    %1396 = vmatpush1.msra.mxu0 %v1226
    %1397 = vmatprep.subr.mxu0 %v1231
    %1398 = vmatpush1.msra.mxu0 %v1230
    %1399 = vmatprep.subr.mxu0 %v1235
    %1400 = vmatpush1.msra.mxu0 %v1234
    %1401 = vmatprep.subr.mxu0 %v1239
    %1402 = vmatpush1.msra.mxu0 %v1238
    %1403 = vmatprep.subr.mxu0 %v1243
    %1404 = vmatpush1.msra.mxu0 %v1242
    %1405 = vmatprep.subr.mxu0 %v1247
    %1406 = vmatpush1.msra.mxu0 %v1246
    %1407 = vmatprep.subr.mxu0 %v1251
    %1408 = vmatpush1.msra.mxu0 %v1250
    %1409 = vmatprep.mubr.f32.mxu0 %v1123
    %1410 = vmatmul.mubr.f32.gmra.mrb[0].mxu0 %v1122
    %v1411 = vpop.f32.mrb[0].mxu0
    %v1412 = vadd.f32 %v1265, %v1411
    %v1413 = vpop.f32.mrb[0].mxu0
    %v1414 = vadd.f32 %v1269, %v1413
    %1415 = vdwg.mxu0
    %v1416 = vmax.f32 %v1341, 0.0
    %v1417 = vmax.f32 %v1343, 0.0
    %v1418 = vmax.f32 %v1412, 0.0
    %v1419 = vmax.f32 %v1414, 0.0
    %v1420 = vld [vmem:[%s37] sm:$0xff]
    %v1421 = vld [vmem:[%s37 + $0x8] sm:$0xff]
    %v1422 = vld [vmem:[%s37 + $0x10] sm:$0xff]
    %v1423 = vld [vmem:[%s37 + $0x18] sm:$0xff]
    %v1424 = vld [vmem:[%s37 + $0x20] sm:$0xff]
    %v1425 = vld [vmem:[%s37 + $0x28] sm:$0xff]
    %v1426 = vld [vmem:[%s37 + $0x30] sm:$0xff]
    %v1427 = vld [vmem:[%s37 + $0x38] sm:$0xff]
    %v1428 = vld [vmem:[%s37 + $0x40] sm:$0xff]
    %v1429 = vld [vmem:[%s37 + $0x48] sm:$0xff]
    %v1430 = vld [vmem:[%s37 + $0x50] sm:$0xff]
    %v1431 = vld [vmem:[%s37 + $0x58] sm:$0xff]
    %v1432 = vld [vmem:[%s37 + $0x60] sm:$0xff]
    %v1433 = vld [vmem:[%s37 + $0x68] sm:$0xff]
    %v1434 = vld [vmem:[%s37 + $0x70] sm:$0xff]
    %v1435 = vld [vmem:[%s37 + $0x78] sm:$0xff]
    %v1436 = vld [vmem:[%s37 + $0x80] sm:$0xff]
    %v1437 = vld [vmem:[%s37 + $0x88] sm:$0xff]
    %v1438 = vld [vmem:[%s37 + $0x90] sm:$0xff]
    %v1439 = vld [vmem:[%s37 + $0x98] sm:$0xff]
    %v1440 = vld [vmem:[%s37 + $0xa0] sm:$0xff]
    %v1441 = vld [vmem:[%s37 + $0xa8] sm:$0xff]
    %v1442 = vld [vmem:[%s37 + $0xb0] sm:$0xff]
    %v1443 = vld [vmem:[%s37 + $0xb8] sm:$0xff]
    %v1444 = vld [vmem:[%s37 + $0xc0] sm:$0xff]
    %v1445 = vld [vmem:[%s37 + $0xc8] sm:$0xff]
    %v1446 = vld [vmem:[%s37 + $0xd0] sm:$0xff]
    %v1447 = vld [vmem:[%s37 + $0xd8] sm:$0xff]
    %v1448 = vld [vmem:[%s37 + $0xe0] sm:$0xff]
    %v1449 = vld [vmem:[%s37 + $0xe8] sm:$0xff]
    %v1450 = vld [vmem:[%s37 + $0xf0] sm:$0xff]
    %v1451 = vld [vmem:[%s37 + $0xf8] sm:$0xff]
    %v1452 = vld [vmem:[%s37 + $0x100] sm:$0xff]
    %v1453 = vld [vmem:[%s37 + $0x108] sm:$0xff]
    %v1454 = vld [vmem:[%s37 + $0x110] sm:$0xff]
    %v1455 = vld [vmem:[%s37 + $0x118] sm:$0xff]
    %v1456 = vld [vmem:[%s37 + $0x120] sm:$0xff]
    %v1457 = vld [vmem:[%s37 + $0x128] sm:$0xff]
    %v1458 = vld [vmem:[%s37 + $0x130] sm:$0xff]
    %v1459 = vld [vmem:[%s37 + $0x138] sm:$0xff]
    %v1460 = vld [vmem:[%s37 + $0x140] sm:$0xff]
    %v1461 = vld [vmem:[%s37 + $0x148] sm:$0xff]
    %v1462 = vld [vmem:[%s37 + $0x150] sm:$0xff]
    %v1463 = vld [vmem:[%s37 + $0x158] sm:$0xff]
    %v1464 = vld [vmem:[%s37 + $0x160] sm:$0xff]
    %v1465 = vld [vmem:[%s37 + $0x168] sm:$0xff]
    %v1466 = vld [vmem:[%s37 + $0x170] sm:$0xff]
    %v1467 = vld [vmem:[%s37 + $0x178] sm:$0xff]
    %v1468 = vld [vmem:[%s37 + $0x180] sm:$0xff]
    %v1469 = vld [vmem:[%s37 + $0x188] sm:$0xff]
    %v1470 = vld [vmem:[%s37 + $0x190] sm:$0xff]
    %v1471 = vld [vmem:[%s37 + $0x198] sm:$0xff]
    %v1472 = vld [vmem:[%s37 + $0x1a0] sm:$0xff]
    %v1473 = vld [vmem:[%s37 + $0x1a8] sm:$0xff]
    %v1474 = vld [vmem:[%s37 + $0x1b0] sm:$0xff]
    %v1475 = vld [vmem:[%s37 + $0x1b8] sm:$0xff]
    %v1476 = vld [vmem:[%s37 + $0x1c0] sm:$0xff]
    %v1477 = vld [vmem:[%s37 + $0x1c8] sm:$0xff]
    %v1478 = vld [vmem:[%s37 + $0x1d0] sm:$0xff]
    %v1479 = vld [vmem:[%s37 + $0x1d8] sm:$0xff]
    %v1480 = vld [vmem:[%s37 + $0x1e0] sm:$0xff]
    %v1481 = vld [vmem:[%s37 + $0x1e8] sm:$0xff]
    %v1482 = vld [vmem:[%s37 + $0x1f0] sm:$0xff]
    %v1483 = vld [vmem:[%s37 + $0x1f8] sm:$0xff]
    %v1484 = vld [vmem:[#allocation20] sm:$0x1]
    %v1486 = vlaneseq
    %v1487 = vshrl.u32 %v1486, 7
    %v1488 = vsub.s32 0, %v1487
    %v1489 = vrot.slane %v1484, %v1488
    %1491 = vmatprep.subr.mxu0 0.0
    %1492 = vmatpush1.msra.mxu0 %v1420
    %1493 = vmatprep.subr.mxu0 0.0
    %1494 = vmatpush1.msra.mxu0 %v1421
    %1495 = vmatprep.subr.mxu0 0.0
    %1496 = vmatpush1.msra.mxu0 %v1422
    %1497 = vmatprep.subr.mxu0 0.0
    %1498 = vmatpush1.msra.mxu0 %v1423
    %1499 = vmatprep.subr.mxu0 0.0
    %1500 = vmatpush1.msra.mxu0 %v1424
    %1501 = vmatprep.subr.mxu0 0.0
    %1502 = vmatpush1.msra.mxu0 %v1425
    %1503 = vmatprep.subr.mxu0 0.0
    %1504 = vmatpush1.msra.mxu0 %v1426
    %1505 = vmatprep.subr.mxu0 0.0
    %1506 = vmatpush1.msra.mxu0 %v1427
    %1507 = vmatprep.subr.mxu0 0.0
    %1508 = vmatpush1.msra.mxu0 %v1428
    %1509 = vmatprep.subr.mxu0 0.0
    %1510 = vmatpush1.msra.mxu0 %v1429
    %1511 = vmatprep.subr.mxu0 0.0
    %1512 = vmatpush1.msra.mxu0 %v1430
    %1513 = vmatprep.subr.mxu0 0.0
    %1514 = vmatpush1.msra.mxu0 %v1431
    %1515 = vmatprep.subr.mxu0 0.0
    %1516 = vmatpush1.msra.mxu0 %v1432
    %1517 = vmatprep.subr.mxu0 0.0
    %1518 = vmatpush1.msra.mxu0 %v1433
    %1519 = vmatprep.subr.mxu0 0.0
    %1520 = vmatpush1.msra.mxu0 %v1434
    %1521 = vmatprep.subr.mxu0 0.0
    %1522 = vmatpush1.msra.mxu0 %v1435
    %1523 = vmatprep.subr.mxu0 0.0
    %1524 = vmatpush1.msra.mxu0 %v1436
    %1525 = vmatprep.subr.mxu0 0.0
    %1526 = vmatpush1.msra.mxu0 %v1437
    %1527 = vmatprep.subr.mxu0 0.0
    %1528 = vmatpush1.msra.mxu0 %v1438
    %1529 = vmatprep.subr.mxu0 0.0
    %1530 = vmatpush1.msra.mxu0 %v1439
    %1531 = vmatprep.subr.mxu0 0.0
    %1532 = vmatpush1.msra.mxu0 %v1440
    %1533 = vmatprep.subr.mxu0 0.0
    %1534 = vmatpush1.msra.mxu0 %v1441
    %1535 = vmatprep.subr.mxu0 0.0
    %1536 = vmatpush1.msra.mxu0 %v1442
    %1537 = vmatprep.subr.mxu0 0.0
    %1538 = vmatpush1.msra.mxu0 %v1443
    %1539 = vmatprep.subr.mxu0 0.0
    %1540 = vmatpush1.msra.mxu0 %v1444
    %1541 = vmatprep.subr.mxu0 0.0
    %1542 = vmatpush1.msra.mxu0 %v1445
    %1543 = vmatprep.subr.mxu0 0.0
    %1544 = vmatpush1.msra.mxu0 %v1446
    %1545 = vmatprep.subr.mxu0 0.0
    %1546 = vmatpush1.msra.mxu0 %v1447
    %1547 = vmatprep.subr.mxu0 0.0
    %1548 = vmatpush1.msra.mxu0 %v1448
    %1549 = vmatprep.subr.mxu0 0.0
    %1550 = vmatpush1.msra.mxu0 %v1449
    %1551 = vmatprep.subr.mxu0 0.0
    %1552 = vmatpush1.msra.mxu0 %v1450
    %1553 = vmatprep.subr.mxu0 0.0
    %1554 = vmatpush1.msra.mxu0 %v1451
    %1555 = vmatprep.mubr.f32.mxu0 %v1417
    %1556 = vmatmul.mubr.f32.gmra.mrb[0].mxu0 %v1416
    %v1557 = vpop.f32.mrb[0].mxu0
    %v1558 = vadd.f32 %v1489, %v1557
    %v1559 = vpop.f32.mrb[0].mxu0
    %1560 = vdwg.mxu0
    %1561 = vmatprep.subr.mxu0 0.0
    %1562 = vmatpush1.msra.mxu0 %v1452
    %1563 = vmatprep.subr.mxu0 0.0
    %1564 = vmatpush1.msra.mxu0 %v1453
    %1565 = vmatprep.subr.mxu0 0.0
    %1566 = vmatpush1.msra.mxu0 %v1454
    %1567 = vmatprep.subr.mxu0 0.0
    %1568 = vmatpush1.msra.mxu0 %v1455
    %1569 = vmatprep.subr.mxu0 0.0
    %1570 = vmatpush1.msra.mxu0 %v1456
    %1571 = vmatprep.subr.mxu0 0.0
    %1572 = vmatpush1.msra.mxu0 %v1457
    %1573 = vmatprep.subr.mxu0 0.0
    %1574 = vmatpush1.msra.mxu0 %v1458
    %1575 = vmatprep.subr.mxu0 0.0
    %1576 = vmatpush1.msra.mxu0 %v1459
    %1577 = vmatprep.subr.mxu0 0.0
    %1578 = vmatpush1.msra.mxu0 %v1460
    %1579 = vmatprep.subr.mxu0 0.0
    %1580 = vmatpush1.msra.mxu0 %v1461
    %1581 = vmatprep.subr.mxu0 0.0
    %1582 = vmatpush1.msra.mxu0 %v1462
    %1583 = vmatprep.subr.mxu0 0.0
    %1584 = vmatpush1.msra.mxu0 %v1463
    %1585 = vmatprep.subr.mxu0 0.0
    %1586 = vmatpush1.msra.mxu0 %v1464
    %1587 = vmatprep.subr.mxu0 0.0
    %1588 = vmatpush1.msra.mxu0 %v1465
    %1589 = vmatprep.subr.mxu0 0.0
    %1590 = vmatpush1.msra.mxu0 %v1466
    %1591 = vmatprep.subr.mxu0 0.0
    %1592 = vmatpush1.msra.mxu0 %v1467
    %1593 = vmatprep.subr.mxu0 0.0
    %1594 = vmatpush1.msra.mxu0 %v1468
    %1595 = vmatprep.subr.mxu0 0.0
    %1596 = vmatpush1.msra.mxu0 %v1469
    %1597 = vmatprep.subr.mxu0 0.0
    %1598 = vmatpush1.msra.mxu0 %v1470
    %1599 = vmatprep.subr.mxu0 0.0
    %1600 = vmatpush1.msra.mxu0 %v1471
    %1601 = vmatprep.subr.mxu0 0.0
    %1602 = vmatpush1.msra.mxu0 %v1472
    %1603 = vmatprep.subr.mxu0 0.0
    %1604 = vmatpush1.msra.mxu0 %v1473
    %1605 = vmatprep.subr.mxu0 0.0
    %1606 = vmatpush1.msra.mxu0 %v1474
    %1607 = vmatprep.subr.mxu0 0.0
    %1608 = vmatpush1.msra.mxu0 %v1475
    %1609 = vmatprep.subr.mxu0 0.0
    %1610 = vmatpush1.msra.mxu0 %v1476
    %1611 = vmatprep.subr.mxu0 0.0
    %1612 = vmatpush1.msra.mxu0 %v1477
    %1613 = vmatprep.subr.mxu0 0.0
    %1614 = vmatpush1.msra.mxu0 %v1478
    %1615 = vmatprep.subr.mxu0 0.0
    %1616 = vmatpush1.msra.mxu0 %v1479
    %1617 = vmatprep.subr.mxu0 0.0
    %1618 = vmatpush1.msra.mxu0 %v1480
    %1619 = vmatprep.subr.mxu0 0.0
    %1620 = vmatpush1.msra.mxu0 %v1481
    %1621 = vmatprep.subr.mxu0 0.0
    %1622 = vmatpush1.msra.mxu0 %v1482
    %1623 = vmatprep.subr.mxu0 0.0
    %1624 = vmatpush1.msra.mxu0 %v1483
    %1625 = vmatprep.mubr.f32.mxu0 %v1419
    %1626 = vmatmul.mubr.f32.gmra.mrb[0].mxu0 %v1418
    %v1627 = vpop.f32.mrb[0].mxu0
    %v1628 = vadd.f32 %v1558, %v1627
    %v1629 = vpop.f32.mrb[0].mxu0
    %1630 = vdwg.mxu0
    %v1631 = vld [vmem:[%s7] sm:$0x3]
    %v1632 = vld [vmem:[%s41] sm:$0xff]
    %v1633 = vld [vmem:[%s41 + $0x8] sm:$0xff]
    %v1634 = vld [vmem:[%s41 + $0x10] sm:$0xff]
    %v1635 = vld [vmem:[%s41 + $0x18] sm:$0xff]
    %v1636 = vld [vmem:[%s41 + $0x20] sm:$0xff]
    %v1637 = vld [vmem:[%s41 + $0x28] sm:$0xff]
    %v1638 = vld [vmem:[%s41 + $0x30] sm:$0xff]
    %v1639 = vld [vmem:[%s41 + $0x38] sm:$0xff]
    %v1640 = vld [vmem:[%s41 + $0x40] sm:$0xff]
    %v1641 = vld [vmem:[%s41 + $0x48] sm:$0xff]
    %v1642 = vld [vmem:[%s41 + $0x50] sm:$0xff]
    %v1643 = vld [vmem:[%s41 + $0x58] sm:$0xff]
    %v1644 = vld [vmem:[%s41 + $0x60] sm:$0xff]
    %v1645 = vld [vmem:[%s41 + $0x68] sm:$0xff]
    %v1646 = vld [vmem:[%s41 + $0x70] sm:$0xff]
    %v1647 = vld [vmem:[%s41 + $0x78] sm:$0xff]
    %v1648 = vld [vmem:[%s41 + $0x80] sm:$0xff]
    %v1649 = vld [vmem:[%s41 + $0x88] sm:$0xff]
    %v1650 = vld [vmem:[%s41 + $0x90] sm:$0xff]
    %v1651 = vld [vmem:[%s41 + $0x98] sm:$0xff]
    %v1652 = vld [vmem:[%s41 + $0xa0] sm:$0xff]
    %v1653 = vld [vmem:[%s41 + $0xa8] sm:$0xff]
    %v1654 = vld [vmem:[%s41 + $0xb0] sm:$0xff]
    %v1655 = vld [vmem:[%s41 + $0xb8] sm:$0xff]
    %v1656 = vld [vmem:[%s41 + $0xc0] sm:$0xff]
    %v1657 = vld [vmem:[%s41 + $0xc8] sm:$0xff]
    %v1658 = vld [vmem:[%s41 + $0xd0] sm:$0xff]
    %v1659 = vld [vmem:[%s41 + $0xd8] sm:$0xff]
    %v1660 = vld [vmem:[%s41 + $0xe0] sm:$0xff]
    %v1661 = vld [vmem:[%s41 + $0xe8] sm:$0xff]
    %v1662 = vld [vmem:[%s41 + $0xf0] sm:$0xff]
    %v1663 = vld [vmem:[%s41 + $0xf8] sm:$0xff]
    %v1664 = vld [vmem:[#allocation22] sm:$0x3]
    %v1666 = vlaneseq
    %v1667 = vshrl.u32 %v1666, 7
    %v1668 = vsub.s32 0, %v1667
    %v1669 = vrot.slane %v1664, %v1668
    %v1670 = vlaneseq
    %v1671 = vshrl.u32 %v1670, 7
    %v1672 = vsub.s32 1, %v1671
    %v1673 = vrot.slane %v1664, %v1672
    %1676 = vmatprep.subr.mxu0 %v1633
    %1677 = vmatpush1.msra.mxu0 %v1632
    %1678 = vmatprep.subr.mxu0 %v1635
    %1679 = vmatpush1.msra.mxu0 %v1634
    %1680 = vmatprep.subr.mxu0 %v1637
    %1681 = vmatpush1.msra.mxu0 %v1636
    %1682 = vmatprep.subr.mxu0 %v1639
    %1683 = vmatpush1.msra.mxu0 %v1638
    %1684 = vmatprep.subr.mxu0 %v1641
    %1685 = vmatpush1.msra.mxu0 %v1640
    %1686 = vmatprep.subr.mxu0 %v1643
    %1687 = vmatpush1.msra.mxu0 %v1642
    %1688 = vmatprep.subr.mxu0 %v1645
    %1689 = vmatpush1.msra.mxu0 %v1644
    %1690 = vmatprep.subr.mxu0 %v1647
    %1691 = vmatpush1.msra.mxu0 %v1646
    %1692 = vmatprep.subr.mxu0 %v1649
    %1693 = vmatpush1.msra.mxu0 %v1648
    %1694 = vmatprep.subr.mxu0 %v1651
    %1695 = vmatpush1.msra.mxu0 %v1650
    %1696 = vmatprep.subr.mxu0 %v1653
    %1697 = vmatpush1.msra.mxu0 %v1652
    %1698 = vmatprep.subr.mxu0 %v1655
    %1699 = vmatpush1.msra.mxu0 %v1654
    %1700 = vmatprep.subr.mxu0 %v1657
    %1701 = vmatpush1.msra.mxu0 %v1656
    %1702 = vmatprep.subr.mxu0 %v1659
    %1703 = vmatpush1.msra.mxu0 %v1658
    %1704 = vmatprep.subr.mxu0 %v1661
    %1705 = vmatpush1.msra.mxu0 %v1660
    %1706 = vmatprep.subr.mxu0 %v1663
    %1707 = vmatpush1.msra.mxu0 %v1662
    %1708 = vmatprep.subr.mxu0 0.0
    %1709 = vmatpush1.msra.mxu0 0.0
    %1710 = vmatprep.subr.mxu0 0.0
    %1711 = vmatpush1.msra.mxu0 0.0
    %1712 = vmatprep.subr.mxu0 0.0
    %1713 = vmatpush1.msra.mxu0 0.0
    %1714 = vmatprep.subr.mxu0 0.0
    %1715 = vmatpush1.msra.mxu0 0.0
    %1716 = vmatprep.subr.mxu0 0.0
    %1717 = vmatpush1.msra.mxu0 0.0
    %1718 = vmatprep.subr.mxu0 0.0
    %1719 = vmatpush1.msra.mxu0 0.0
    %1720 = vmatprep.subr.mxu0 0.0
    %1721 = vmatpush1.msra.mxu0 0.0
    %1722 = vmatprep.subr.mxu0 0.0
    %1723 = vmatpush1.msra.mxu0 0.0
    %1724 = vmatprep.subr.mxu0 0.0
    %1725 = vmatpush1.msra.mxu0 0.0
    %1726 = vmatprep.subr.mxu0 0.0
    %1727 = vmatpush1.msra.mxu0 0.0
    %1728 = vmatprep.subr.mxu0 0.0
    %1729 = vmatpush1.msra.mxu0 0.0
    %1730 = vmatprep.subr.mxu0 0.0
    %1731 = vmatpush1.msra.mxu0 0.0
    %1732 = vmatprep.subr.mxu0 0.0
    %1733 = vmatpush1.msra.mxu0 0.0
    %1734 = vmatprep.subr.mxu0 0.0
    %1735 = vmatpush1.msra.mxu0 0.0
    %1736 = vmatprep.subr.mxu0 0.0
    %1737 = vmatpush1.msra.mxu0 0.0
    %1738 = vmatprep.subr.mxu0 0.0
    %1739 = vmatpush1.msra.mxu0 0.0
    %1740 = vmatprep.mubr.f32.mxu0 0.0
    %1741 = vmatmul.mubr.f32.gmra.mrb[0].mxu0 %v1631
    %v1742 = vpop.f32.mrb[0].mxu0
    %v1743 = vadd.f32 %v1669, %v1742
    %v1744 = vpop.f32.mrb[0].mxu0
    %v1745 = vadd.f32 %v1673, %v1744
    %1746 = vdwg.mxu0
    %v1747 = vmax.f32 %v1743, 0.0
    %v1748 = vmax.f32 %v1745, 0.0
    %v1749 = vld [vmem:[%s45] sm:$0xff]
    %v1750 = vld [vmem:[%s45 + $0x8] sm:$0xff]
    %v1751 = vld [vmem:[%s45 + $0x10] sm:$0xff]
    %v1752 = vld [vmem:[%s45 + $0x18] sm:$0xff]
    %v1753 = vld [vmem:[%s45 + $0x20] sm:$0xff]
    %v1754 = vld [vmem:[%s45 + $0x28] sm:$0xff]
    %v1755 = vld [vmem:[%s45 + $0x30] sm:$0xff]
    %v1756 = vld [vmem:[%s45 + $0x38] sm:$0xff]
    %v1757 = vld [vmem:[%s45 + $0x40] sm:$0xff]
    %v1758 = vld [vmem:[%s45 + $0x48] sm:$0xff]
    %v1759 = vld [vmem:[%s45 + $0x50] sm:$0xff]
    %v1760 = vld [vmem:[%s45 + $0x58] sm:$0xff]
    %v1761 = vld [vmem:[%s45 + $0x60] sm:$0xff]
    %v1762 = vld [vmem:[%s45 + $0x68] sm:$0xff]
    %v1763 = vld [vmem:[%s45 + $0x70] sm:$0xff]
    %v1764 = vld [vmem:[%s45 + $0x78] sm:$0xff]
    %v1765 = vld [vmem:[%s45 + $0x80] sm:$0xff]
    %v1766 = vld [vmem:[%s45 + $0x88] sm:$0xff]
    %v1767 = vld [vmem:[%s45 + $0x90] sm:$0xff]
    %v1768 = vld [vmem:[%s45 + $0x98] sm:$0xff]
    %v1769 = vld [vmem:[%s45 + $0xa0] sm:$0xff]
    %v1770 = vld [vmem:[%s45 + $0xa8] sm:$0xff]
    %v1771 = vld [vmem:[%s45 + $0xb0] sm:$0xff]
    %v1772 = vld [vmem:[%s45 + $0xb8] sm:$0xff]
    %v1773 = vld [vmem:[%s45 + $0xc0] sm:$0xff]
    %v1774 = vld [vmem:[%s45 + $0xc8] sm:$0xff]
    %v1775 = vld [vmem:[%s45 + $0xd0] sm:$0xff]
    %v1776 = vld [vmem:[%s45 + $0xd8] sm:$0xff]
    %v1777 = vld [vmem:[%s45 + $0xe0] sm:$0xff]
    %v1778 = vld [vmem:[%s45 + $0xe8] sm:$0xff]
    %v1779 = vld [vmem:[%s45 + $0xf0] sm:$0xff]
    %v1780 = vld [vmem:[%s45 + $0xf8] sm:$0xff]
    %v1781 = vld [vmem:[%s45 + $0x100] sm:$0xff]
    %v1782 = vld [vmem:[%s45 + $0x108] sm:$0xff]
    %v1783 = vld [vmem:[%s45 + $0x110] sm:$0xff]
    %v1784 = vld [vmem:[%s45 + $0x118] sm:$0xff]
    %v1785 = vld [vmem:[%s45 + $0x120] sm:$0xff]
    %v1786 = vld [vmem:[%s45 + $0x128] sm:$0xff]
    %v1787 = vld [vmem:[%s45 + $0x130] sm:$0xff]
    %v1788 = vld [vmem:[%s45 + $0x138] sm:$0xff]
    %v1789 = vld [vmem:[%s45 + $0x140] sm:$0xff]
    %v1790 = vld [vmem:[%s45 + $0x148] sm:$0xff]
    %v1791 = vld [vmem:[%s45 + $0x150] sm:$0xff]
    %v1792 = vld [vmem:[%s45 + $0x158] sm:$0xff]
    %v1793 = vld [vmem:[%s45 + $0x160] sm:$0xff]
    %v1794 = vld [vmem:[%s45 + $0x168] sm:$0xff]
    %v1795 = vld [vmem:[%s45 + $0x170] sm:$0xff]
    %v1796 = vld [vmem:[%s45 + $0x178] sm:$0xff]
    %v1797 = vld [vmem:[%s45 + $0x180] sm:$0xff]
    %v1798 = vld [vmem:[%s45 + $0x188] sm:$0xff]
    %v1799 = vld [vmem:[%s45 + $0x190] sm:$0xff]
    %v1800 = vld [vmem:[%s45 + $0x198] sm:$0xff]
    %v1801 = vld [vmem:[%s45 + $0x1a0] sm:$0xff]
    %v1802 = vld [vmem:[%s45 + $0x1a8] sm:$0xff]
    %v1803 = vld [vmem:[%s45 + $0x1b0] sm:$0xff]
    %v1804 = vld [vmem:[%s45 + $0x1b8] sm:$0xff]
    %v1805 = vld [vmem:[%s45 + $0x1c0] sm:$0xff]
    %v1806 = vld [vmem:[%s45 + $0x1c8] sm:$0xff]
    %v1807 = vld [vmem:[%s45 + $0x1d0] sm:$0xff]
    %v1808 = vld [vmem:[%s45 + $0x1d8] sm:$0xff]
    %v1809 = vld [vmem:[%s45 + $0x1e0] sm:$0xff]
    %v1810 = vld [vmem:[%s45 + $0x1e8] sm:$0xff]
    %v1811 = vld [vmem:[%s45 + $0x1f0] sm:$0xff]
    %v1812 = vld [vmem:[%s45 + $0x1f8] sm:$0xff]
    %v1813 = vld [vmem:[%s45 + $0x200] sm:$0xff]
    %v1814 = vld [vmem:[%s45 + $0x208] sm:$0xff]
    %v1815 = vld [vmem:[%s45 + $0x210] sm:$0xff]
    %v1816 = vld [vmem:[%s45 + $0x218] sm:$0xff]
    %v1817 = vld [vmem:[%s45 + $0x220] sm:$0xff]
    %v1818 = vld [vmem:[%s45 + $0x228] sm:$0xff]
    %v1819 = vld [vmem:[%s45 + $0x230] sm:$0xff]
    %v1820 = vld [vmem:[%s45 + $0x238] sm:$0xff]
    %v1821 = vld [vmem:[%s45 + $0x240] sm:$0xff]
    %v1822 = vld [vmem:[%s45 + $0x248] sm:$0xff]
    %v1823 = vld [vmem:[%s45 + $0x250] sm:$0xff]
    %v1824 = vld [vmem:[%s45 + $0x258] sm:$0xff]
    %v1825 = vld [vmem:[%s45 + $0x260] sm:$0xff]
    %v1826 = vld [vmem:[%s45 + $0x268] sm:$0xff]
    %v1827 = vld [vmem:[%s45 + $0x270] sm:$0xff]
    %v1828 = vld [vmem:[%s45 + $0x278] sm:$0xff]
    %v1829 = vld [vmem:[%s45 + $0x280] sm:$0xff]
    %v1830 = vld [vmem:[%s45 + $0x288] sm:$0xff]
    %v1831 = vld [vmem:[%s45 + $0x290] sm:$0xff]
    %v1832 = vld [vmem:[%s45 + $0x298] sm:$0xff]
    %v1833 = vld [vmem:[%s45 + $0x2a0] sm:$0xff]
    %v1834 = vld [vmem:[%s45 + $0x2a8] sm:$0xff]
    %v1835 = vld [vmem:[%s45 + $0x2b0] sm:$0xff]
    %v1836 = vld [vmem:[%s45 + $0x2b8] sm:$0xff]
    %v1837 = vld [vmem:[%s45 + $0x2c0] sm:$0xff]
    %v1838 = vld [vmem:[%s45 + $0x2c8] sm:$0xff]
    %v1839 = vld [vmem:[%s45 + $0x2d0] sm:$0xff]
    %v1840 = vld [vmem:[%s45 + $0x2d8] sm:$0xff]
    %v1841 = vld [vmem:[%s45 + $0x2e0] sm:$0xff]
    %v1842 = vld [vmem:[%s45 + $0x2e8] sm:$0xff]
    %v1843 = vld [vmem:[%s45 + $0x2f0] sm:$0xff]
    %v1844 = vld [vmem:[%s45 + $0x2f8] sm:$0xff]
    %v1845 = vld [vmem:[%s45 + $0x300] sm:$0xff]
    %v1846 = vld [vmem:[%s45 + $0x308] sm:$0xff]
    %v1847 = vld [vmem:[%s45 + $0x310] sm:$0xff]
    %v1848 = vld [vmem:[%s45 + $0x318] sm:$0xff]
    %v1849 = vld [vmem:[%s45 + $0x320] sm:$0xff]
    %v1850 = vld [vmem:[%s45 + $0x328] sm:$0xff]
    %v1851 = vld [vmem:[%s45 + $0x330] sm:$0xff]
    %v1852 = vld [vmem:[%s45 + $0x338] sm:$0xff]
    %v1853 = vld [vmem:[%s45 + $0x340] sm:$0xff]
    %v1854 = vld [vmem:[%s45 + $0x348] sm:$0xff]
    %v1855 = vld [vmem:[%s45 + $0x350] sm:$0xff]
    %v1856 = vld [vmem:[%s45 + $0x358] sm:$0xff]
    %v1857 = vld [vmem:[%s45 + $0x360] sm:$0xff]
    %v1858 = vld [vmem:[%s45 + $0x368] sm:$0xff]
    %v1859 = vld [vmem:[%s45 + $0x370] sm:$0xff]
    %v1860 = vld [vmem:[%s45 + $0x378] sm:$0xff]
    %v1861 = vld [vmem:[%s45 + $0x380] sm:$0xff]
    %v1862 = vld [vmem:[%s45 + $0x388] sm:$0xff]
    %v1863 = vld [vmem:[%s45 + $0x390] sm:$0xff]
    %v1864 = vld [vmem:[%s45 + $0x398] sm:$0xff]
    %v1865 = vld [vmem:[%s45 + $0x3a0] sm:$0xff]
    %v1866 = vld [vmem:[%s45 + $0x3a8] sm:$0xff]
    %v1867 = vld [vmem:[%s45 + $0x3b0] sm:$0xff]
    %v1868 = vld [vmem:[%s45 + $0x3b8] sm:$0xff]
    %v1869 = vld [vmem:[%s45 + $0x3c0] sm:$0xff]
    %v1870 = vld [vmem:[%s45 + $0x3c8] sm:$0xff]
    %v1871 = vld [vmem:[%s45 + $0x3d0] sm:$0xff]
    %v1872 = vld [vmem:[%s45 + $0x3d8] sm:$0xff]
    %v1873 = vld [vmem:[%s45 + $0x3e0] sm:$0xff]
    %v1874 = vld [vmem:[%s45 + $0x3e8] sm:$0xff]
    %v1875 = vld [vmem:[%s45 + $0x3f0] sm:$0xff]
    %v1876 = vld [vmem:[%s45 + $0x3f8] sm:$0xff]
    %v1877 = vld [vmem:[#allocation23] sm:$0xf]
    %v1879 = vlaneseq
    %v1880 = vshrl.u32 %v1879, 7
    %v1881 = vsub.s32 0, %v1880
    %v1882 = vrot.slane %v1877, %v1881
    %v1883 = vlaneseq
    %v1884 = vshrl.u32 %v1883, 7
    %v1885 = vsub.s32 1, %v1884
    %v1886 = vrot.slane %v1877, %v1885
    %v1887 = vlaneseq
    %v1888 = vshrl.u32 %v1887, 7
    %v1889 = vsub.s32 2, %v1888
    %v1890 = vrot.slane %v1877, %v1889
    %v1891 = vlaneseq
    %v1892 = vshrl.u32 %v1891, 7
    %v1893 = vsub.s32 3, %v1892
    %v1894 = vrot.slane %v1877, %v1893
    %1899 = vmatprep.subr.mxu0 %v1750
    %1900 = vmatpush1.msra.mxu0 %v1749
    %1901 = vmatprep.subr.mxu0 %v1754
    %1902 = vmatpush1.msra.mxu0 %v1753
    %1903 = vmatprep.subr.mxu0 %v1758
    %1904 = vmatpush1.msra.mxu0 %v1757
    %1905 = vmatprep.subr.mxu0 %v1762
    %1906 = vmatpush1.msra.mxu0 %v1761
    %1907 = vmatprep.subr.mxu0 %v1766
    %1908 = vmatpush1.msra.mxu0 %v1765
    %1909 = vmatprep.subr.mxu0 %v1770
    %1910 = vmatpush1.msra.mxu0 %v1769
    %1911 = vmatprep.subr.mxu0 %v1774
    %1912 = vmatpush1.msra.mxu0 %v1773
    %1913 = vmatprep.subr.mxu0 %v1778
    %1914 = vmatpush1.msra.mxu0 %v1777
    %1915 = vmatprep.subr.mxu0 %v1782
    %1916 = vmatpush1.msra.mxu0 %v1781
    %1917 = vmatprep.subr.mxu0 %v1786
    %1918 = vmatpush1.msra.mxu0 %v1785
    %1919 = vmatprep.subr.mxu0 %v1790
    %1920 = vmatpush1.msra.mxu0 %v1789
    %1921 = vmatprep.subr.mxu0 %v1794
    %1922 = vmatpush1.msra.mxu0 %v1793
    %1923 = vmatprep.subr.mxu0 %v1798
    %1924 = vmatpush1.msra.mxu0 %v1797
    %1925 = vmatprep.subr.mxu0 %v1802
    %1926 = vmatpush1.msra.mxu0 %v1801
    %1927 = vmatprep.subr.mxu0 %v1806
    %1928 = vmatpush1.msra.mxu0 %v1805
    %1929 = vmatprep.subr.mxu0 %v1810
    %1930 = vmatpush1.msra.mxu0 %v1809
    %1931 = vmatprep.subr.mxu0 %v1814
    %1932 = vmatpush1.msra.mxu0 %v1813
    %1933 = vmatprep.subr.mxu0 %v1818
    %1934 = vmatpush1.msra.mxu0 %v1817
    %1935 = vmatprep.subr.mxu0 %v1822
    %1936 = vmatpush1.msra.mxu0 %v1821
    %1937 = vmatprep.subr.mxu0 %v1826
    %1938 = vmatpush1.msra.mxu0 %v1825
    %1939 = vmatprep.subr.mxu0 %v1830
    %1940 = vmatpush1.msra.mxu0 %v1829
    %1941 = vmatprep.subr.mxu0 %v1834
    %1942 = vmatpush1.msra.mxu0 %v1833
    %1943 = vmatprep.subr.mxu0 %v1838
    %1944 = vmatpush1.msra.mxu0 %v1837
    %1945 = vmatprep.subr.mxu0 %v1842
    %1946 = vmatpush1.msra.mxu0 %v1841
    %1947 = vmatprep.subr.mxu0 %v1846
    %1948 = vmatpush1.msra.mxu0 %v1845
    %1949 = vmatprep.subr.mxu0 %v1850
    %1950 = vmatpush1.msra.mxu0 %v1849
    %1951 = vmatprep.subr.mxu0 %v1854
    %1952 = vmatpush1.msra.mxu0 %v1853
    %1953 = vmatprep.subr.mxu0 %v1858
    %1954 = vmatpush1.msra.mxu0 %v1857
    %1955 = vmatprep.subr.mxu0 %v1862
    %1956 = vmatpush1.msra.mxu0 %v1861
    %1957 = vmatprep.subr.mxu0 %v1866
    %1958 = vmatpush1.msra.mxu0 %v1865
    %1959 = vmatprep.subr.mxu0 %v1870
    %1960 = vmatpush1.msra.mxu0 %v1869
    %1961 = vmatprep.subr.mxu0 %v1874
    %1962 = vmatpush1.msra.mxu0 %v1873
    %1963 = vmatprep.mubr.f32.mxu0 %v1748
    %1964 = vmatmul.mubr.f32.gmra.mrb[0].mxu0 %v1747
    %v1965 = vpop.f32.mrb[0].mxu0
    %v1966 = vadd.f32 %v1882, %v1965
    %v1967 = vpop.f32.mrb[0].mxu0
    %v1968 = vadd.f32 %v1886, %v1967
    %1969 = vdwg.mxu0
    %1970 = vmatprep.subr.mxu0 %v1752
    %1971 = vmatpush1.msra.mxu0 %v1751
    %1972 = vmatprep.subr.mxu0 %v1756
    %1973 = vmatpush1.msra.mxu0 %v1755
    %1974 = vmatprep.subr.mxu0 %v1760
    %1975 = vmatpush1.msra.mxu0 %v1759
    %1976 = vmatprep.subr.mxu0 %v1764
    %1977 = vmatpush1.msra.mxu0 %v1763
    %1978 = vmatprep.subr.mxu0 %v1768
    %1979 = vmatpush1.msra.mxu0 %v1767
    %1980 = vmatprep.subr.mxu0 %v1772
    %1981 = vmatpush1.msra.mxu0 %v1771
    %1982 = vmatprep.subr.mxu0 %v1776
    %1983 = vmatpush1.msra.mxu0 %v1775
    %1984 = vmatprep.subr.mxu0 %v1780
    %1985 = vmatpush1.msra.mxu0 %v1779
    %1986 = vmatprep.subr.mxu0 %v1784
    %1987 = vmatpush1.msra.mxu0 %v1783
    %1988 = vmatprep.subr.mxu0 %v1788
    %1989 = vmatpush1.msra.mxu0 %v1787
    %1990 = vmatprep.subr.mxu0 %v1792
    %1991 = vmatpush1.msra.mxu0 %v1791
    %1992 = vmatprep.subr.mxu0 %v1796
    %1993 = vmatpush1.msra.mxu0 %v1795
    %1994 = vmatprep.subr.mxu0 %v1800
    %1995 = vmatpush1.msra.mxu0 %v1799
    %1996 = vmatprep.subr.mxu0 %v1804
    %1997 = vmatpush1.msra.mxu0 %v1803
    %1998 = vmatprep.subr.mxu0 %v1808
    %1999 = vmatpush1.msra.mxu0 %v1807
    %2000 = vmatprep.subr.mxu0 %v1812
    %2001 = vmatpush1.msra.mxu0 %v1811
    %2002 = vmatprep.subr.mxu0 %v1816
    %2003 = vmatpush1.msra.mxu0 %v1815
    %2004 = vmatprep.subr.mxu0 %v1820
    %2005 = vmatpush1.msra.mxu0 %v1819
    %2006 = vmatprep.subr.mxu0 %v1824
    %2007 = vmatpush1.msra.mxu0 %v1823
    %2008 = vmatprep.subr.mxu0 %v1828
    %2009 = vmatpush1.msra.mxu0 %v1827
    %2010 = vmatprep.subr.mxu0 %v1832
    %2011 = vmatpush1.msra.mxu0 %v1831
    %2012 = vmatprep.subr.mxu0 %v1836
    %2013 = vmatpush1.msra.mxu0 %v1835
    %2014 = vmatprep.subr.mxu0 %v1840
    %2015 = vmatpush1.msra.mxu0 %v1839
    %2016 = vmatprep.subr.mxu0 %v1844
    %2017 = vmatpush1.msra.mxu0 %v1843
    %2018 = vmatprep.subr.mxu0 %v1848
    %2019 = vmatpush1.msra.mxu0 %v1847
    %2020 = vmatprep.subr.mxu0 %v1852
    %2021 = vmatpush1.msra.mxu0 %v1851
    %2022 = vmatprep.subr.mxu0 %v1856
    %2023 = vmatpush1.msra.mxu0 %v1855
    %2024 = vmatprep.subr.mxu0 %v1860
    %2025 = vmatpush1.msra.mxu0 %v1859
    %2026 = vmatprep.subr.mxu0 %v1864
    %2027 = vmatpush1.msra.mxu0 %v1863
    %2028 = vmatprep.subr.mxu0 %v1868
    %2029 = vmatpush1.msra.mxu0 %v1867
    %2030 = vmatprep.subr.mxu0 %v1872
    %2031 = vmatpush1.msra.mxu0 %v1871
    %2032 = vmatprep.subr.mxu0 %v1876
    %2033 = vmatpush1.msra.mxu0 %v1875
    %2034 = vmatprep.mubr.f32.mxu0 %v1748
    %2035 = vmatmul.mubr.f32.gmra.mrb[0].mxu0 %v1747
    %v2036 = vpop.f32.mrb[0].mxu0
    %v2037 = vadd.f32 %v1890, %v2036
    %v2038 = vpop.f32.mrb[0].mxu0
    %v2039 = vadd.f32 %v1894, %v2038
    %2040 = vdwg.mxu0
    %v2041 = vmax.f32 %v1966, 0.0
    %v2042 = vmax.f32 %v1968, 0.0
    %v2043 = vmax.f32 %v2037, 0.0
    %v2044 = vmax.f32 %v2039, 0.0
    %v2045 = vld [vmem:[%s49] sm:$0xff]
    %v2046 = vld [vmem:[%s49 + $0x8] sm:$0xff]
    %v2047 = vld [vmem:[%s49 + $0x10] sm:$0xff]
    %v2048 = vld [vmem:[%s49 + $0x18] sm:$0xff]
    %v2049 = vld [vmem:[%s49 + $0x20] sm:$0xff]
    %v2050 = vld [vmem:[%s49 + $0x28] sm:$0xff]
    %v2051 = vld [vmem:[%s49 + $0x30] sm:$0xff]
    %v2052 = vld [vmem:[%s49 + $0x38] sm:$0xff]
    %v2053 = vld [vmem:[%s49 + $0x40] sm:$0xff]
    %v2054 = vld [vmem:[%s49 + $0x48] sm:$0xff]
    %v2055 = vld [vmem:[%s49 + $0x50] sm:$0xff]
    %v2056 = vld [vmem:[%s49 + $0x58] sm:$0xff]
    %v2057 = vld [vmem:[%s49 + $0x60] sm:$0xff]
    %v2058 = vld [vmem:[%s49 + $0x68] sm:$0xff]
    %v2059 = vld [vmem:[%s49 + $0x70] sm:$0xff]
    %v2060 = vld [vmem:[%s49 + $0x78] sm:$0xff]
    %v2061 = vld [vmem:[%s49 + $0x80] sm:$0xff]
    %v2062 = vld [vmem:[%s49 + $0x88] sm:$0xff]
    %v2063 = vld [vmem:[%s49 + $0x90] sm:$0xff]
    %v2064 = vld [vmem:[%s49 + $0x98] sm:$0xff]
    %v2065 = vld [vmem:[%s49 + $0xa0] sm:$0xff]
    %v2066 = vld [vmem:[%s49 + $0xa8] sm:$0xff]
    %v2067 = vld [vmem:[%s49 + $0xb0] sm:$0xff]
    %v2068 = vld [vmem:[%s49 + $0xb8] sm:$0xff]
    %v2069 = vld [vmem:[%s49 + $0xc0] sm:$0xff]
    %v2070 = vld [vmem:[%s49 + $0xc8] sm:$0xff]
    %v2071 = vld [vmem:[%s49 + $0xd0] sm:$0xff]
    %v2072 = vld [vmem:[%s49 + $0xd8] sm:$0xff]
    %v2073 = vld [vmem:[%s49 + $0xe0] sm:$0xff]
    %v2074 = vld [vmem:[%s49 + $0xe8] sm:$0xff]
    %v2075 = vld [vmem:[%s49 + $0xf0] sm:$0xff]
    %v2076 = vld [vmem:[%s49 + $0xf8] sm:$0xff]
    %v2077 = vld [vmem:[%s49 + $0x100] sm:$0xff]
    %v2078 = vld [vmem:[%s49 + $0x108] sm:$0xff]
    %v2079 = vld [vmem:[%s49 + $0x110] sm:$0xff]
    %v2080 = vld [vmem:[%s49 + $0x118] sm:$0xff]
    %v2081 = vld [vmem:[%s49 + $0x120] sm:$0xff]
    %v2082 = vld [vmem:[%s49 + $0x128] sm:$0xff]
    %v2083 = vld [vmem:[%s49 + $0x130] sm:$0xff]
    %v2084 = vld [vmem:[%s49 + $0x138] sm:$0xff]
    %v2085 = vld [vmem:[%s49 + $0x140] sm:$0xff]
    %v2086 = vld [vmem:[%s49 + $0x148] sm:$0xff]
    %v2087 = vld [vmem:[%s49 + $0x150] sm:$0xff]
    %v2088 = vld [vmem:[%s49 + $0x158] sm:$0xff]
    %v2089 = vld [vmem:[%s49 + $0x160] sm:$0xff]
    %v2090 = vld [vmem:[%s49 + $0x168] sm:$0xff]
    %v2091 = vld [vmem:[%s49 + $0x170] sm:$0xff]
    %v2092 = vld [vmem:[%s49 + $0x178] sm:$0xff]
    %v2093 = vld [vmem:[%s49 + $0x180] sm:$0xff]
    %v2094 = vld [vmem:[%s49 + $0x188] sm:$0xff]
    %v2095 = vld [vmem:[%s49 + $0x190] sm:$0xff]
    %v2096 = vld [vmem:[%s49 + $0x198] sm:$0xff]
    %v2097 = vld [vmem:[%s49 + $0x1a0] sm:$0xff]
    %v2098 = vld [vmem:[%s49 + $0x1a8] sm:$0xff]
    %v2099 = vld [vmem:[%s49 + $0x1b0] sm:$0xff]
    %v2100 = vld [vmem:[%s49 + $0x1b8] sm:$0xff]
    %v2101 = vld [vmem:[%s49 + $0x1c0] sm:$0xff]
    %v2102 = vld [vmem:[%s49 + $0x1c8] sm:$0xff]
    %v2103 = vld [vmem:[%s49 + $0x1d0] sm:$0xff]
    %v2104 = vld [vmem:[%s49 + $0x1d8] sm:$0xff]
    %v2105 = vld [vmem:[%s49 + $0x1e0] sm:$0xff]
    %v2106 = vld [vmem:[%s49 + $0x1e8] sm:$0xff]
    %v2107 = vld [vmem:[%s49 + $0x1f0] sm:$0xff]
    %v2108 = vld [vmem:[%s49 + $0x1f8] sm:$0xff]
    %v2109 = vld [vmem:[#allocation25] sm:$0x1]
    %v2111 = vlaneseq
    %v2112 = vshrl.u32 %v2111, 7
    %v2113 = vsub.s32 0, %v2112
    %v2114 = vrot.slane %v2109, %v2113
    %2116 = vmatprep.subr.mxu0 0.0
    %2117 = vmatpush1.msra.mxu0 %v2045
    %2118 = vmatprep.subr.mxu0 0.0
    %2119 = vmatpush1.msra.mxu0 %v2046
    %2120 = vmatprep.subr.mxu0 0.0
    %2121 = vmatpush1.msra.mxu0 %v2047
    %2122 = vmatprep.subr.mxu0 0.0
    %2123 = vmatpush1.msra.mxu0 %v2048
    %2124 = vmatprep.subr.mxu0 0.0
    %2125 = vmatpush1.msra.mxu0 %v2049
    %2126 = vmatprep.subr.mxu0 0.0
    %2127 = vmatpush1.msra.mxu0 %v2050
    %2128 = vmatprep.subr.mxu0 0.0
    %2129 = vmatpush1.msra.mxu0 %v2051
    %2130 = vmatprep.subr.mxu0 0.0
    %2131 = vmatpush1.msra.mxu0 %v2052
    %2132 = vmatprep.subr.mxu0 0.0
    %2133 = vmatpush1.msra.mxu0 %v2053
    %2134 = vmatprep.subr.mxu0 0.0
    %2135 = vmatpush1.msra.mxu0 %v2054
    %2136 = vmatprep.subr.mxu0 0.0
    %2137 = vmatpush1.msra.mxu0 %v2055
    %2138 = vmatprep.subr.mxu0 0.0
    %2139 = vmatpush1.msra.mxu0 %v2056
    %2140 = vmatprep.subr.mxu0 0.0
    %2141 = vmatpush1.msra.mxu0 %v2057
    %2142 = vmatprep.subr.mxu0 0.0
    %2143 = vmatpush1.msra.mxu0 %v2058
    %2144 = vmatprep.subr.mxu0 0.0
    %2145 = vmatpush1.msra.mxu0 %v2059
    %2146 = vmatprep.subr.mxu0 0.0
    %2147 = vmatpush1.msra.mxu0 %v2060
    %2148 = vmatprep.subr.mxu0 0.0
    %2149 = vmatpush1.msra.mxu0 %v2061
    %2150 = vmatprep.subr.mxu0 0.0
    %2151 = vmatpush1.msra.mxu0 %v2062
    %2152 = vmatprep.subr.mxu0 0.0
    %2153 = vmatpush1.msra.mxu0 %v2063
    %2154 = vmatprep.subr.mxu0 0.0
    %2155 = vmatpush1.msra.mxu0 %v2064
    %2156 = vmatprep.subr.mxu0 0.0
    %2157 = vmatpush1.msra.mxu0 %v2065
    %2158 = vmatprep.subr.mxu0 0.0
    %2159 = vmatpush1.msra.mxu0 %v2066
    %2160 = vmatprep.subr.mxu0 0.0
    %2161 = vmatpush1.msra.mxu0 %v2067
    %2162 = vmatprep.subr.mxu0 0.0
    %2163 = vmatpush1.msra.mxu0 %v2068
    %2164 = vmatprep.subr.mxu0 0.0
    %2165 = vmatpush1.msra.mxu0 %v2069
    %2166 = vmatprep.subr.mxu0 0.0
    %2167 = vmatpush1.msra.mxu0 %v2070
    %2168 = vmatprep.subr.mxu0 0.0
    %2169 = vmatpush1.msra.mxu0 %v2071
    %2170 = vmatprep.subr.mxu0 0.0
    %2171 = vmatpush1.msra.mxu0 %v2072
    %2172 = vmatprep.subr.mxu0 0.0
    %2173 = vmatpush1.msra.mxu0 %v2073
    %2174 = vmatprep.subr.mxu0 0.0
    %2175 = vmatpush1.msra.mxu0 %v2074
    %2176 = vmatprep.subr.mxu0 0.0
    %2177 = vmatpush1.msra.mxu0 %v2075
    %2178 = vmatprep.subr.mxu0 0.0
    %2179 = vmatpush1.msra.mxu0 %v2076
    %2180 = vmatprep.mubr.f32.mxu0 %v2042
    %2181 = vmatmul.mubr.f32.gmra.mrb[0].mxu0 %v2041
    %v2182 = vpop.f32.mrb[0].mxu0
    %v2183 = vadd.f32 %v2114, %v2182
    %v2184 = vpop.f32.mrb[0].mxu0
    %2185 = vdwg.mxu0
    %2186 = vmatprep.subr.mxu0 0.0
    %2187 = vmatpush1.msra.mxu0 %v2077
    %2188 = vmatprep.subr.mxu0 0.0
    %2189 = vmatpush1.msra.mxu0 %v2078
    %2190 = vmatprep.subr.mxu0 0.0
    %2191 = vmatpush1.msra.mxu0 %v2079
    %2192 = vmatprep.subr.mxu0 0.0
    %2193 = vmatpush1.msra.mxu0 %v2080
    %2194 = vmatprep.subr.mxu0 0.0
    %2195 = vmatpush1.msra.mxu0 %v2081
    %2196 = vmatprep.subr.mxu0 0.0
    %2197 = vmatpush1.msra.mxu0 %v2082
    %2198 = vmatprep.subr.mxu0 0.0
    %2199 = vmatpush1.msra.mxu0 %v2083
    %2200 = vmatprep.subr.mxu0 0.0
    %2201 = vmatpush1.msra.mxu0 %v2084
    %2202 = vmatprep.subr.mxu0 0.0
    %2203 = vmatpush1.msra.mxu0 %v2085
    %2204 = vmatprep.subr.mxu0 0.0
    %2205 = vmatpush1.msra.mxu0 %v2086
    %2206 = vmatprep.subr.mxu0 0.0
    %2207 = vmatpush1.msra.mxu0 %v2087
    %2208 = vmatprep.subr.mxu0 0.0
    %2209 = vmatpush1.msra.mxu0 %v2088
    %2210 = vmatprep.subr.mxu0 0.0
    %2211 = vmatpush1.msra.mxu0 %v2089
    %2212 = vmatprep.subr.mxu0 0.0
    %2213 = vmatpush1.msra.mxu0 %v2090
    %2214 = vmatprep.subr.mxu0 0.0
    %2215 = vmatpush1.msra.mxu0 %v2091
    %2216 = vmatprep.subr.mxu0 0.0
    %2217 = vmatpush1.msra.mxu0 %v2092
    %2218 = vmatprep.subr.mxu0 0.0
    %2219 = vmatpush1.msra.mxu0 %v2093
    %2220 = vmatprep.subr.mxu0 0.0
    %2221 = vmatpush1.msra.mxu0 %v2094
    %2222 = vmatprep.subr.mxu0 0.0
    %2223 = vmatpush1.msra.mxu0 %v2095
    %2224 = vmatprep.subr.mxu0 0.0
    %2225 = vmatpush1.msra.mxu0 %v2096
    %2226 = vmatprep.subr.mxu0 0.0
    %2227 = vmatpush1.msra.mxu0 %v2097
    %2228 = vmatprep.subr.mxu0 0.0
    %2229 = vmatpush1.msra.mxu0 %v2098
    %2230 = vmatprep.subr.mxu0 0.0
    %2231 = vmatpush1.msra.mxu0 %v2099
    %2232 = vmatprep.subr.mxu0 0.0
    %2233 = vmatpush1.msra.mxu0 %v2100
    %2234 = vmatprep.subr.mxu0 0.0
    %2235 = vmatpush1.msra.mxu0 %v2101
    %2236 = vmatprep.subr.mxu0 0.0
    %2237 = vmatpush1.msra.mxu0 %v2102
    %2238 = vmatprep.subr.mxu0 0.0
    %2239 = vmatpush1.msra.mxu0 %v2103
    %2240 = vmatprep.subr.mxu0 0.0
    %2241 = vmatpush1.msra.mxu0 %v2104
    %2242 = vmatprep.subr.mxu0 0.0
    %2243 = vmatpush1.msra.mxu0 %v2105
    %2244 = vmatprep.subr.mxu0 0.0
    %2245 = vmatpush1.msra.mxu0 %v2106
    %2246 = vmatprep.subr.mxu0 0.0
    %2247 = vmatpush1.msra.mxu0 %v2107
    %2248 = vmatprep.subr.mxu0 0.0
    %2249 = vmatpush1.msra.mxu0 %v2108
    %2250 = vmatprep.mubr.f32.mxu0 %v2044
    %2251 = vmatmul.mubr.f32.gmra.mrb[0].mxu0 %v2043
    %v2252 = vpop.f32.mrb[0].mxu0
    %v2253 = vadd.f32 %v2183, %v2252
    %v2254 = vpop.f32.mrb[0].mxu0
    %2255 = vdwg.mxu0
    %v2256 = vld [vmem:[%s53] sm:$0xff]
    %v2257 = vld [vmem:[%s53 + $0x8] sm:$0xff]
    %v2258 = vld [vmem:[%s53 + $0x10] sm:$0xff]
    %v2259 = vld [vmem:[%s53 + $0x18] sm:$0xff]
    %v2260 = vld [vmem:[#allocation26] sm:$0xff]
    %v2261 = vld [vmem:[#allocation26 + $0x8] sm:$0xff]
    %v2262 = vld [vmem:[#allocation26 + $0x10] sm:$0xff]
    %v2263 = vld [vmem:[#allocation26 + $0x18] sm:$0xff]
    %v2264 = vld [vmem:[#allocation26 + $0x20] sm:$0xff]
    %v2265 = vld [vmem:[#allocation26 + $0x28] sm:$0xff]
    %v2266 = vld [vmem:[#allocation26 + $0x30] sm:$0xff]
    %v2267 = vld [vmem:[#allocation26 + $0x38] sm:$0xff]
    %v2268 = vld [vmem:[#allocation26 + $0x40] sm:$0xff]
    %v2269 = vld [vmem:[#allocation26 + $0x48] sm:$0xff]
    %v2270 = vld [vmem:[#allocation26 + $0x50] sm:$0xff]
    %v2271 = vld [vmem:[#allocation26 + $0x58] sm:$0xff]
    %v2272 = vld [vmem:[#allocation26 + $0x60] sm:$0xff]
    %v2273 = vld [vmem:[#allocation26 + $0x68] sm:$0xff]
    %v2274 = vld [vmem:[#allocation26 + $0x70] sm:$0xff]
    %v2275 = vld [vmem:[#allocation26 + $0x78] sm:$0xff]
    %v2277 = vsel %vm762, %v1628, 0
    %2279 = vmatprep.subr.mxu0 %v2261
    %2280 = vmatpush1.msra.mxu0 %v2260
    %2281 = vmatprep.subr.mxu0 %v2263
    %2282 = vmatpush1.msra.mxu0 %v2262
    %2283 = vmatprep.subr.mxu0 %v2265
    %2284 = vmatpush1.msra.mxu0 %v2264
    %2285 = vmatprep.subr.mxu0 %v2267
    %2286 = vmatpush1.msra.mxu0 %v2266
    %2287 = vmatprep.subr.mxu0 %v2269
    %2288 = vmatpush1.msra.mxu0 %v2268
    %2289 = vmatprep.subr.mxu0 %v2271
    %2290 = vmatpush1.msra.mxu0 %v2270
    %2291 = vmatprep.subr.mxu0 %v2273
    %2292 = vmatpush1.msra.mxu0 %v2272
    %2293 = vmatprep.subr.mxu0 %v2275
    %2294 = vmatpush1.msra.mxu0 %v2274
    %2295 = vmatprep.subr.mxu0 0.0
    %2296 = vmatpush1.msra.mxu0 0.0
    %2297 = vmatprep.subr.mxu0 0.0
    %2298 = vmatpush1.msra.mxu0 0.0
    %2299 = vmatprep.subr.mxu0 0.0
    %2300 = vmatpush1.msra.mxu0 0.0
    %2301 = vmatprep.subr.mxu0 0.0
    %2302 = vmatpush1.msra.mxu0 0.0
    %2303 = vmatprep.subr.mxu0 0.0
    %2304 = vmatpush1.msra.mxu0 0.0
    %2305 = vmatprep.subr.mxu0 0.0
    %2306 = vmatpush1.msra.mxu0 0.0
    %2307 = vmatprep.subr.mxu0 0.0
    %2308 = vmatpush1.msra.mxu0 0.0
    %2309 = vmatprep.subr.mxu0 0.0
    %2310 = vmatpush1.msra.mxu0 0.0
    %2311 = vmatprep.subr.mxu0 0.0
    %2312 = vmatpush1.msra.mxu0 0.0
    %2313 = vmatprep.subr.mxu0 0.0
    %2314 = vmatpush1.msra.mxu0 0.0
    %2315 = vmatprep.subr.mxu0 0.0
    %2316 = vmatpush1.msra.mxu0 0.0
    %2317 = vmatprep.subr.mxu0 0.0
    %2318 = vmatpush1.msra.mxu0 0.0
    %2319 = vmatprep.subr.mxu0 0.0
    %2320 = vmatpush1.msra.mxu0 0.0
    %2321 = vmatprep.subr.mxu0 0.0
    %2322 = vmatpush1.msra.mxu0 0.0
    %2323 = vmatprep.subr.mxu0 0.0
    %2324 = vmatpush1.msra.mxu0 0.0
    %2325 = vmatprep.subr.mxu0 0.0
    %2326 = vmatpush1.msra.mxu0 0.0
    %2327 = vmatprep.subr.mxu0 0.0
    %2328 = vmatpush1.msra.mxu0 0.0
    %2329 = vmatprep.subr.mxu0 0.0
    %2330 = vmatpush1.msra.mxu0 0.0
    %2331 = vmatprep.subr.mxu0 0.0
    %2332 = vmatpush1.msra.mxu0 0.0
    %2333 = vmatprep.subr.mxu0 0.0
    %2334 = vmatpush1.msra.mxu0 0.0
    %2335 = vmatprep.subr.mxu0 0.0
    %2336 = vmatpush1.msra.mxu0 0.0
    %2337 = vmatprep.subr.mxu0 0.0
    %2338 = vmatpush1.msra.mxu0 0.0
    %2339 = vmatprep.subr.mxu0 0.0
    %2340 = vmatpush1.msra.mxu0 0.0
    %2341 = vmatprep.subr.mxu0 0.0
    %2342 = vmatpush1.msra.mxu0 0.0
    %2343 = vmatprep.mubr.f32.mxu0 0.0
    %2344 = vmatmul.mubr.f32.gmra.mrb[0].mxu0 %v2277
    %v2345 = vpop.f32.mrb[0].mxu0
    %v2346 = vadd.f32 0.0, %v2345
    %v2347 = vpop.f32.mrb[0].mxu0
    %v2348 = vadd.f32 0.0, %v2347
    %2349 = vdwg.mxu0
    %v2351 = vsel %vm945, %v1016, 0
    %2353 = vmatprep.subr.mxu0 %v2257
    %2354 = vmatpush1.msra.mxu0 %v2256
    %2355 = vmatprep.subr.mxu0 %v2259
    %2356 = vmatpush1.msra.mxu0 %v2258
    %2357 = vmatprep.subr.mxu0 0.0
    %2358 = vmatpush1.msra.mxu0 0.0
    %2359 = vmatprep.subr.mxu0 0.0
    %2360 = vmatpush1.msra.mxu0 0.0
    %2361 = vmatprep.subr.mxu0 0.0
    %2362 = vmatpush1.msra.mxu0 0.0
    %2363 = vmatprep.subr.mxu0 0.0
    %2364 = vmatpush1.msra.mxu0 0.0
    %2365 = vmatprep.subr.mxu0 0.0
    %2366 = vmatpush1.msra.mxu0 0.0
    %2367 = vmatprep.subr.mxu0 0.0
    %2368 = vmatpush1.msra.mxu0 0.0
    %2369 = vmatprep.subr.mxu0 0.0
    %2370 = vmatpush1.msra.mxu0 0.0
    %2371 = vmatprep.subr.mxu0 0.0
    %2372 = vmatpush1.msra.mxu0 0.0
    %2373 = vmatprep.subr.mxu0 0.0
    %2374 = vmatpush1.msra.mxu0 0.0
    %2375 = vmatprep.subr.mxu0 0.0
    %2376 = vmatpush1.msra.mxu0 0.0
    %2377 = vmatprep.subr.mxu0 0.0
    %2378 = vmatpush1.msra.mxu0 0.0
    %2379 = vmatprep.subr.mxu0 0.0
    %2380 = vmatpush1.msra.mxu0 0.0
    %2381 = vmatprep.subr.mxu0 0.0
    %2382 = vmatpush1.msra.mxu0 0.0
    %2383 = vmatprep.subr.mxu0 0.0
    %2384 = vmatpush1.msra.mxu0 0.0
    %2385 = vmatprep.subr.mxu0 0.0
    %2386 = vmatpush1.msra.mxu0 0.0
    %2387 = vmatprep.subr.mxu0 0.0
    %2388 = vmatpush1.msra.mxu0 0.0
    %2389 = vmatprep.subr.mxu0 0.0
    %2390 = vmatpush1.msra.mxu0 0.0
    %2391 = vmatprep.subr.mxu0 0.0
    %2392 = vmatpush1.msra.mxu0 0.0
    %2393 = vmatprep.subr.mxu0 0.0
    %2394 = vmatpush1.msra.mxu0 0.0
    %2395 = vmatprep.subr.mxu0 0.0
    %2396 = vmatpush1.msra.mxu0 0.0
    %2397 = vmatprep.subr.mxu0 0.0
    %2398 = vmatpush1.msra.mxu0 0.0
    %2399 = vmatprep.subr.mxu0 0.0
    %2400 = vmatpush1.msra.mxu0 0.0
    %2401 = vmatprep.subr.mxu0 0.0
    %2402 = vmatpush1.msra.mxu0 0.0
    %2403 = vmatprep.subr.mxu0 0.0
    %2404 = vmatpush1.msra.mxu0 0.0
    %2405 = vmatprep.subr.mxu0 0.0
    %2406 = vmatpush1.msra.mxu0 0.0
    %2407 = vmatprep.subr.mxu0 0.0
    %2408 = vmatpush1.msra.mxu0 0.0
    %2409 = vmatprep.subr.mxu0 0.0
    %2410 = vmatpush1.msra.mxu0 0.0
    %2411 = vmatprep.subr.mxu0 0.0
    %2412 = vmatpush1.msra.mxu0 0.0
    %2413 = vmatprep.subr.mxu0 0.0
    %2414 = vmatpush1.msra.mxu0 0.0
    %2415 = vmatprep.subr.mxu0 0.0
    %2416 = vmatpush1.msra.mxu0 0.0
    %2417 = vmatprep.mubr.f32.mxu0 0.0
    %2418 = vmatmul.mubr.f32.gmra.mrb[0].mxu0 %v2351
    %v2419 = vpop.f32.mrb[0].mxu0
    %v2420 = vadd.f32 %v2346, %v2419
    %v2421 = vpop.f32.mrb[0].mxu0
    %v2422 = vadd.f32 %v2348, %v2421
    %2423 = vdwg.mxu0
    %v2424 = vld [vmem:[#allocation28] sm:$0xff]
    %v2425 = vld [vmem:[#allocation28 + $0x8] sm:$0xff]
    %v2426 = vld [vmem:[#allocation28 + $0x10] sm:$0xff]
    %v2427 = vld [vmem:[#allocation28 + $0x18] sm:$0xff]
    %v2428 = vld [vmem:[#allocation28 + $0x20] sm:$0xff]
    %v2429 = vld [vmem:[#allocation28 + $0x28] sm:$0xff]
    %v2430 = vld [vmem:[#allocation28 + $0x30] sm:$0xff]
    %v2431 = vld [vmem:[#allocation28 + $0x38] sm:$0xff]
    %v2432 = vld [vmem:[#allocation28 + $0x40] sm:$0xff]
    %v2433 = vld [vmem:[#allocation28 + $0x48] sm:$0xff]
    %v2434 = vld [vmem:[#allocation28 + $0x50] sm:$0xff]
    %v2435 = vld [vmem:[#allocation28 + $0x58] sm:$0xff]
    %v2436 = vld [vmem:[#allocation28 + $0x60] sm:$0xff]
    %v2437 = vld [vmem:[#allocation28 + $0x68] sm:$0xff]
    %v2438 = vld [vmem:[#allocation28 + $0x70] sm:$0xff]
    %v2439 = vld [vmem:[#allocation28 + $0x78] sm:$0xff]
    %v2441 = vsel %vm762, %v2253, 0
    %2443 = vmatprep.subr.mxu0 %v2425
    %2444 = vmatpush1.msra.mxu0 %v2424
    %2445 = vmatprep.subr.mxu0 %v2427
    %2446 = vmatpush1.msra.mxu0 %v2426
    %2447 = vmatprep.subr.mxu0 %v2429
    %2448 = vmatpush1.msra.mxu0 %v2428
    %2449 = vmatprep.subr.mxu0 %v2431
    %2450 = vmatpush1.msra.mxu0 %v2430
    %2451 = vmatprep.subr.mxu0 %v2433
    %2452 = vmatpush1.msra.mxu0 %v2432
    %2453 = vmatprep.subr.mxu0 %v2435
    %2454 = vmatpush1.msra.mxu0 %v2434
    %2455 = vmatprep.subr.mxu0 %v2437
    %2456 = vmatpush1.msra.mxu0 %v2436
    %2457 = vmatprep.subr.mxu0 %v2439
    %2458 = vmatpush1.msra.mxu0 %v2438
    %2459 = vmatprep.subr.mxu0 0.0
    %2460 = vmatpush1.msra.mxu0 0.0
    %2461 = vmatprep.subr.mxu0 0.0
    %2462 = vmatpush1.msra.mxu0 0.0
    %2463 = vmatprep.subr.mxu0 0.0
    %2464 = vmatpush1.msra.mxu0 0.0
    %2465 = vmatprep.subr.mxu0 0.0
    %2466 = vmatpush1.msra.mxu0 0.0
    %2467 = vmatprep.subr.mxu0 0.0
    %2468 = vmatpush1.msra.mxu0 0.0
    %2469 = vmatprep.subr.mxu0 0.0
    %2470 = vmatpush1.msra.mxu0 0.0
    %2471 = vmatprep.subr.mxu0 0.0
    %2472 = vmatpush1.msra.mxu0 0.0
    %2473 = vmatprep.subr.mxu0 0.0
    %2474 = vmatpush1.msra.mxu0 0.0
    %2475 = vmatprep.subr.mxu0 0.0
    %2476 = vmatpush1.msra.mxu0 0.0
    %2477 = vmatprep.subr.mxu0 0.0
    %2478 = vmatpush1.msra.mxu0 0.0
    %2479 = vmatprep.subr.mxu0 0.0
    %2480 = vmatpush1.msra.mxu0 0.0
    %2481 = vmatprep.subr.mxu0 0.0
    %2482 = vmatpush1.msra.mxu0 0.0
    %2483 = vmatprep.subr.mxu0 0.0
    %2484 = vmatpush1.msra.mxu0 0.0
    %2485 = vmatprep.subr.mxu0 0.0
    %2486 = vmatpush1.msra.mxu0 0.0
    %2487 = vmatprep.subr.mxu0 0.0
    %2488 = vmatpush1.msra.mxu0 0.0
    %2489 = vmatprep.subr.mxu0 0.0
    %2490 = vmatpush1.msra.mxu0 0.0
    %2491 = vmatprep.subr.mxu0 0.0
    %2492 = vmatpush1.msra.mxu0 0.0
    %2493 = vmatprep.subr.mxu0 0.0
    %2494 = vmatpush1.msra.mxu0 0.0
    %2495 = vmatprep.subr.mxu0 0.0
    %2496 = vmatpush1.msra.mxu0 0.0
    %2497 = vmatprep.subr.mxu0 0.0
    %2498 = vmatpush1.msra.mxu0 0.0
    %2499 = vmatprep.subr.mxu0 0.0
    %2500 = vmatpush1.msra.mxu0 0.0
    %2501 = vmatprep.subr.mxu0 0.0
    %2502 = vmatpush1.msra.mxu0 0.0
    %2503 = vmatprep.subr.mxu0 0.0
    %2504 = vmatpush1.msra.mxu0 0.0
    %2505 = vmatprep.subr.mxu0 0.0
    %2506 = vmatpush1.msra.mxu0 0.0
    %2507 = vmatprep.mubr.f32.mxu0 0.0
    %2508 = vmatmul.mubr.f32.gmra.mrb[0].mxu0 %v2441
    %v2509 = vpop.f32.mrb[0].mxu0
    %v2510 = vadd.f32 0.0, %v2509
    %v2511 = vpop.f32.mrb[0].mxu0
    %v2512 = vadd.f32 0.0, %v2511
    %2513 = vdwg.mxu0
    %v2514 = vadd.f32 %v2420, %v2510
    %v2515 = vadd.f32 %v2422, %v2512
    %v2516 = vld [vmem:[#allocation29] sm:$0x3]
    %v2518 = vlaneseq
    %v2519 = vshrl.u32 %v2518, 7
    %v2520 = vsub.s32 0, %v2519
    %v2521 = vrot.slane %v2516, %v2520
    %v2522 = vlaneseq
    %v2523 = vshrl.u32 %v2522, 7
    %v2524 = vsub.s32 1, %v2523
    %v2525 = vrot.slane %v2516, %v2524
    %v2528 = vadd.f32 %v2514, %v2521
    %v2529 = vadd.f32 %v2515, %v2525
    %v2530 = vld [vmem:[%s9] sm:$0xff]
    %v2531 = vld [vmem:[%s9 + $0x8] sm:$0xff]
    %v2532 = vld [vmem:[#allocation31] sm:$0xff]
    %v2533 = vld [vmem:[#allocation31 + $0x8] sm:$0xff]
    %v2534 = vld [vmem:[#allocation31 + $0x10] sm:$0xff]
    %v2535 = vld [vmem:[#allocation31 + $0x18] sm:$0xff]
    %v2536 = vld [vmem:[#allocation31 + $0x20] sm:$0xff]
    %v2537 = vld [vmem:[#allocation31 + $0x28] sm:$0xff]
    %v2538 = vld [vmem:[#allocation31 + $0x30] sm:$0xff]
    %v2539 = vld [vmem:[#allocation31 + $0x38] sm:$0xff]
    %v2540 = vld [vmem:[#allocation31 + $0x40] sm:$0xff]
    %v2541 = vld [vmem:[#allocation31 + $0x48] sm:$0xff]
    %v2542 = vld [vmem:[#allocation31 + $0x50] sm:$0xff]
    %v2543 = vld [vmem:[#allocation31 + $0x58] sm:$0xff]
    %v2544 = vld [vmem:[#allocation31 + $0x60] sm:$0xff]
    %v2545 = vld [vmem:[#allocation31 + $0x68] sm:$0xff]
    %v2546 = vld [vmem:[#allocation31 + $0x70] sm:$0xff]
    %v2547 = vld [vmem:[#allocation31 + $0x78] sm:$0xff]
    %v2548 = vld [vmem:[#allocation32] sm:$0x1]
    %v2550 = vlaneseq
    %v2551 = vshrl.u32 %v2550, 7
    %v2552 = vsub.s32 0, %v2551
    %v2553 = vrot.slane %v2548, %v2552
    %2555 = vmatprep.subr.mxu0 0.0
    %2556 = vmatpush1.msra.mxu0 %v2532
    %2557 = vmatprep.subr.mxu0 0.0
    %2558 = vmatpush1.msra.mxu0 %v2533
    %2559 = vmatprep.subr.mxu0 0.0
    %2560 = vmatpush1.msra.mxu0 %v2534
    %2561 = vmatprep.subr.mxu0 0.0
    %2562 = vmatpush1.msra.mxu0 %v2535
    %2563 = vmatprep.subr.mxu0 0.0
    %2564 = vmatpush1.msra.mxu0 %v2536
    %2565 = vmatprep.subr.mxu0 0.0
    %2566 = vmatpush1.msra.mxu0 %v2537
    %2567 = vmatprep.subr.mxu0 0.0
    %2568 = vmatpush1.msra.mxu0 %v2538
    %2569 = vmatprep.subr.mxu0 0.0
    %2570 = vmatpush1.msra.mxu0 %v2539
    %2571 = vmatprep.subr.mxu0 0.0
    %2572 = vmatpush1.msra.mxu0 %v2540
    %2573 = vmatprep.subr.mxu0 0.0
    %2574 = vmatpush1.msra.mxu0 %v2541
    %2575 = vmatprep.subr.mxu0 0.0
    %2576 = vmatpush1.msra.mxu0 %v2542
    %2577 = vmatprep.subr.mxu0 0.0
    %2578 = vmatpush1.msra.mxu0 %v2543
    %2579 = vmatprep.subr.mxu0 0.0
    %2580 = vmatpush1.msra.mxu0 %v2544
    %2581 = vmatprep.subr.mxu0 0.0
    %2582 = vmatpush1.msra.mxu0 %v2545
    %2583 = vmatprep.subr.mxu0 0.0
    %2584 = vmatpush1.msra.mxu0 %v2546
    %2585 = vmatprep.subr.mxu0 0.0
    %2586 = vmatpush1.msra.mxu0 %v2547
    %2587 = vmatprep.subr.mxu0 0.0
    %2588 = vmatpush1.msra.mxu0 0.0
    %2589 = vmatprep.subr.mxu0 0.0
    %2590 = vmatpush1.msra.mxu0 0.0
    %2591 = vmatprep.subr.mxu0 0.0
    %2592 = vmatpush1.msra.mxu0 0.0
    %2593 = vmatprep.subr.mxu0 0.0
    %2594 = vmatpush1.msra.mxu0 0.0
    %2595 = vmatprep.subr.mxu0 0.0
    %2596 = vmatpush1.msra.mxu0 0.0
    %2597 = vmatprep.subr.mxu0 0.0
    %2598 = vmatpush1.msra.mxu0 0.0
    %2599 = vmatprep.subr.mxu0 0.0
    %2600 = vmatpush1.msra.mxu0 0.0
    %2601 = vmatprep.subr.mxu0 0.0
    %2602 = vmatpush1.msra.mxu0 0.0
    %2603 = vmatprep.subr.mxu0 0.0
    %2604 = vmatpush1.msra.mxu0 0.0
    %2605 = vmatprep.subr.mxu0 0.0
    %2606 = vmatpush1.msra.mxu0 0.0
    %2607 = vmatprep.subr.mxu0 0.0
    %2608 = vmatpush1.msra.mxu0 0.0
    %2609 = vmatprep.subr.mxu0 0.0
    %2610 = vmatpush1.msra.mxu0 0.0
    %2611 = vmatprep.subr.mxu0 0.0
    %2612 = vmatpush1.msra.mxu0 0.0
    %2613 = vmatprep.subr.mxu0 0.0
    %2614 = vmatpush1.msra.mxu0 0.0
    %2615 = vmatprep.subr.mxu0 0.0
    %2616 = vmatpush1.msra.mxu0 0.0
    %2617 = vmatprep.subr.mxu0 0.0
    %2618 = vmatpush1.msra.mxu0 0.0
    %2619 = vmatprep.mubr.f32.mxu0 0.0
    %2620 = vmatmul.mubr.f32.gmra.mrb[0].mxu0 %v2530
    %v2621 = vpop.f32.mrb[0].mxu0
    %v2622 = vadd.f32 %v2553, %v2621
    %v2623 = vpop.f32.mrb[0].mxu0
    %2624 = vmatprep.mubr.f32.mxu0 0.0
    %2625 = vmatmul.mubr.f32.gmra.mrb[0].mxu0 %v2531
    %v2626 = vpop.f32.mrb[0].mxu0
    %v2627 = vadd.f32 %v2553, %v2626
    %v2628 = vpop.f32.mrb[0].mxu0
    %2629 = vdwg.mxu0
    %v2630 = vmax.f32 %v2622, 0.0
    %v2631 = vmax.f32 %v2627, 0.0
    %v2632 = vld [vmem:[#allocation34] sm:$0xff]
    %v2633 = vld [vmem:[#allocation34 + $0x8] sm:$0xff]
    %v2634 = vld [vmem:[#allocation34 + $0x10] sm:$0xff]
    %v2635 = vld [vmem:[#allocation34 + $0x18] sm:$0xff]
    %v2636 = vld [vmem:[#allocation34 + $0x20] sm:$0xff]
    %v2637 = vld [vmem:[#allocation34 + $0x28] sm:$0xff]
    %v2638 = vld [vmem:[#allocation34 + $0x30] sm:$0xff]
    %v2639 = vld [vmem:[#allocation34 + $0x38] sm:$0xff]
    %v2640 = vld [vmem:[#allocation34 + $0x40] sm:$0xff]
    %v2641 = vld [vmem:[#allocation34 + $0x48] sm:$0xff]
    %v2642 = vld [vmem:[#allocation34 + $0x50] sm:$0xff]
    %v2643 = vld [vmem:[#allocation34 + $0x58] sm:$0xff]
    %v2644 = vld [vmem:[#allocation34 + $0x60] sm:$0xff]
    %v2645 = vld [vmem:[#allocation34 + $0x68] sm:$0xff]
    %v2646 = vld [vmem:[#allocation34 + $0x70] sm:$0xff]
    %v2647 = vld [vmem:[#allocation34 + $0x78] sm:$0xff]
    %v2648 = vld [vmem:[#allocation35] sm:$0x1]
    %v2650 = vlaneseq
    %v2651 = vshrl.u32 %v2650, 7
    %v2652 = vsub.s32 0, %v2651
    %v2653 = vrot.slane %v2648, %v2652
    %2655 = vmatprep.subr.mxu0 0.0
    %2656 = vmatpush1.msra.mxu0 %v2632
    %2657 = vmatprep.subr.mxu0 0.0
    %2658 = vmatpush1.msra.mxu0 %v2633
    %2659 = vmatprep.subr.mxu0 0.0
    %2660 = vmatpush1.msra.mxu0 %v2634
    %2661 = vmatprep.subr.mxu0 0.0
    %2662 = vmatpush1.msra.mxu0 %v2635
    %2663 = vmatprep.subr.mxu0 0.0
    %2664 = vmatpush1.msra.mxu0 %v2636
    %2665 = vmatprep.subr.mxu0 0.0
    %2666 = vmatpush1.msra.mxu0 %v2637
    %2667 = vmatprep.subr.mxu0 0.0
    %2668 = vmatpush1.msra.mxu0 %v2638
    %2669 = vmatprep.subr.mxu0 0.0
    %2670 = vmatpush1.msra.mxu0 %v2639
    %2671 = vmatprep.subr.mxu0 0.0
    %2672 = vmatpush1.msra.mxu0 %v2640
    %2673 = vmatprep.subr.mxu0 0.0
    %2674 = vmatpush1.msra.mxu0 %v2641
    %2675 = vmatprep.subr.mxu0 0.0
    %2676 = vmatpush1.msra.mxu0 %v2642
    %2677 = vmatprep.subr.mxu0 0.0
    %2678 = vmatpush1.msra.mxu0 %v2643
    %2679 = vmatprep.subr.mxu0 0.0
    %2680 = vmatpush1.msra.mxu0 %v2644
    %2681 = vmatprep.subr.mxu0 0.0
    %2682 = vmatpush1.msra.mxu0 %v2645
    %2683 = vmatprep.subr.mxu0 0.0
    %2684 = vmatpush1.msra.mxu0 %v2646
    %2685 = vmatprep.subr.mxu0 0.0
    %2686 = vmatpush1.msra.mxu0 %v2647
    %2687 = vmatprep.subr.mxu0 0.0
    %2688 = vmatpush1.msra.mxu0 0.0
    %2689 = vmatprep.subr.mxu0 0.0
    %2690 = vmatpush1.msra.mxu0 0.0
    %2691 = vmatprep.subr.mxu0 0.0
    %2692 = vmatpush1.msra.mxu0 0.0
    %2693 = vmatprep.subr.mxu0 0.0
    %2694 = vmatpush1.msra.mxu0 0.0
    %2695 = vmatprep.subr.mxu0 0.0
    %2696 = vmatpush1.msra.mxu0 0.0
    %2697 = vmatprep.subr.mxu0 0.0
    %2698 = vmatpush1.msra.mxu0 0.0
    %2699 = vmatprep.subr.mxu0 0.0
    %2700 = vmatpush1.msra.mxu0 0.0
    %2701 = vmatprep.subr.mxu0 0.0
    %2702 = vmatpush1.msra.mxu0 0.0
    %2703 = vmatprep.subr.mxu0 0.0
    %2704 = vmatpush1.msra.mxu0 0.0
    %2705 = vmatprep.subr.mxu0 0.0
    %2706 = vmatpush1.msra.mxu0 0.0
    %2707 = vmatprep.subr.mxu0 0.0
    %2708 = vmatpush1.msra.mxu0 0.0
    %2709 = vmatprep.subr.mxu0 0.0
    %2710 = vmatpush1.msra.mxu0 0.0
    %2711 = vmatprep.subr.mxu0 0.0
    %2712 = vmatpush1.msra.mxu0 0.0
    %2713 = vmatprep.subr.mxu0 0.0
    %2714 = vmatpush1.msra.mxu0 0.0
    %2715 = vmatprep.subr.mxu0 0.0
    %2716 = vmatpush1.msra.mxu0 0.0
    %2717 = vmatprep.subr.mxu0 0.0
    %2718 = vmatpush1.msra.mxu0 0.0
    %2719 = vmatprep.mubr.f32.mxu0 0.0
    %2720 = vmatmul.mubr.f32.gmra.mrb[0].mxu0 %v2630
    %v2721 = vpop.f32.mrb[0].mxu0
    %v2722 = vadd.f32 %v2653, %v2721
    %v2723 = vpop.f32.mrb[0].mxu0
    %2724 = vmatprep.mubr.f32.mxu0 0.0
    %2725 = vmatmul.mubr.f32.gmra.mrb[0].mxu0 %v2631
    %v2726 = vpop.f32.mrb[0].mxu0
    %v2727 = vadd.f32 %v2653, %v2726
    %v2728 = vpop.f32.mrb[0].mxu0
    %2729 = vdwg.mxu0
    %v2730 = vld [vmem:[#allocation37] sm:$0x1]
    %v2731 = vld [vmem:[#allocation38] sm:$0x1]
    %2732 = vadd.xlane.f32.xlu0 %v2722
    %v2733 = vpop.xlane.xlu0 %2732
    %2734 = vadd.xlane.f32.xlu0 %v2727
    %v2735 = vpop.xlane.xlu0 %2734
    %v2736 = vrcp.pop 128.0
    %v2737 = vmul.f32 %v2733, %v2736
    %v2738 = vmul.f32 %v2735, %v2736
    %v2739 = vsub.f32 %v2722, %v2737
    %v2740 = vsub.f32 %v2727, %v2738
    %v2741 = vmul.f32 %v2739, %v2739
    %v2742 = vmul.f32 %v2740, %v2740
    %2743 = vadd.xlane.f32.xlu0 %v2741
    %v2744 = vpop.xlane.xlu0 %2743
    %2745 = vadd.xlane.f32.xlu0 %v2742
    %v2746 = vpop.xlane.xlu0 %2745
    %v2747 = vmul.f32 %v2744, %v2736
    %v2748 = vmul.f32 %v2746, %v2736
    %v2749 = vadd.f32 %v2747, 1e-05
    %v2750 = vadd.f32 %v2748, 1e-05
    %v2751 = vrsqrt.pop %v2749
    %v2752 = vrsqrt.pop %v2750
    %v2753 = vmul.f32 %v2739, %v2751
    %v2754 = vmul.f32 %v2740, %v2752
    %v2756 = vlaneseq
    %v2757 = vshrl.u32 %v2756, 7
    %v2758 = vsub.s32 0, %v2757
    %v2759 = vrot.slane %v2730, %v2758
    %v2761 = vmul.f32 %v2753, %v2759
    %v2762 = vmul.f32 %v2754, %v2759
    %v2764 = vlaneseq
    %v2765 = vshrl.u32 %v2764, 7
    %v2766 = vsub.s32 0, %v2765
    %v2767 = vrot.slane %v2731, %v2766
    %v2769 = vadd.f32 %v2761, %v2767
    %v2770 = vadd.f32 %v2762, %v2767
    %v2771 = vld [vmem:[#allocation3] sm:$0x3]
    %v2773 = vsel %vm945, %v2771, 0
    %2775 = vmatprep.subr.mxu0 0.0
    %2776 = vmatpush1.msra.mxu0 %v2769
    %2777 = vmatprep.subr.mxu0 0.0
    %2778 = vmatpush1.msra.mxu0 %v2770
    %2779 = vmatprep.subr.mxu0 0.0
    %2780 = vmatpush1.msra.mxu0 0.0
    %2781 = vmatprep.subr.mxu0 0.0
    %2782 = vmatpush1.msra.mxu0 0.0
    %2783 = vmatprep.subr.mxu0 0.0
    %2784 = vmatpush1.msra.mxu0 0.0
    %2785 = vmatprep.subr.mxu0 0.0
    %2786 = vmatpush1.msra.mxu0 0.0
    %2787 = vmatprep.subr.mxu0 0.0
    %2788 = vmatpush1.msra.mxu0 0.0
    %2789 = vmatprep.subr.mxu0 0.0
    %2790 = vmatpush1.msra.mxu0 0.0
    %2791 = vmatprep.subr.mxu0 0.0
    %2792 = vmatpush1.msra.mxu0 0.0
    %2793 = vmatprep.subr.mxu0 0.0
    %2794 = vmatpush1.msra.mxu0 0.0
    %2795 = vmatprep.subr.mxu0 0.0
    %2796 = vmatpush1.msra.mxu0 0.0
    %2797 = vmatprep.subr.mxu0 0.0
    %2798 = vmatpush1.msra.mxu0 0.0
    %2799 = vmatprep.subr.mxu0 0.0
    %2800 = vmatpush1.msra.mxu0 0.0
    %2801 = vmatprep.subr.mxu0 0.0
    %2802 = vmatpush1.msra.mxu0 0.0
    %2803 = vmatprep.subr.mxu0 0.0
    %2804 = vmatpush1.msra.mxu0 0.0
    %2805 = vmatprep.subr.mxu0 0.0
    %2806 = vmatpush1.msra.mxu0 0.0
    %2807 = vmatprep.subr.mxu0 0.0
    %2808 = vmatpush1.msra.mxu0 0.0
    %2809 = vmatprep.subr.mxu0 0.0
    %2810 = vmatpush1.msra.mxu0 0.0
    %2811 = vmatprep.subr.mxu0 0.0
    %2812 = vmatpush1.msra.mxu0 0.0
    %2813 = vmatprep.subr.mxu0 0.0
    %2814 = vmatpush1.msra.mxu0 0.0
    %2815 = vmatprep.subr.mxu0 0.0
    %2816 = vmatpush1.msra.mxu0 0.0
    %2817 = vmatprep.subr.mxu0 0.0
    %2818 = vmatpush1.msra.mxu0 0.0
    %2819 = vmatprep.subr.mxu0 0.0
    %2820 = vmatpush1.msra.mxu0 0.0
    %2821 = vmatprep.subr.mxu0 0.0
    %2822 = vmatpush1.msra.mxu0 0.0
    %2823 = vmatprep.subr.mxu0 0.0
    %2824 = vmatpush1.msra.mxu0 0.0
    %2825 = vmatprep.subr.mxu0 0.0
    %2826 = vmatpush1.msra.mxu0 0.0
    %2827 = vmatprep.subr.mxu0 0.0
    %2828 = vmatpush1.msra.mxu0 0.0
    %2829 = vmatprep.subr.mxu0 0.0
    %2830 = vmatpush1.msra.mxu0 0.0
    %2831 = vmatprep.subr.mxu0 0.0
    %2832 = vmatpush1.msra.mxu0 0.0
    %2833 = vmatprep.subr.mxu0 0.0
    %2834 = vmatpush1.msra.mxu0 0.0
    %2835 = vmatprep.subr.mxu0 0.0
    %2836 = vmatpush1.msra.mxu0 0.0
    %2837 = vmatprep.subr.mxu0 0.0
    %2838 = vmatpush1.msra.mxu0 0.0
    %2839 = vmatprep.mubr.f32.mxu0 0.0
    %2840 = vmatmul.mubr.f32.gmra.mrb[0].mxu0 %v2773
    %v2841 = vpop.f32.mrb[0].mxu0
    %v2842 = vadd.f32 0.0, %v2841
    %v2843 = vpop.f32.mrb[0].mxu0
    %2844 = vdwg.mxu0
    %v2845 = vld [vmem:[%s73] sm:$0xff]
    %v2846 = vld [vmem:[%s73 + $0x8] sm:$0xff]
    %v2847 = vld [vmem:[%s73 + $0x10] sm:$0xff]
    %v2848 = vld [vmem:[%s73 + $0x18] sm:$0xff]
    %v2849 = vld [vmem:[%s73 + $0x20] sm:$0xff]
    %v2850 = vld [vmem:[%s73 + $0x28] sm:$0xff]
    %v2851 = vld [vmem:[%s73 + $0x30] sm:$0xff]
    %v2852 = vld [vmem:[%s73 + $0x38] sm:$0xff]
    %v2853 = vld [vmem:[%s73 + $0x40] sm:$0xff]
    %v2854 = vld [vmem:[%s73 + $0x48] sm:$0xff]
    %v2855 = vld [vmem:[%s73 + $0x50] sm:$0xff]
    %v2856 = vld [vmem:[%s73 + $0x58] sm:$0xff]
    %v2857 = vld [vmem:[%s73 + $0x60] sm:$0xff]
    %v2858 = vld [vmem:[%s73 + $0x68] sm:$0xff]
    %v2859 = vld [vmem:[%s73 + $0x70] sm:$0xff]
    %v2860 = vld [vmem:[%s73 + $0x78] sm:$0xff]
    %v2861 = vld [vmem:[%s73 + $0x80] sm:$0xff]
    %v2862 = vld [vmem:[%s73 + $0x88] sm:$0xff]
    %v2863 = vld [vmem:[%s73 + $0x90] sm:$0xff]
    %v2864 = vld [vmem:[%s73 + $0x98] sm:$0xff]
    %v2865 = vld [vmem:[%s73 + $0xa0] sm:$0xff]
    %v2866 = vld [vmem:[%s73 + $0xa8] sm:$0xff]
    %v2867 = vld [vmem:[%s73 + $0xb0] sm:$0xff]
    %v2868 = vld [vmem:[%s73 + $0xb8] sm:$0xff]
    %v2869 = vld [vmem:[%s73 + $0xc0] sm:$0xff]
    %v2870 = vld [vmem:[%s73 + $0xc8] sm:$0xff]
    %v2871 = vld [vmem:[%s73 + $0xd0] sm:$0xff]
    %v2872 = vld [vmem:[%s73 + $0xd8] sm:$0xff]
    %v2873 = vld [vmem:[%s73 + $0xe0] sm:$0xff]
    %v2874 = vld [vmem:[%s73 + $0xe8] sm:$0xff]
    %v2875 = vld [vmem:[%s73 + $0xf0] sm:$0xff]
    %v2876 = vld [vmem:[%s73 + $0xf8] sm:$0xff]
    %v2877 = vld [vmem:[#allocation40] sm:$0x3]
    %v2879 = vlaneseq
    %v2880 = vshrl.u32 %v2879, 7
    %v2881 = vsub.s32 0, %v2880
    %v2882 = vrot.slane %v2877, %v2881
    %v2883 = vlaneseq
    %v2884 = vshrl.u32 %v2883, 7
    %v2885 = vsub.s32 1, %v2884
    %v2886 = vrot.slane %v2877, %v2885
    %2889 = vmatprep.subr.mxu0 %v2846
    %2890 = vmatpush1.msra.mxu0 %v2845
    %2891 = vmatprep.subr.mxu0 %v2848
    %2892 = vmatpush1.msra.mxu0 %v2847
    %2893 = vmatprep.subr.mxu0 %v2850
    %2894 = vmatpush1.msra.mxu0 %v2849
    %2895 = vmatprep.subr.mxu0 %v2852
    %2896 = vmatpush1.msra.mxu0 %v2851
    %2897 = vmatprep.subr.mxu0 %v2854
    %2898 = vmatpush1.msra.mxu0 %v2853
    %2899 = vmatprep.subr.mxu0 %v2856
    %2900 = vmatpush1.msra.mxu0 %v2855
    %2901 = vmatprep.subr.mxu0 %v2858
    %2902 = vmatpush1.msra.mxu0 %v2857
    %2903 = vmatprep.subr.mxu0 %v2860
    %2904 = vmatpush1.msra.mxu0 %v2859
    %2905 = vmatprep.subr.mxu0 %v2862
    %2906 = vmatpush1.msra.mxu0 %v2861
    %2907 = vmatprep.subr.mxu0 %v2864
    %2908 = vmatpush1.msra.mxu0 %v2863
    %2909 = vmatprep.subr.mxu0 %v2866
    %2910 = vmatpush1.msra.mxu0 %v2865
    %2911 = vmatprep.subr.mxu0 %v2868
    %2912 = vmatpush1.msra.mxu0 %v2867
    %2913 = vmatprep.subr.mxu0 %v2870
    %2914 = vmatpush1.msra.mxu0 %v2869
    %2915 = vmatprep.subr.mxu0 %v2872
    %2916 = vmatpush1.msra.mxu0 %v2871
    %2917 = vmatprep.subr.mxu0 %v2874
    %2918 = vmatpush1.msra.mxu0 %v2873
    %2919 = vmatprep.subr.mxu0 %v2876
    %2920 = vmatpush1.msra.mxu0 %v2875
    %2921 = vmatprep.subr.mxu0 0.0
    %2922 = vmatpush1.msra.mxu0 0.0
    %2923 = vmatprep.subr.mxu0 0.0
    %2924 = vmatpush1.msra.mxu0 0.0
    %2925 = vmatprep.subr.mxu0 0.0
    %2926 = vmatpush1.msra.mxu0 0.0
    %2927 = vmatprep.subr.mxu0 0.0
    %2928 = vmatpush1.msra.mxu0 0.0
    %2929 = vmatprep.subr.mxu0 0.0
    %2930 = vmatpush1.msra.mxu0 0.0
    %2931 = vmatprep.subr.mxu0 0.0
    %2932 = vmatpush1.msra.mxu0 0.0
    %2933 = vmatprep.subr.mxu0 0.0
    %2934 = vmatpush1.msra.mxu0 0.0
    %2935 = vmatprep.subr.mxu0 0.0
    %2936 = vmatpush1.msra.mxu0 0.0
    %2937 = vmatprep.subr.mxu0 0.0
    %2938 = vmatpush1.msra.mxu0 0.0
    %2939 = vmatprep.subr.mxu0 0.0
    %2940 = vmatpush1.msra.mxu0 0.0
    %2941 = vmatprep.subr.mxu0 0.0
    %2942 = vmatpush1.msra.mxu0 0.0
    %2943 = vmatprep.subr.mxu0 0.0
    %2944 = vmatpush1.msra.mxu0 0.0
    %2945 = vmatprep.subr.mxu0 0.0
    %2946 = vmatpush1.msra.mxu0 0.0
    %2947 = vmatprep.subr.mxu0 0.0
    %2948 = vmatpush1.msra.mxu0 0.0
    %2949 = vmatprep.subr.mxu0 0.0
    %2950 = vmatpush1.msra.mxu0 0.0
    %2951 = vmatprep.subr.mxu0 0.0
    %2952 = vmatpush1.msra.mxu0 0.0
    %2953 = vmatprep.mubr.f32.mxu0 0.0
    %2954 = vmatmul.mubr.f32.gmra.mrb[0].mxu0 %v2842
    %v2955 = vpop.f32.mrb[0].mxu0
    %v2956 = vadd.f32 %v2882, %v2955
    %v2957 = vpop.f32.mrb[0].mxu0
    %v2958 = vadd.f32 %v2886, %v2957
    %2959 = vdwg.mxu0
    %v2960 = vmax.f32 %v2956, 0.0
    %v2961 = vtanh.pop %v2958
    %v2962 = vld [vmem:[%s77] sm:$0xff]
    %v2963 = vld [vmem:[%s77 + $0x8] sm:$0xff]
    %v2964 = vld [vmem:[%s77 + $0x10] sm:$0xff]
    %v2965 = vld [vmem:[%s77 + $0x18] sm:$0xff]
    %v2966 = vld [vmem:[%s77 + $0x20] sm:$0xff]
    %v2967 = vld [vmem:[%s77 + $0x28] sm:$0xff]
    %v2968 = vld [vmem:[%s77 + $0x30] sm:$0xff]
    %v2969 = vld [vmem:[%s77 + $0x38] sm:$0xff]
    %v2970 = vld [vmem:[#allocation41] sm:$0x1]
    %v2972 = vlaneseq
    %v2973 = vshrl.u32 %v2972, 7
    %v2974 = vsub.s32 0, %v2973
    %v2975 = vrot.slane %v2970, %v2974
    %v2978 = vsel %vm762, %v2960, 0
    %2980 = vmatprep.subr.mxu0 0.0
    %2981 = vmatpush1.msra.mxu0 %v2962
    %2982 = vmatprep.subr.mxu0 0.0
    %2983 = vmatpush1.msra.mxu0 %v2963
    %2984 = vmatprep.subr.mxu0 0.0
    %2985 = vmatpush1.msra.mxu0 %v2964
    %2986 = vmatprep.subr.mxu0 0.0
    %2987 = vmatpush1.msra.mxu0 %v2965
    %2988 = vmatprep.subr.mxu0 0.0
    %2989 = vmatpush1.msra.mxu0 %v2966
    %2990 = vmatprep.subr.mxu0 0.0
    %2991 = vmatpush1.msra.mxu0 %v2967
    %2992 = vmatprep.subr.mxu0 0.0
    %2993 = vmatpush1.msra.mxu0 %v2968
    %2994 = vmatprep.subr.mxu0 0.0
    %2995 = vmatpush1.msra.mxu0 %v2969
    %2996 = vmatprep.subr.mxu0 0.0
    %2997 = vmatpush1.msra.mxu0 0.0
    %2998 = vmatprep.subr.mxu0 0.0
    %2999 = vmatpush1.msra.mxu0 0.0
    %3000 = vmatprep.subr.mxu0 0.0
    %3001 = vmatpush1.msra.mxu0 0.0
    %3002 = vmatprep.subr.mxu0 0.0
    %3003 = vmatpush1.msra.mxu0 0.0
    %3004 = vmatprep.subr.mxu0 0.0
    %3005 = vmatpush1.msra.mxu0 0.0
    %3006 = vmatprep.subr.mxu0 0.0
    %3007 = vmatpush1.msra.mxu0 0.0
    %3008 = vmatprep.subr.mxu0 0.0
    %3009 = vmatpush1.msra.mxu0 0.0
    %3010 = vmatprep.subr.mxu0 0.0
    %3011 = vmatpush1.msra.mxu0 0.0
    %3012 = vmatprep.subr.mxu0 0.0
    %3013 = vmatpush1.msra.mxu0 0.0
    %3014 = vmatprep.subr.mxu0 0.0
    %3015 = vmatpush1.msra.mxu0 0.0
    %3016 = vmatprep.subr.mxu0 0.0
    %3017 = vmatpush1.msra.mxu0 0.0
    %3018 = vmatprep.subr.mxu0 0.0
    %3019 = vmatpush1.msra.mxu0 0.0
    %3020 = vmatprep.subr.mxu0 0.0
    %3021 = vmatpush1.msra.mxu0 0.0
    %3022 = vmatprep.subr.mxu0 0.0
    %3023 = vmatpush1.msra.mxu0 0.0
    %3024 = vmatprep.subr.mxu0 0.0
    %3025 = vmatpush1.msra.mxu0 0.0
    %3026 = vmatprep.subr.mxu0 0.0
    %3027 = vmatpush1.msra.mxu0 0.0
    %3028 = vmatprep.subr.mxu0 0.0
    %3029 = vmatpush1.msra.mxu0 0.0
    %3030 = vmatprep.subr.mxu0 0.0
    %3031 = vmatpush1.msra.mxu0 0.0
    %3032 = vmatprep.subr.mxu0 0.0
    %3033 = vmatpush1.msra.mxu0 0.0
    %3034 = vmatprep.subr.mxu0 0.0
    %3035 = vmatpush1.msra.mxu0 0.0
    %3036 = vmatprep.subr.mxu0 0.0
    %3037 = vmatpush1.msra.mxu0 0.0
    %3038 = vmatprep.subr.mxu0 0.0
    %3039 = vmatpush1.msra.mxu0 0.0
    %3040 = vmatprep.subr.mxu0 0.0
    %3041 = vmatpush1.msra.mxu0 0.0
    %3042 = vmatprep.subr.mxu0 0.0
    %3043 = vmatpush1.msra.mxu0 0.0
    %3044 = vmatprep.mubr.f32.mxu0 0.0
    %3045 = vmatmul.mubr.f32.gmra.mrb[0].mxu0 %v2978
    %v3046 = vpop.f32.mrb[0].mxu0
    %v3047 = vadd.f32 %v2975, %v3046
    %v3048 = vpop.f32.mrb[0].mxu0
    %3049 = vdwg.mxu0
    %v3050 = vld [vmem:[#allocation43] sm:$0xff]
    %v3051 = vld [vmem:[#allocation43 + $0x8] sm:$0xff]
    %v3052 = vld [vmem:[#allocation43 + $0x10] sm:$0xff]
    %v3053 = vld [vmem:[#allocation43 + $0x18] sm:$0xff]
    %v3054 = vld [vmem:[#allocation43 + $0x20] sm:$0xff]
    %v3055 = vld [vmem:[#allocation43 + $0x28] sm:$0xff]
    %v3056 = vld [vmem:[#allocation43 + $0x30] sm:$0xff]
    %v3057 = vld [vmem:[#allocation43 + $0x38] sm:$0xff]
    %v3058 = vld [vmem:[#allocation43 + $0x40] sm:$0xff]
    %v3059 = vld [vmem:[#allocation43 + $0x48] sm:$0xff]
    %v3060 = vld [vmem:[#allocation43 + $0x50] sm:$0xff]
    %v3061 = vld [vmem:[#allocation43 + $0x58] sm:$0xff]
    %v3062 = vld [vmem:[#allocation43 + $0x60] sm:$0xff]
    %v3063 = vld [vmem:[#allocation43 + $0x68] sm:$0xff]
    %v3064 = vld [vmem:[#allocation43 + $0x70] sm:$0xff]
    %v3065 = vld [vmem:[#allocation43 + $0x78] sm:$0xff]
    %v3066 = vld [vmem:[#allocation44] sm:$0xff]
    %v3067 = vld [vmem:[#allocation44 + $0x8] sm:$0xff]
    %v3068 = vld [vmem:[#allocation44 + $0x10] sm:$0xff]
    %v3069 = vld [vmem:[#allocation44 + $0x18] sm:$0xff]
    %v3070 = vld [vmem:[#allocation44 + $0x20] sm:$0xff]
    %v3071 = vld [vmem:[#allocation44 + $0x28] sm:$0xff]
    %v3072 = vld [vmem:[#allocation44 + $0x30] sm:$0xff]
    %v3073 = vld [vmem:[#allocation44 + $0x38] sm:$0xff]
    %v3074 = vld [vmem:[#allocation44 + $0x40] sm:$0xff]
    %v3075 = vld [vmem:[#allocation44 + $0x48] sm:$0xff]
    %v3076 = vld [vmem:[#allocation44 + $0x50] sm:$0xff]
    %v3077 = vld [vmem:[#allocation44 + $0x58] sm:$0xff]
    %v3078 = vld [vmem:[#allocation44 + $0x60] sm:$0xff]
    %v3079 = vld [vmem:[#allocation44 + $0x68] sm:$0xff]
    %v3080 = vld [vmem:[#allocation44 + $0x70] sm:$0xff]
    %v3081 = vld [vmem:[#allocation44 + $0x78] sm:$0xff]
    %v3082 = vld [vmem:[#allocation44 + $0x80] sm:$0xff]
    %v3083 = vld [vmem:[#allocation44 + $0x88] sm:$0xff]
    %v3084 = vld [vmem:[#allocation44 + $0x90] sm:$0xff]
    %v3085 = vld [vmem:[#allocation44 + $0x98] sm:$0xff]
    %v3086 = vld [vmem:[#allocation44 + $0xa0] sm:$0xff]
    %v3087 = vld [vmem:[#allocation44 + $0xa8] sm:$0xff]
    %v3088 = vld [vmem:[#allocation44 + $0xb0] sm:$0xff]
    %v3089 = vld [vmem:[#allocation44 + $0xb8] sm:$0xff]
    %v3090 = vld [vmem:[#allocation44 + $0xc0] sm:$0xff]
    %v3091 = vld [vmem:[#allocation44 + $0xc8] sm:$0xff]
    %v3092 = vld [vmem:[#allocation44 + $0xd0] sm:$0xff]
    %v3093 = vld [vmem:[#allocation44 + $0xd8] sm:$0xff]
    %v3094 = vld [vmem:[#allocation44 + $0xe0] sm:$0xff]
    %v3095 = vld [vmem:[#allocation44 + $0xe8] sm:$0xff]
    %v3096 = vld [vmem:[#allocation44 + $0xf0] sm:$0xff]
    %v3097 = vld [vmem:[#allocation44 + $0xf8] sm:$0xff]
    %3098 = vmatprep.subr.mxu0 0.0
    %3099 = vmatpush1.msra.mxu0 %v3066
    %3100 = vmatprep.subr.mxu0 0.0
    %3101 = vmatpush1.msra.mxu0 %v3067
    %3102 = vmatprep.subr.mxu0 0.0
    %3103 = vmatpush1.msra.mxu0 %v3068
    %3104 = vmatprep.subr.mxu0 0.0
    %3105 = vmatpush1.msra.mxu0 %v3069
    %3106 = vmatprep.subr.mxu0 0.0
    %3107 = vmatpush1.msra.mxu0 %v3070
    %3108 = vmatprep.subr.mxu0 0.0
    %3109 = vmatpush1.msra.mxu0 %v3071
    %3110 = vmatprep.subr.mxu0 0.0
    %3111 = vmatpush1.msra.mxu0 %v3072
    %3112 = vmatprep.subr.mxu0 0.0
    %3113 = vmatpush1.msra.mxu0 %v3073
    %3114 = vmatprep.subr.mxu0 0.0
    %3115 = vmatpush1.msra.mxu0 %v3074
    %3116 = vmatprep.subr.mxu0 0.0
    %3117 = vmatpush1.msra.mxu0 %v3075
    %3118 = vmatprep.subr.mxu0 0.0
    %3119 = vmatpush1.msra.mxu0 %v3076
    %3120 = vmatprep.subr.mxu0 0.0
    %3121 = vmatpush1.msra.mxu0 %v3077
    %3122 = vmatprep.subr.mxu0 0.0
    %3123 = vmatpush1.msra.mxu0 %v3078
    %3124 = vmatprep.subr.mxu0 0.0
    %3125 = vmatpush1.msra.mxu0 %v3079
    %3126 = vmatprep.subr.mxu0 0.0
    %3127 = vmatpush1.msra.mxu0 %v3080
    %3128 = vmatprep.subr.mxu0 0.0
    %3129 = vmatpush1.msra.mxu0 %v3081
    %3130 = vmatprep.subr.mxu0 0.0
    %3131 = vmatpush1.msra.mxu0 %v3082
    %3132 = vmatprep.subr.mxu0 0.0
    %3133 = vmatpush1.msra.mxu0 %v3083
    %3134 = vmatprep.subr.mxu0 0.0
    %3135 = vmatpush1.msra.mxu0 %v3084
    %3136 = vmatprep.subr.mxu0 0.0
    %3137 = vmatpush1.msra.mxu0 %v3085
    %3138 = vmatprep.subr.mxu0 0.0
    %3139 = vmatpush1.msra.mxu0 %v3086
    %3140 = vmatprep.subr.mxu0 0.0
    %3141 = vmatpush1.msra.mxu0 %v3087
    %3142 = vmatprep.subr.mxu0 0.0
    %3143 = vmatpush1.msra.mxu0 %v3088
    %3144 = vmatprep.subr.mxu0 0.0
    %3145 = vmatpush1.msra.mxu0 %v3089
    %3146 = vmatprep.subr.mxu0 0.0
    %3147 = vmatpush1.msra.mxu0 %v3090
    %3148 = vmatprep.subr.mxu0 0.0
    %3149 = vmatpush1.msra.mxu0 %v3091
    %3150 = vmatprep.subr.mxu0 0.0
    %3151 = vmatpush1.msra.mxu0 %v3092
    %3152 = vmatprep.subr.mxu0 0.0
    %3153 = vmatpush1.msra.mxu0 %v3093
    %3154 = vmatprep.subr.mxu0 0.0
    %3155 = vmatpush1.msra.mxu0 %v3094
    %3156 = vmatprep.subr.mxu0 0.0
    %3157 = vmatpush1.msra.mxu0 %v3095
    %3158 = vmatprep.subr.mxu0 0.0
    %3159 = vmatpush1.msra.mxu0 %v3096
    %3160 = vmatprep.subr.mxu0 0.0
    %3161 = vmatpush1.msra.mxu0 %v3097
    %3162 = vmatprep.mubr.f32.mxu0 %v2529
    %3163 = vmatmul.mubr.f32.gmra.mrb[0].mxu0 %v2528
    %v3164 = vpop.f32.mrb[0].mxu0
    %v3165 = vadd.f32 0.0, %v3164
    %v3166 = vpop.f32.mrb[0].mxu0
    %3167 = vdwg.mxu0
    %3168 = vmatprep.subr.mxu0 0.0
    %3169 = vmatpush1.msra.mxu0 %v3050
    %3170 = vmatprep.subr.mxu0 0.0
    %3171 = vmatpush1.msra.mxu0 %v3051
    %3172 = vmatprep.subr.mxu0 0.0
    %3173 = vmatpush1.msra.mxu0 %v3052
    %3174 = vmatprep.subr.mxu0 0.0
    %3175 = vmatpush1.msra.mxu0 %v3053
    %3176 = vmatprep.subr.mxu0 0.0
    %3177 = vmatpush1.msra.mxu0 %v3054
    %3178 = vmatprep.subr.mxu0 0.0
    %3179 = vmatpush1.msra.mxu0 %v3055
    %3180 = vmatprep.subr.mxu0 0.0
    %3181 = vmatpush1.msra.mxu0 %v3056
    %3182 = vmatprep.subr.mxu0 0.0
    %3183 = vmatpush1.msra.mxu0 %v3057
    %3184 = vmatprep.subr.mxu0 0.0
    %3185 = vmatpush1.msra.mxu0 %v3058
    %3186 = vmatprep.subr.mxu0 0.0
    %3187 = vmatpush1.msra.mxu0 %v3059
    %3188 = vmatprep.subr.mxu0 0.0
    %3189 = vmatpush1.msra.mxu0 %v3060
    %3190 = vmatprep.subr.mxu0 0.0
    %3191 = vmatpush1.msra.mxu0 %v3061
    %3192 = vmatprep.subr.mxu0 0.0
    %3193 = vmatpush1.msra.mxu0 %v3062
    %3194 = vmatprep.subr.mxu0 0.0
    %3195 = vmatpush1.msra.mxu0 %v3063
    %3196 = vmatprep.subr.mxu0 0.0
    %3197 = vmatpush1.msra.mxu0 %v3064
    %3198 = vmatprep.subr.mxu0 0.0
    %3199 = vmatpush1.msra.mxu0 %v3065
    %3200 = vmatprep.subr.mxu0 0.0
    %3201 = vmatpush1.msra.mxu0 0.0
    %3202 = vmatprep.subr.mxu0 0.0
    %3203 = vmatpush1.msra.mxu0 0.0
    %3204 = vmatprep.subr.mxu0 0.0
    %3205 = vmatpush1.msra.mxu0 0.0
    %3206 = vmatprep.subr.mxu0 0.0
    %3207 = vmatpush1.msra.mxu0 0.0
    %3208 = vmatprep.subr.mxu0 0.0
    %3209 = vmatpush1.msra.mxu0 0.0
    %3210 = vmatprep.subr.mxu0 0.0
    %3211 = vmatpush1.msra.mxu0 0.0
    %3212 = vmatprep.subr.mxu0 0.0
    %3213 = vmatpush1.msra.mxu0 0.0
    %3214 = vmatprep.subr.mxu0 0.0
    %3215 = vmatpush1.msra.mxu0 0.0
    %3216 = vmatprep.subr.mxu0 0.0
    %3217 = vmatpush1.msra.mxu0 0.0
    %3218 = vmatprep.subr.mxu0 0.0
    %3219 = vmatpush1.msra.mxu0 0.0
    %3220 = vmatprep.subr.mxu0 0.0
    %3221 = vmatpush1.msra.mxu0 0.0
    %3222 = vmatprep.subr.mxu0 0.0
    %3223 = vmatpush1.msra.mxu0 0.0
    %3224 = vmatprep.subr.mxu0 0.0
    %3225 = vmatpush1.msra.mxu0 0.0
    %3226 = vmatprep.subr.mxu0 0.0
    %3227 = vmatpush1.msra.mxu0 0.0
    %3228 = vmatprep.subr.mxu0 0.0
    %3229 = vmatpush1.msra.mxu0 0.0
    %3230 = vmatprep.subr.mxu0 0.0
    %3231 = vmatpush1.msra.mxu0 0.0
    %3232 = vmatprep.mubr.f32.mxu0 0.0
    %3233 = vmatmul.mubr.f32.gmra.mrb[0].mxu0 %v2842
    %v3234 = vpop.f32.mrb[0].mxu0
    %v3235 = vadd.f32 %v3165, %v3234
    %v3236 = vpop.f32.mrb[0].mxu0
    %3237 = vdwg.mxu0
    %v3238 = vld [vmem:[#allocation46] sm:$0x1]
    %v3240 = vlaneseq
    %v3241 = vshrl.u32 %v3240, 7
    %v3242 = vsub.s32 0, %v3241
    %v3243 = vrot.slane %v3238, %v3242
    %v3245 = vadd.f32 %v3235, %v3243
    %v3246 = vmax.f32 %v3245, 0.0
    %v3247 = vld [vmem:[#allocation47] sm:$0xff]
    %v3248 = vld [vmem:[#allocation47 + $0x8] sm:$0xff]
    %v3249 = vld [vmem:[#allocation47 + $0x10] sm:$0xff]
    %v3250 = vld [vmem:[#allocation47 + $0x18] sm:$0xff]
    %v3251 = vld [vmem:[#allocation47 + $0x20] sm:$0xff]
    %v3252 = vld [vmem:[#allocation47 + $0x28] sm:$0xff]
    %v3253 = vld [vmem:[#allocation47 + $0x30] sm:$0xff]
    %v3254 = vld [vmem:[#allocation47 + $0x38] sm:$0xff]
    %v3255 = vld [vmem:[#allocation47 + $0x40] sm:$0xff]
    %v3256 = vld [vmem:[#allocation47 + $0x48] sm:$0xff]
    %v3257 = vld [vmem:[#allocation47 + $0x50] sm:$0xff]
    %v3258 = vld [vmem:[#allocation47 + $0x58] sm:$0xff]
    %v3259 = vld [vmem:[#allocation47 + $0x60] sm:$0xff]
    %v3260 = vld [vmem:[#allocation47 + $0x68] sm:$0xff]
    %v3261 = vld [vmem:[#allocation47 + $0x70] sm:$0xff]
    %v3262 = vld [vmem:[#allocation47 + $0x78] sm:$0xff]
    %v3263 = vld [vmem:[#allocation49] sm:$0x1]
    %v3265 = vlaneseq
    %v3266 = vshrl.u32 %v3265, 7
    %v3267 = vsub.s32 0, %v3266
    %v3268 = vrot.slane %v3263, %v3267
    %3270 = vmatprep.subr.mxu0 0.0
    %3271 = vmatpush1.msra.mxu0 %v3247
    %3272 = vmatprep.subr.mxu0 0.0
    %3273 = vmatpush1.msra.mxu0 %v3248
    %3274 = vmatprep.subr.mxu0 0.0
    %3275 = vmatpush1.msra.mxu0 %v3249
    %3276 = vmatprep.subr.mxu0 0.0
    %3277 = vmatpush1.msra.mxu0 %v3250
    %3278 = vmatprep.subr.mxu0 0.0
    %3279 = vmatpush1.msra.mxu0 %v3251
    %3280 = vmatprep.subr.mxu0 0.0
    %3281 = vmatpush1.msra.mxu0 %v3252
    %3282 = vmatprep.subr.mxu0 0.0
    %3283 = vmatpush1.msra.mxu0 %v3253
    %3284 = vmatprep.subr.mxu0 0.0
    %3285 = vmatpush1.msra.mxu0 %v3254
    %3286 = vmatprep.subr.mxu0 0.0
    %3287 = vmatpush1.msra.mxu0 %v3255
    %3288 = vmatprep.subr.mxu0 0.0
    %3289 = vmatpush1.msra.mxu0 %v3256
    %3290 = vmatprep.subr.mxu0 0.0
    %3291 = vmatpush1.msra.mxu0 %v3257
    %3292 = vmatprep.subr.mxu0 0.0
    %3293 = vmatpush1.msra.mxu0 %v3258
    %3294 = vmatprep.subr.mxu0 0.0
    %3295 = vmatpush1.msra.mxu0 %v3259
    %3296 = vmatprep.subr.mxu0 0.0
    %3297 = vmatpush1.msra.mxu0 %v3260
    %3298 = vmatprep.subr.mxu0 0.0
    %3299 = vmatpush1.msra.mxu0 %v3261
    %3300 = vmatprep.subr.mxu0 0.0
    %3301 = vmatpush1.msra.mxu0 %v3262
    %3302 = vmatprep.subr.mxu0 0.0
    %3303 = vmatpush1.msra.mxu0 0.0
    %3304 = vmatprep.subr.mxu0 0.0
    %3305 = vmatpush1.msra.mxu0 0.0
    %3306 = vmatprep.subr.mxu0 0.0
    %3307 = vmatpush1.msra.mxu0 0.0
    %3308 = vmatprep.subr.mxu0 0.0
    %3309 = vmatpush1.msra.mxu0 0.0
    %3310 = vmatprep.subr.mxu0 0.0
    %3311 = vmatpush1.msra.mxu0 0.0
    %3312 = vmatprep.subr.mxu0 0.0
    %3313 = vmatpush1.msra.mxu0 0.0
    %3314 = vmatprep.subr.mxu0 0.0
    %3315 = vmatpush1.msra.mxu0 0.0
    %3316 = vmatprep.subr.mxu0 0.0
    %3317 = vmatpush1.msra.mxu0 0.0
    %3318 = vmatprep.subr.mxu0 0.0
    %3319 = vmatpush1.msra.mxu0 0.0
    %3320 = vmatprep.subr.mxu0 0.0
    %3321 = vmatpush1.msra.mxu0 0.0
    %3322 = vmatprep.subr.mxu0 0.0
    %3323 = vmatpush1.msra.mxu0 0.0
    %3324 = vmatprep.subr.mxu0 0.0
    %3325 = vmatpush1.msra.mxu0 0.0
    %3326 = vmatprep.subr.mxu0 0.0
    %3327 = vmatpush1.msra.mxu0 0.0
    %3328 = vmatprep.subr.mxu0 0.0
    %3329 = vmatpush1.msra.mxu0 0.0
    %3330 = vmatprep.subr.mxu0 0.0
    %3331 = vmatpush1.msra.mxu0 0.0
    %3332 = vmatprep.subr.mxu0 0.0
    %3333 = vmatpush1.msra.mxu0 0.0
    %3334 = vmatprep.mubr.f32.mxu0 0.0
    %3335 = vmatmul.mubr.f32.gmra.mrb[0].mxu0 %v3246
    %v3336 = vpop.f32.mrb[0].mxu0
    %v3337 = vadd.f32 %v3268, %v3336
    %v3338 = vpop.f32.mrb[0].mxu0
    %3339 = vdwg.mxu0
    %v3340 = vld [vmem:[#allocation50] sm:$0x1]
    %v3341 = vld [vmem:[#allocation52] sm:$0x1]
    %vm3342 = vcmask 1041408
    %v3343 = vsel %vm3342, %v3337, 0.0
    %3344 = vadd.xlane.f32.xlu0 %v3343
    %v3345 = vpop.xlane.xlu0 %3344
    %v3346 = vmul.f32 %v3345, %v2736
    %v3347 = vsub.f32 %v3337, %v3346
    %v3348 = vmul.f32 %v3347, %v3347
    %v3349 = vsel %vm3342, %v3348, 0.0
    %3350 = vadd.xlane.f32.xlu0 %v3349
    %v3351 = vpop.xlane.xlu0 %3350
    %v3352 = vmul.f32 %v3351, %v2736
    %v3353 = vadd.f32 %v3352, 1e-05
    %v3354 = vrsqrt.pop %v3353
    %v3355 = vmul.f32 %v3347, %v3354
    %v3357 = vlaneseq
    %v3358 = vshrl.u32 %v3357, 7
    %v3359 = vsub.s32 0, %v3358
    %v3360 = vrot.slane %v3340, %v3359
    %v3362 = vmul.f32 %v3355, %v3360
    %v3364 = vlaneseq
    %v3365 = vshrl.u32 %v3364, 7
    %v3366 = vsub.s32 0, %v3365
    %v3367 = vrot.slane %v3341, %v3366
    %v3369 = vadd.f32 %v3362, %v3367
    %v3370 = vld [vmem:[%s95] sm:$0xff]
    %v3371 = vld [vmem:[%s95 + $0x8] sm:$0xff]
    %v3372 = vld [vmem:[%s95 + $0x10] sm:$0xff]
    %v3373 = vld [vmem:[%s95 + $0x18] sm:$0xff]
    %v3374 = vld [vmem:[%s95 + $0x20] sm:$0xff]
    %v3375 = vld [vmem:[%s95 + $0x28] sm:$0xff]
    %v3376 = vld [vmem:[%s95 + $0x30] sm:$0xff]
    %v3377 = vld [vmem:[%s95 + $0x38] sm:$0xff]
    %v3378 = vld [vmem:[%s95 + $0x40] sm:$0xff]
    %v3379 = vld [vmem:[%s95 + $0x48] sm:$0xff]
    %v3380 = vld [vmem:[%s95 + $0x50] sm:$0xff]
    %v3381 = vld [vmem:[%s95 + $0x58] sm:$0xff]
    %v3382 = vld [vmem:[%s95 + $0x60] sm:$0xff]
    %v3383 = vld [vmem:[%s95 + $0x68] sm:$0xff]
    %v3384 = vld [vmem:[%s95 + $0x70] sm:$0xff]
    %v3385 = vld [vmem:[%s95 + $0x78] sm:$0xff]
    %v3386 = vld [vmem:[%s95 + $0x80] sm:$0xff]
    %v3387 = vld [vmem:[%s95 + $0x88] sm:$0xff]
    %v3388 = vld [vmem:[%s95 + $0x90] sm:$0xff]
    %v3389 = vld [vmem:[%s95 + $0x98] sm:$0xff]
    %v3390 = vld [vmem:[%s95 + $0xa0] sm:$0xff]
    %v3391 = vld [vmem:[%s95 + $0xa8] sm:$0xff]
    %v3392 = vld [vmem:[%s95 + $0xb0] sm:$0xff]
    %v3393 = vld [vmem:[%s95 + $0xb8] sm:$0xff]
    %v3394 = vld [vmem:[%s95 + $0xc0] sm:$0xff]
    %v3395 = vld [vmem:[%s95 + $0xc8] sm:$0xff]
    %v3396 = vld [vmem:[%s95 + $0xd0] sm:$0xff]
    %v3397 = vld [vmem:[%s95 + $0xd8] sm:$0xff]
    %v3398 = vld [vmem:[%s95 + $0xe0] sm:$0xff]
    %v3399 = vld [vmem:[%s95 + $0xe8] sm:$0xff]
    %v3400 = vld [vmem:[%s95 + $0xf0] sm:$0xff]
    %v3401 = vld [vmem:[%s95 + $0xf8] sm:$0xff]
    %v3402 = vld [vmem:[#allocation53] sm:$0x3]
    %v3404 = vlaneseq
    %v3405 = vshrl.u32 %v3404, 7
    %v3406 = vsub.s32 0, %v3405
    %v3407 = vrot.slane %v3402, %v3406
    %v3408 = vlaneseq
    %v3409 = vshrl.u32 %v3408, 7
    %v3410 = vsub.s32 1, %v3409
    %v3411 = vrot.slane %v3402, %v3410
    %3414 = vmatprep.subr.mxu0 %v3371
    %3415 = vmatpush1.msra.mxu0 %v3370
    %3416 = vmatprep.subr.mxu0 %v3373
    %3417 = vmatpush1.msra.mxu0 %v3372
    %3418 = vmatprep.subr.mxu0 %v3375
    %3419 = vmatpush1.msra.mxu0 %v3374
    %3420 = vmatprep.subr.mxu0 %v3377
    %3421 = vmatpush1.msra.mxu0 %v3376
    %3422 = vmatprep.subr.mxu0 %v3379
    %3423 = vmatpush1.msra.mxu0 %v3378
    %3424 = vmatprep.subr.mxu0 %v3381
    %3425 = vmatpush1.msra.mxu0 %v3380
    %3426 = vmatprep.subr.mxu0 %v3383
    %3427 = vmatpush1.msra.mxu0 %v3382
    %3428 = vmatprep.subr.mxu0 %v3385
    %3429 = vmatpush1.msra.mxu0 %v3384
    %3430 = vmatprep.subr.mxu0 %v3387
    %3431 = vmatpush1.msra.mxu0 %v3386
    %3432 = vmatprep.subr.mxu0 %v3389
    %3433 = vmatpush1.msra.mxu0 %v3388
    %3434 = vmatprep.subr.mxu0 %v3391
    %3435 = vmatpush1.msra.mxu0 %v3390
    %3436 = vmatprep.subr.mxu0 %v3393
    %3437 = vmatpush1.msra.mxu0 %v3392
    %3438 = vmatprep.subr.mxu0 %v3395
    %3439 = vmatpush1.msra.mxu0 %v3394
    %3440 = vmatprep.subr.mxu0 %v3397
    %3441 = vmatpush1.msra.mxu0 %v3396
    %3442 = vmatprep.subr.mxu0 %v3399
    %3443 = vmatpush1.msra.mxu0 %v3398
    %3444 = vmatprep.subr.mxu0 %v3401
    %3445 = vmatpush1.msra.mxu0 %v3400
    %3446 = vmatprep.subr.mxu0 0.0
    %3447 = vmatpush1.msra.mxu0 0.0
    %3448 = vmatprep.subr.mxu0 0.0
    %3449 = vmatpush1.msra.mxu0 0.0
    %3450 = vmatprep.subr.mxu0 0.0
    %3451 = vmatpush1.msra.mxu0 0.0
    %3452 = vmatprep.subr.mxu0 0.0
    %3453 = vmatpush1.msra.mxu0 0.0
    %3454 = vmatprep.subr.mxu0 0.0
    %3455 = vmatpush1.msra.mxu0 0.0
    %3456 = vmatprep.subr.mxu0 0.0
    %3457 = vmatpush1.msra.mxu0 0.0
    %3458 = vmatprep.subr.mxu0 0.0
    %3459 = vmatpush1.msra.mxu0 0.0
    %3460 = vmatprep.subr.mxu0 0.0
    %3461 = vmatpush1.msra.mxu0 0.0
    %3462 = vmatprep.subr.mxu0 0.0
    %3463 = vmatpush1.msra.mxu0 0.0
    %3464 = vmatprep.subr.mxu0 0.0
    %3465 = vmatpush1.msra.mxu0 0.0
    %3466 = vmatprep.subr.mxu0 0.0
    %3467 = vmatpush1.msra.mxu0 0.0
    %3468 = vmatprep.subr.mxu0 0.0
    %3469 = vmatpush1.msra.mxu0 0.0
    %3470 = vmatprep.subr.mxu0 0.0
    %3471 = vmatpush1.msra.mxu0 0.0
    %3472 = vmatprep.subr.mxu0 0.0
    %3473 = vmatpush1.msra.mxu0 0.0
    %3474 = vmatprep.subr.mxu0 0.0
    %3475 = vmatpush1.msra.mxu0 0.0
    %3476 = vmatprep.subr.mxu0 0.0
    %3477 = vmatpush1.msra.mxu0 0.0
    %3478 = vmatprep.mubr.f32.mxu0 0.0
    %3479 = vmatmul.mubr.f32.gmra.mrb[0].mxu0 %v3369
    %v3480 = vpop.f32.mrb[0].mxu0
    %v3481 = vadd.f32 %v3407, %v3480
    %v3482 = vpop.f32.mrb[0].mxu0
    %v3483 = vadd.f32 %v3411, %v3482
    %3484 = vdwg.mxu0
    %v3485 = vmax.f32 %v3481, 0.0
    %v3486 = vmax.f32 %v3483, 0.0
    %v3487 = vld [vmem:[%s99] sm:$0xff]
    %v3488 = vld [vmem:[%s99 + $0x8] sm:$0xff]
    %v3489 = vld [vmem:[%s99 + $0x10] sm:$0xff]
    %v3490 = vld [vmem:[%s99 + $0x18] sm:$0xff]
    %v3491 = vld [vmem:[%s99 + $0x20] sm:$0xff]
    %v3492 = vld [vmem:[%s99 + $0x28] sm:$0xff]
    %v3493 = vld [vmem:[%s99 + $0x30] sm:$0xff]
    %v3494 = vld [vmem:[%s99 + $0x38] sm:$0xff]
    %v3495 = vld [vmem:[%s99 + $0x40] sm:$0xff]
    %v3496 = vld [vmem:[%s99 + $0x48] sm:$0xff]
    %v3497 = vld [vmem:[%s99 + $0x50] sm:$0xff]
    %v3498 = vld [vmem:[%s99 + $0x58] sm:$0xff]
    %v3499 = vld [vmem:[%s99 + $0x60] sm:$0xff]
    %v3500 = vld [vmem:[%s99 + $0x68] sm:$0xff]
    %v3501 = vld [vmem:[%s99 + $0x70] sm:$0xff]
    %v3502 = vld [vmem:[%s99 + $0x78] sm:$0xff]
    %v3503 = vld [vmem:[#allocation55] sm:$0x1]
    %v3505 = vlaneseq
    %v3506 = vshrl.u32 %v3505, 7
    %v3507 = vsub.s32 0, %v3506
    %v3508 = vrot.slane %v3503, %v3507
    %3510 = vmatprep.subr.mxu0 0.0
    %3511 = vmatpush1.msra.mxu0 %v3487
    %3512 = vmatprep.subr.mxu0 0.0
    %3513 = vmatpush1.msra.mxu0 %v3488
    %3514 = vmatprep.subr.mxu0 0.0
    %3515 = vmatpush1.msra.mxu0 %v3489
    %3516 = vmatprep.subr.mxu0 0.0
    %3517 = vmatpush1.msra.mxu0 %v3490
    %3518 = vmatprep.subr.mxu0 0.0
    %3519 = vmatpush1.msra.mxu0 %v3491
    %3520 = vmatprep.subr.mxu0 0.0
    %3521 = vmatpush1.msra.mxu0 %v3492
    %3522 = vmatprep.subr.mxu0 0.0
    %3523 = vmatpush1.msra.mxu0 %v3493
    %3524 = vmatprep.subr.mxu0 0.0
    %3525 = vmatpush1.msra.mxu0 %v3494
    %3526 = vmatprep.subr.mxu0 0.0
    %3527 = vmatpush1.msra.mxu0 %v3495
    %3528 = vmatprep.subr.mxu0 0.0
    %3529 = vmatpush1.msra.mxu0 %v3496
    %3530 = vmatprep.subr.mxu0 0.0
    %3531 = vmatpush1.msra.mxu0 %v3497
    %3532 = vmatprep.subr.mxu0 0.0
    %3533 = vmatpush1.msra.mxu0 %v3498
    %3534 = vmatprep.subr.mxu0 0.0
    %3535 = vmatpush1.msra.mxu0 %v3499
    %3536 = vmatprep.subr.mxu0 0.0
    %3537 = vmatpush1.msra.mxu0 %v3500
    %3538 = vmatprep.subr.mxu0 0.0
    %3539 = vmatpush1.msra.mxu0 %v3501
    %3540 = vmatprep.subr.mxu0 0.0
    %3541 = vmatpush1.msra.mxu0 %v3502
    %3542 = vmatprep.subr.mxu0 0.0
    %3543 = vmatpush1.msra.mxu0 0.0
    %3544 = vmatprep.subr.mxu0 0.0
    %3545 = vmatpush1.msra.mxu0 0.0
    %3546 = vmatprep.subr.mxu0 0.0
    %3547 = vmatpush1.msra.mxu0 0.0
    %3548 = vmatprep.subr.mxu0 0.0
    %3549 = vmatpush1.msra.mxu0 0.0
    %3550 = vmatprep.subr.mxu0 0.0
    %3551 = vmatpush1.msra.mxu0 0.0
    %3552 = vmatprep.subr.mxu0 0.0
    %3553 = vmatpush1.msra.mxu0 0.0
    %3554 = vmatprep.subr.mxu0 0.0
    %3555 = vmatpush1.msra.mxu0 0.0
    %3556 = vmatprep.subr.mxu0 0.0
    %3557 = vmatpush1.msra.mxu0 0.0
    %3558 = vmatprep.subr.mxu0 0.0
    %3559 = vmatpush1.msra.mxu0 0.0
    %3560 = vmatprep.subr.mxu0 0.0
    %3561 = vmatpush1.msra.mxu0 0.0
    %3562 = vmatprep.subr.mxu0 0.0
    %3563 = vmatpush1.msra.mxu0 0.0
    %3564 = vmatprep.subr.mxu0 0.0
    %3565 = vmatpush1.msra.mxu0 0.0
    %3566 = vmatprep.subr.mxu0 0.0
    %3567 = vmatpush1.msra.mxu0 0.0
    %3568 = vmatprep.subr.mxu0 0.0
    %3569 = vmatpush1.msra.mxu0 0.0
    %3570 = vmatprep.subr.mxu0 0.0
    %3571 = vmatpush1.msra.mxu0 0.0
    %3572 = vmatprep.subr.mxu0 0.0
    %3573 = vmatpush1.msra.mxu0 0.0
    %3574 = vmatprep.mubr.f32.mxu0 0.0
    %3575 = vmatmul.mubr.f32.gmra.mrb[0].mxu0 %v3485
    %v3576 = vpop.f32.mrb[0].mxu0
    %v3577 = vadd.f32 %v3508, %v3576
    %v3578 = vpop.f32.mrb[0].mxu0
    %3579 = vdwg.mxu0
    %v3580 = vmax.f32 %v3577, 0.0
    %v3581 = vld [vmem:[#allocation56] sm:$0xff]
    %v3582 = vld [vmem:[#allocation56 + $0x8] sm:$0xff]
    %v3583 = vld [vmem:[#allocation56 + $0x10] sm:$0xff]
    %v3584 = vld [vmem:[#allocation56 + $0x18] sm:$0xff]
    %v3585 = vld [vmem:[#allocation56 + $0x20] sm:$0xff]
    %v3586 = vld [vmem:[#allocation56 + $0x28] sm:$0xff]
    %v3587 = vld [vmem:[#allocation56 + $0x30] sm:$0xff]
    %v3588 = vld [vmem:[#allocation56 + $0x38] sm:$0xff]
    %v3589 = vld [vmem:[#allocation58] sm:$0x1]
    %v3591 = vlaneseq
    %v3592 = vshrl.u32 %v3591, 7
    %v3593 = vsub.s32 0, %v3592
    %v3594 = vrot.slane %v3589, %v3593
    %v3597 = vsel %vm762, %v3580, 0
    %3599 = vmatprep.subr.mxu0 0.0
    %3600 = vmatpush1.msra.mxu0 %v3581
    %3601 = vmatprep.subr.mxu0 0.0
    %3602 = vmatpush1.msra.mxu0 %v3582
    %3603 = vmatprep.subr.mxu0 0.0
    %3604 = vmatpush1.msra.mxu0 %v3583
    %3605 = vmatprep.subr.mxu0 0.0
    %3606 = vmatpush1.msra.mxu0 %v3584
    %3607 = vmatprep.subr.mxu0 0.0
    %3608 = vmatpush1.msra.mxu0 %v3585
    %3609 = vmatprep.subr.mxu0 0.0
    %3610 = vmatpush1.msra.mxu0 %v3586
    %3611 = vmatprep.subr.mxu0 0.0
    %3612 = vmatpush1.msra.mxu0 %v3587
    %3613 = vmatprep.subr.mxu0 0.0
    %3614 = vmatpush1.msra.mxu0 %v3588
    %3615 = vmatprep.subr.mxu0 0.0
    %3616 = vmatpush1.msra.mxu0 0.0
    %3617 = vmatprep.subr.mxu0 0.0
    %3618 = vmatpush1.msra.mxu0 0.0
    %3619 = vmatprep.subr.mxu0 0.0
    %3620 = vmatpush1.msra.mxu0 0.0
    %3621 = vmatprep.subr.mxu0 0.0
    %3622 = vmatpush1.msra.mxu0 0.0
    %3623 = vmatprep.subr.mxu0 0.0
    %3624 = vmatpush1.msra.mxu0 0.0
    %3625 = vmatprep.subr.mxu0 0.0
    %3626 = vmatpush1.msra.mxu0 0.0
    %3627 = vmatprep.subr.mxu0 0.0
    %3628 = vmatpush1.msra.mxu0 0.0
    %3629 = vmatprep.subr.mxu0 0.0
    %3630 = vmatpush1.msra.mxu0 0.0
    %3631 = vmatprep.subr.mxu0 0.0
    %3632 = vmatpush1.msra.mxu0 0.0
    %3633 = vmatprep.subr.mxu0 0.0
    %3634 = vmatpush1.msra.mxu0 0.0
    %3635 = vmatprep.subr.mxu0 0.0
    %3636 = vmatpush1.msra.mxu0 0.0
    %3637 = vmatprep.subr.mxu0 0.0
    %3638 = vmatpush1.msra.mxu0 0.0
    %3639 = vmatprep.subr.mxu0 0.0
    %3640 = vmatpush1.msra.mxu0 0.0
    %3641 = vmatprep.subr.mxu0 0.0
    %3642 = vmatpush1.msra.mxu0 0.0
    %3643 = vmatprep.subr.mxu0 0.0
    %3644 = vmatpush1.msra.mxu0 0.0
    %3645 = vmatprep.subr.mxu0 0.0
    %3646 = vmatpush1.msra.mxu0 0.0
    %3647 = vmatprep.subr.mxu0 0.0
    %3648 = vmatpush1.msra.mxu0 0.0
    %3649 = vmatprep.subr.mxu0 0.0
    %3650 = vmatpush1.msra.mxu0 0.0
    %3651 = vmatprep.subr.mxu0 0.0
    %3652 = vmatpush1.msra.mxu0 0.0
    %3653 = vmatprep.subr.mxu0 0.0
    %3654 = vmatpush1.msra.mxu0 0.0
    %3655 = vmatprep.subr.mxu0 0.0
    %3656 = vmatpush1.msra.mxu0 0.0
    %3657 = vmatprep.subr.mxu0 0.0
    %3658 = vmatpush1.msra.mxu0 0.0
    %3659 = vmatprep.subr.mxu0 0.0
    %3660 = vmatpush1.msra.mxu0 0.0
    %3661 = vmatprep.subr.mxu0 0.0
    %3662 = vmatpush1.msra.mxu0 0.0
    %3663 = vmatprep.mubr.f32.mxu0 0.0
    %3664 = vmatmul.mubr.f32.gmra.mrb[0].mxu0 %v3597
    %v3665 = vpop.f32.mrb[0].mxu0
    %v3666 = vadd.f32 %v3594, %v3665
    %v3667 = vpop.f32.mrb[0].mxu0
    %3668 = vdwg.mxu0
    %v3669 = vld [vmem:[%s107] sm:$0xff]
    %v3670 = vld [vmem:[%s107 + $0x8] sm:$0xff]
    %v3671 = vld [vmem:[%s107 + $0x10] sm:$0xff]
    %v3672 = vld [vmem:[%s107 + $0x18] sm:$0xff]
    %v3673 = vld [vmem:[%s107 + $0x20] sm:$0xff]
    %v3674 = vld [vmem:[%s107 + $0x28] sm:$0xff]
    %v3675 = vld [vmem:[%s107 + $0x30] sm:$0xff]
    %v3676 = vld [vmem:[%s107 + $0x38] sm:$0xff]
    %v3677 = vld [vmem:[#allocation2] sm:$0x1]
    %v3679 = vlaneseq
    %v3680 = vshrl.u32 %v3679, 7
    %v3681 = vsub.s32 0, %v3680
    %v3682 = vrot.slane %v3677, %v3681
    %v3685 = vsel %vm762, %v3486, 0
    %3687 = vmatprep.subr.mxu0 0.0
    %3688 = vmatpush1.msra.mxu0 %v3669
    %3689 = vmatprep.subr.mxu0 0.0
    %3690 = vmatpush1.msra.mxu0 %v3670
    %3691 = vmatprep.subr.mxu0 0.0
    %3692 = vmatpush1.msra.mxu0 %v3671
    %3693 = vmatprep.subr.mxu0 0.0
    %3694 = vmatpush1.msra.mxu0 %v3672
    %3695 = vmatprep.subr.mxu0 0.0
    %3696 = vmatpush1.msra.mxu0 %v3673
    %3697 = vmatprep.subr.mxu0 0.0
    %3698 = vmatpush1.msra.mxu0 %v3674
    %3699 = vmatprep.subr.mxu0 0.0
    %3700 = vmatpush1.msra.mxu0 %v3675
    %3701 = vmatprep.subr.mxu0 0.0
    %3702 = vmatpush1.msra.mxu0 %v3676
    %3703 = vmatprep.subr.mxu0 0.0
    %3704 = vmatpush1.msra.mxu0 0.0
    %3705 = vmatprep.subr.mxu0 0.0
    %3706 = vmatpush1.msra.mxu0 0.0
    %3707 = vmatprep.subr.mxu0 0.0
    %3708 = vmatpush1.msra.mxu0 0.0
    %3709 = vmatprep.subr.mxu0 0.0
    %3710 = vmatpush1.msra.mxu0 0.0
    %3711 = vmatprep.subr.mxu0 0.0
    %3712 = vmatpush1.msra.mxu0 0.0
    %3713 = vmatprep.subr.mxu0 0.0
    %3714 = vmatpush1.msra.mxu0 0.0
    %3715 = vmatprep.subr.mxu0 0.0
    %3716 = vmatpush1.msra.mxu0 0.0
    %3717 = vmatprep.subr.mxu0 0.0
    %3718 = vmatpush1.msra.mxu0 0.0
    %3719 = vmatprep.subr.mxu0 0.0
    %3720 = vmatpush1.msra.mxu0 0.0
    %3721 = vmatprep.subr.mxu0 0.0
    %3722 = vmatpush1.msra.mxu0 0.0
    %3723 = vmatprep.subr.mxu0 0.0
    %3724 = vmatpush1.msra.mxu0 0.0
    %3725 = vmatprep.subr.mxu0 0.0
    %3726 = vmatpush1.msra.mxu0 0.0
    %3727 = vmatprep.subr.mxu0 0.0
    %3728 = vmatpush1.msra.mxu0 0.0
    %3729 = vmatprep.subr.mxu0 0.0
    %3730 = vmatpush1.msra.mxu0 0.0
    %3731 = vmatprep.subr.mxu0 0.0
    %3732 = vmatpush1.msra.mxu0 0.0
    %3733 = vmatprep.subr.mxu0 0.0
    %3734 = vmatpush1.msra.mxu0 0.0
    %3735 = vmatprep.subr.mxu0 0.0
    %3736 = vmatpush1.msra.mxu0 0.0
    %3737 = vmatprep.subr.mxu0 0.0
    %3738 = vmatpush1.msra.mxu0 0.0
    %3739 = vmatprep.subr.mxu0 0.0
    %3740 = vmatpush1.msra.mxu0 0.0
    %3741 = vmatprep.subr.mxu0 0.0
    %3742 = vmatpush1.msra.mxu0 0.0
    %3743 = vmatprep.subr.mxu0 0.0
    %3744 = vmatpush1.msra.mxu0 0.0
    %3745 = vmatprep.subr.mxu0 0.0
    %3746 = vmatpush1.msra.mxu0 0.0
    %3747 = vmatprep.subr.mxu0 0.0
    %3748 = vmatpush1.msra.mxu0 0.0
    %3749 = vmatprep.subr.mxu0 0.0
    %3750 = vmatpush1.msra.mxu0 0.0
    %3751 = vmatprep.mubr.f32.mxu0 0.0
    %3752 = vmatmul.mubr.f32.gmra.mrb[0].mxu0 %v3685
    %v3753 = vpop.f32.mrb[0].mxu0
    %v3754 = vadd.f32 %v3682, %v3753
    %v3755 = vpop.f32.mrb[0].mxu0
    %3756 = vdwg.mxu0
    %v3757 = vxor.u32 %v3754, 2147483648
    %v3758 = vmul.f32 %v3757, 1.442695
    %v3759 = vpow.pop %v3758
    %v3760 = vadd.f32 %v3759, 1.0
    %v3761 = vrcp.pop %v3760
    %v3762 = vmul.f32 1.0, %v3761
    %v3765 = vcombine.low %v2528, %v2529
    %v3767 = vunpack.c.l.s4 1983009808
    %v3768 = vunpack.c.0.s8 %v3767
    %v3769 = vlaneseq
    %v3770 = vshrl.u32 %v3769, 7
    %v3771 = vsub.s32 %v3768, %v3770
    %v3772 = vrot.slane %v3765, %v3771
    %3774 = vst [vmem:[%s111] sm:$0xf] %v3772
    %3775 = vst [vmem:[%s111 + $0x4] sm:$0x3] %v2842
    %3776 = vst [vmem:[%s111 + $0x6] sm:$0x3] %v3369
    %3777 = vst [vmem:[%s111 + $0x8] sm:$0x3] %v3666
    %vm3778 = vcmask 123904
    %3779 = vst.msk [vmem:[%s111 + $0xa] sm:$0x3] %vm3778, %v1016
    %vm3780 = vcmask 517120
    %3781 = vst.msk [vmem:[%s111 + $0xc] sm:$0x3] %vm3780, %v1628
    %3782 = vst.msk [vmem:[%s111 + $0xe] sm:$0x3] %vm3780, %v2253
    %vm3783 = vcmask 74752
    %3784 = vst.msk [vmem:[%s111 + $0x10] sm:$0x3] %vm3783, %v3047
    %vm3785 = vcmask 254976
    %3786 = vst.msk [vmem:[%s111 + $0x12] sm:$0x3] %vm3785, %v2961
    %v3788 = vunpack.c.l.s4 1983009808
    %v3789 = vunpack.c.0.s8 %v3788
    %v3790 = vlaneseq
    %v3791 = vshrl.u32 %v3790, 7
    %v3792 = vsub.s32 %v3789, %v3791
    %v3793 = vrot.slane %v2960, %v3792
    %3794 = vrot.lane.b32.xlu0 %v3793, 64
    %v3795 = vpop.permute.xlu0 %3794
    %3797 = vst.msk [vmem:[%s111 + $0x14] sm:$0x3] %vm3780, %v3795
    %vm3798 = vcmask 1024
    %3799 = vst.msk [vmem:[%s111 + $0x16] sm:$0x3] %vm3798, %v3762
    // Predicated region
    $region370: #{brand_analyzer_forward.1} parent=1 // pred_check
      _
    $region371: #{brand_analyzer_forward.1} parent=1 // pred_check_branch
      %3801 = sbr.rel (0) target = $region373
    $region372: #{brand_analyzer_forward.1} parent=1 // pred_region
      _
    $region373: #{brand_analyzer_forward.1} parent=1 // pred_fallthru
      _
    // Predicated region
    $region374: #{brand_analyzer_forward.1} parent=1 // pred_check
      _
    $region375: #{brand_analyzer_forward.1} parent=1 // pred_check_branch
      %3803 = sbr.rel (0) target = $region377
    $region376: #{brand_analyzer_forward.1} parent=1 // pred_region
      _
    $region377: #{brand_analyzer_forward.1} parent=1 // pred_fallthru
      _
    %3804 = vsyncpa [#allocation4], 1
    %3805 = vsyncpa [#allocation6], 1
    %3806 = vsyncpa [#allocation9], 1
    %3807 = vsyncpa [#allocation12], 1
    %3808 = vsyncpa [#allocation15], 1
    %3809 = vsyncpa [#allocation18], 1
    %3810 = vsyncpa [#allocation21], 1
    %3811 = vsyncpa [#allocation24], 1
    %3812 = vsyncpa [#allocation27], 1
    %3813 = vsyncpa [#allocation30], 1
    %3814 = vsyncpa [#allocation33], 1
    %3815 = vsyncpa [#allocation36], 1
    %3816 = vsyncpa [#allocation39], 1
    %3817 = vsyncpa [#allocation42], 1
    %3818 = vsyncpa [#allocation45], 1
    %3819 = vsyncpa [#allocation48], 1
    %3820 = vsyncpa [#allocation51], 1
    %3821 = vsyncpa [#allocation54], 1
    %3822 = vsyncpa [#allocation57], 1

</llo_original>
